<compile_context>
chip_gen: v7x
topology: tpu7x:2x2x1
jax: 0.10.0
libtpu: 0.0.40
codegen_flags: <defaults>
</compile_context>

<pallas_src>
import functools

import jax
import jax.numpy as jnp
import numpy as np
from jax import lax
from jax.experimental import pallas as pl
from jax.experimental.pallas import tpu as pltpu


# ------------------------------ fused kernel --------------------------------
def _fused_kernel(x_ref, wih_ref, whh_ref, blstm_ref,
                  w1_hbm, b1_ref, s1_ref, t1_ref,
                  w2_hbm, b2_ref, s2_ref, t2_ref,
                  w3_ref, b3_ref,
                  out_ref,
                  w1_vmem, w2_vmem, hflat_vmem, dma_sem,
                  *, hidden, seq_len, batch_padded):
    """LSTM over the full sequence + FC head, fused.

    x_ref:     (T*BP, I)  input, row index = t*BP + b (rows >= real B are zero)
    wih_ref:   (I, 4H)    LSTM input->gate weights (PyTorch W_ih^T)
    whh_ref:   (H, 4H)    LSTM hidden->gate weights (PyTorch W_hh^T)
    blstm_ref: (1, 4H)    b_ih + b_hh
    w1_hbm:    (T*H, D1)  bf16, stays in HBM, manually DMA'd (prefetch)
    w2_hbm:    (D1, D2)   bf16, stays in HBM, manually DMA'd (prefetch)
    b1/s1/t1, b2/s2/t2: Linear bias + folded BatchNorm scale/shift (f32)
    w3_ref:    (D2, O) f32, b3_ref: (1, O) f32
    out_ref:   (BP, O) f32  (padded rows are garbage; caller slices)
    """
    H, T, BP = hidden, seq_len, batch_padded

    # Kick off the FC-weight prefetch immediately; it overlaps the serial
    # LSTM recurrence below (the only part that cannot be pipelined).
    cp1 = pltpu.make_async_copy(w1_hbm, w1_vmem, dma_sem.at[0])
    cp2 = pltpu.make_async_copy(w2_hbm, w2_vmem, dma_sem.at[1])
    cp1.start()
    cp2.start()

    def sigmoid(z):
        # tanh-based sigmoid: one EUP op instead of exp + full-precision recip.
        return 0.5 * (1.0 + jnp.tanh(0.5 * z))

    # ---------------- LSTM (f32, fully unrolled over T) ----------------
    whh = whh_ref[...]                                        # hoisted load
    # Input contribution for all timesteps in ONE matmul; bias added once.
    gates_x = (jnp.dot(x_ref[...], wih_ref[...],
                       preferred_element_type=jnp.float32)
               + blstm_ref[...])                              # (T*BP, 4H)

    # Lane mask selecting the g-gate block (lanes [2H, 3H)) - hoisted.
    col = lax.broadcasted_iota(jnp.int32, (BP, 4 * H), 1)
    g_mask = jnp.logical_and(col >= 2 * H, col < 3 * H)

    h = jnp.zeros((BP, H), jnp.float32)
    c = jnp.zeros((BP, H), jnp.float32)
    for t in range(T):                                        # static unroll
        g = gates_x[t * BP:(t + 1) * BP, :]                   # one vreg tile
        if t > 0:                                             # h == 0 at t=0
            g = g + jnp.dot(h, whh, preferred_element_type=jnp.float32)
        # Two full-lane tanh pushes per step (instead of 4 sub-vreg sigmoids).
        th_half = jnp.tanh(0.5 * g)                           # -> sigmoid part
        th_full = jnp.tanh(g)                                 # -> g-gate part
        act = jnp.where(g_mask, th_full, 0.5 + 0.5 * th_half)
        i_g = act[:, 0 * H:1 * H]                             # PyTorch order
        f_g = act[:, 1 * H:2 * H]                             # i, f, g, o
        g_g = act[:, 2 * H:3 * H]
        o_g = act[:, 3 * H:4 * H]
        c = f_g * c + i_g * g_g
        h = o_g * jnp.tanh(c)
        # Stash h_t (bf16) at its flat lane offset; overlaps the recurrence.
        hflat_vmem[:, t * H:(t + 1) * H] = h.astype(jnp.bfloat16)

    # ---------------- FC head (dropout = identity) ----------------
    cp1.wait()
    # First Linear as a single K=T*H matmul (flatten never materialized in HBM).
    h1 = jnp.dot(hflat_vmem[...], w1_vmem[...],
                 preferred_element_type=jnp.float32) + b1_ref[...]
    h1 = jnp.maximum(h1 * s1_ref[...] + t1_ref[...], 0.0)     # folded BN + ReLU

    cp2.wait()
    h2 = jnp.dot(h1.astype(jnp.bfloat16), w2_vmem[...],
                 preferred_element_type=jnp.float32) + b2_ref[...]
    h2 = jnp.maximum(h2 * s2_ref[...] + t2_ref[...], 0.0)     # folded BN + ReLU

    h3 = jnp.dot(h2, w3_ref[...],
                 preferred_element_type=jnp.float32) + b3_ref[...]
    out_ref[...] = sigmoid(h3)                                # Sigmoid


# ------------------------------ model wrapper --------------------------------
def simple_rnn_forward(x_bti, lstm_params, fc_params):
    B, T, I = x_bti.shape
    H = lstm_params["w_hh_t"].shape[0]
    d1 = fc_params["w1"].shape[1]
    d2 = fc_params["w2"].shape[1]
    out_size = fc_params["w3"].shape[1]
    BP = 8                                   # pad batch to the f32 sublane tile

    # batch_first input -> (T, B, I) -> pad rows to BP -> (T*BP, I) so the
    # whole x@W_ih is one matmul and every per-step slice is vreg-aligned.
    x_tbi = jnp.transpose(x_bti, (1, 0, 2))
    x_pad = jnp.zeros((T, BP, I), x_bti.dtype).at[:, :B, :].set(x_tbi)
    x_flat = x_pad.reshape(T * BP, I)

    vmem = pl.BlockSpec(memory_space=pltpu.MemorySpace.VMEM)
    hbm = pl.BlockSpec(memory_space=pl.ANY)   # manual DMA inside the kernel

    # Advisory cost estimate so XLA can overlap the call with surrounding ops.
    flops = 2 * (T * BP * I * 4 * H          # x @ W_ih
                 + T * BP * H * 4 * H        # h @ W_hh (recurrence)
                 + BP * T * H * d1           # FC1
                 + BP * d1 * d2              # FC2
                 + BP * d2 * out_size)       # FC3
    transcendentals = T * BP * (2 * 4 * H + H) + BP * out_size
    bytes_accessed = (x_flat.size * 4
                      + (I * 4 * H + H * 4 * H + 4 * H) * 4
                      + T * H * d1 * 2 + d1 * d2 * 2
                      + d2 * out_size * 4
                      + (d1 + d2) * 3 * 4 + out_size * 4
                      + BP * out_size * 4)
    cost = pl.CostEstimate(flops=flops, transcendentals=transcendentals,
                           bytes_accessed=bytes_accessed)

    kernel = functools.partial(_fused_kernel, hidden=H, seq_len=T,
                               batch_padded=BP)
    out_pad = pl.pallas_call(
        kernel,
        out_shape=jax.ShapeDtypeStruct((BP, out_size), jnp.float32),
        in_specs=[vmem, vmem, vmem, vmem,          # x, W_ih^T, W_hh^T, b
                  hbm, vmem, vmem, vmem,           # W1 (HBM), b1, s1, t1
                  hbm, vmem, vmem, vmem,           # W2 (HBM), b2, s2, t2
                  vmem, vmem],                     # W3, b3
        out_specs=vmem,
        scratch_shapes=[
            pltpu.VMEM((T * H, d1), jnp.bfloat16),   # W1 landing buffer
            pltpu.VMEM((d1, d2), jnp.bfloat16),      # W2 landing buffer
            pltpu.VMEM((BP, T * H), jnp.bfloat16),   # flattened h (never in HBM)
            pltpu.SemaphoreType.DMA((2,)),
        ],
        cost_estimate=cost,
        # NOTE: total resident VMEM ~1.6 MiB -> no tiling / vmem_limit needed
        # on v5e/v6e/v7x at these sizes.
    )(x_flat, lstm_params["w_ih_t"], lstm_params["w_hh_t"], lstm_params["b"],
      fc_params["w1"], fc_params["b1"], fc_params["s1"], fc_params["t1"],
      fc_params["w2"], fc_params["b2"], fc_params["s2"], fc_params["t2"],
      fc_params["w3"], fc_params["b3"])
    return out_pad[:B]                       # drop padded batch rows


# ------------------------------ param building -------------------------------
def make_params(key, input_size, hidden_size, seq_len, output_size):
    ks = jax.random.split(key, 12)
    H, I, T = hidden_size, input_size, seq_len
    eps = 1e-5

    def rnd(k, shape, scale):
        return jax.random.normal(k, shape, jnp.float32) * scale

    # LSTM params (PyTorch shapes: W_ih (4H, I), W_hh (4H, H), biases (4H,)).
    w_ih = rnd(ks[0], (4 * H, I), 1.0 / np.sqrt(H))
    w_hh = rnd(ks[1], (4 * H, H), 1.0 / np.sqrt(H))
    b_ih = rnd(ks[2], (4 * H,), 1.0 / np.sqrt(H))
    b_hh = rnd(ks[3], (4 * H,), 1.0 / np.sqrt(H))
    lstm_params = {
        "w_ih_t": w_ih.T,                       # (I, 4H)  f32
        "w_hh_t": w_hh.T,                       # (H, 4H)  f32
        "b": (b_ih + b_hh).reshape(1, 4 * H),   # (1, 4H)  f32
    }

    # FC head:  (T*H -> 1024) BN ReLU Drop  (1024 -> 512) BN ReLU Drop  (512 -> out) Sigmoid
    d_in, d1, d2 = T * H, 1024, 512
    # Large weights in bf16 (HBM-bandwidth dominated); activations stay f32.
    w1 = rnd(ks[4], (d_in, d1), 1.0 / np.sqrt(d_in)).astype(jnp.bfloat16)
    b1 = rnd(ks[5], (1, d1), 0.01)
    w2 = rnd(ks[6], (d1, d2), 1.0 / np.sqrt(d1)).astype(jnp.bfloat16)
    b2 = rnd(ks[7], (1, d2), 0.01)
    w3 = rnd(ks[8], (d2, output_size), 1.0 / np.sqrt(d2))     # tiny, keep f32
    b3 = rnd(ks[9], (1, output_size), 0.01)

    # BatchNorm1d (eval mode) folded to per-feature scale/shift:
    #   y = gamma * (x - mean) / sqrt(var + eps)  + beta  ==  x * s + t
    def bn_fold(k, d):
        ka, kb = jax.random.split(k)
        gamma = 1.0 + rnd(ka, (1, d), 0.05)
        beta = rnd(kb, (1, d), 0.05)
        mean = jnp.zeros((1, d), jnp.float32)
        var = jnp.ones((1, d), jnp.float32)
        s = gamma / jnp.sqrt(var + eps)
        t = beta - mean * s
        return s, t

    s1, t1 = bn_fold(ks[10], d1)
    s2, t2 = bn_fold(ks[11], d2)

    fc_params = {"w1": w1, "b1": b1, "s1": s1, "t1": t1,
                 "w2": w2, "b2": b2, "s2": s2, "t2": t2,
                 "w3": w3, "b3": b3}
    return lstm_params, fc_params


# ------------------------------ pure-JAX reference ---------------------------
def reference_forward(x_bti, lstm_params, fc_params):
    B, T, _ = x_bti.shape
    H = lstm_params["w_hh_t"].shape[0]
    w_ih_t, w_hh_t, b = lstm_params["w_ih_t"], lstm_params["w_hh_t"], lstm_params["b"]

    def sigmoid(z):
        return 1.0 / (1.0 + jnp.exp(-z))

    def step(carry, xt):
        h, c = carry
        gates = xt @ w_ih_t + h @ w_hh_t + b
        i = sigmoid(gates[:, 0 * H:1 * H])
        f = sigmoid(gates[:, 1 * H:2 * H])
        g = jnp.tanh(gates[:, 2 * H:3 * H])
        o = sigmoid(gates[:, 3 * H:4 * H])
        c = f * c + i * g
        h = o * jnp.tanh(c)
        return (h, c), h

    h0 = jnp.zeros((B, H), jnp.float32)
    (_, _), h_all = lax.scan(step, (h0, h0), jnp.transpose(x_bti, (1, 0, 2)))
    flat = jnp.transpose(h_all, (1, 0, 2)).reshape(B, -1)

    p = fc_params
    h1 = jnp.dot(flat.astype(jnp.bfloat16), p["w1"],
                 preferred_element_type=jnp.float32) + p["b1"]
    h1 = jnp.maximum(h1 * p["s1"] + p["t1"], 0.0)
    h2 = jnp.dot(h1.astype(jnp.bfloat16), p["w2"],
                 preferred_element_type=jnp.float32) + p["b2"]
    h2 = jnp.maximum(h2 * p["s2"] + p["t2"], 0.0)
    h3 = h2 @ p["w3"] + p["b3"]
    return sigmoid(h3)


# ----------------------------------- main ------------------------------------
if __name__ == "__main__":
    input_size, hidden_size, seq_len, output_size = 4, 32, 8, 1
    batch = 2

    key = jax.random.PRNGKey(0)
    k_x, k_p = jax.random.split(key)
    x = jax.random.normal(k_x, (batch, seq_len, input_size), jnp.float32)
    lstm_params, fc_params = make_params(k_p, input_size, hidden_size, seq_len,
                                         output_size)

    fwd = jax.jit(simple_rnn_forward)
    out = jax.block_until_ready(fwd(x, lstm_params, fc_params))

    ref = jax.block_until_ready(reference_forward(x, lstm_params, fc_params))
    assert out.shape == (batch, output_size)
    np.testing.assert_allclose(np.asarray(out), np.asarray(ref),
                               rtol=5e-3, atol=1e-3)

    print("KERNEL_OK")
</pallas_src>

<mosaic_0001>
module attributes {stable_mosaic.version = 11 : i64} {
  func.func @_fused_kernel(%arg0: memref<64x4xf32, #tpu.memory_space<vmem>>, %arg1: memref<4x128xf32, #tpu.memory_space<vmem>>, %arg2: memref<32x128xf32, #tpu.memory_space<vmem>>, %arg3: memref<1x128xf32, #tpu.memory_space<vmem>>, %arg4: memref<256x1024xbf16, #tpu.memory_space<any>>, %arg5: memref<1x1024xf32, #tpu.memory_space<vmem>>, %arg6: memref<1x1024xf32, #tpu.memory_space<vmem>>, %arg7: memref<1x1024xf32, #tpu.memory_space<vmem>>, %arg8: memref<1024x512xbf16, #tpu.memory_space<any>>, %arg9: memref<1x512xf32, #tpu.memory_space<vmem>>, %arg10: memref<1x512xf32, #tpu.memory_space<vmem>>, %arg11: memref<1x512xf32, #tpu.memory_space<vmem>>, %arg12: memref<512x1xf32, #tpu.memory_space<vmem>>, %arg13: memref<1x1xf32, #tpu.memory_space<vmem>>, %arg14: memref<8x1xf32, #tpu.memory_space<vmem>>, %arg15: memref<256x1024xbf16, #tpu.memory_space<vmem>>, %arg16: memref<1024x512xbf16, #tpu.memory_space<vmem>>, %arg17: memref<8x256xbf16, #tpu.memory_space<vmem>>, %arg18: memref<2x!tpu.dma_semaphore, #tpu.memory_space<semaphore_mem>>) attributes {dimension_semantics = [], scalar_prefetch = 0 : i64, scratch_operands = 4 : i64, tpu.core_type = #tpu.core_type<tc>} {
    %c0_i32 = arith.constant 0 : i32
    %0 = tpu.memref_slice %arg18[%c0_i32] : memref<2x!tpu.dma_semaphore, #tpu.memory_space<semaphore_mem>> -> memref<1x!tpu.dma_semaphore, #tpu.memory_space<semaphore_mem>>
    %1 = tpu.memref_squeeze %0 : memref<1x!tpu.dma_semaphore, #tpu.memory_space<semaphore_mem>> -> memref<!tpu.dma_semaphore, #tpu.memory_space<semaphore_mem>>
    tpu.enqueue_dma source(%arg4 : memref<256x1024xbf16, #tpu.memory_space<any>>) target(%arg15 : memref<256x1024xbf16, #tpu.memory_space<vmem>>) target_semaphore(%1 : memref<!tpu.dma_semaphore, #tpu.memory_space<semaphore_mem>>)
    %c1_i32 = arith.constant 1 : i32
    %2 = tpu.memref_slice %arg18[%c1_i32] : memref<2x!tpu.dma_semaphore, #tpu.memory_space<semaphore_mem>> -> memref<1x!tpu.dma_semaphore, #tpu.memory_space<semaphore_mem>>
    %3 = tpu.memref_squeeze %2 : memref<1x!tpu.dma_semaphore, #tpu.memory_space<semaphore_mem>> -> memref<!tpu.dma_semaphore, #tpu.memory_space<semaphore_mem>>
    tpu.enqueue_dma source(%arg8 : memref<1024x512xbf16, #tpu.memory_space<any>>) target(%arg16 : memref<1024x512xbf16, #tpu.memory_space<vmem>>) target_semaphore(%3 : memref<!tpu.dma_semaphore, #tpu.memory_space<semaphore_mem>>)
    %c0 = arith.constant 0 : index
    %c0_0 = arith.constant 0 : index
    %4 = vector.load %arg2[%c0, %c0_0] : memref<32x128xf32, #tpu.memory_space<vmem>>, vector<32x128xf32>
    %c0_1 = arith.constant 0 : index
    %c0_2 = arith.constant 0 : index
    %5 = vector.load %arg0[%c0_1, %c0_2] : memref<64x4xf32, #tpu.memory_space<vmem>>, vector<64x4xf32>
    %c0_3 = arith.constant 0 : index
    %c0_4 = arith.constant 0 : index
    %6 = vector.load %arg1[%c0_3, %c0_4] : memref<4x128xf32, #tpu.memory_space<vmem>>, vector<4x128xf32>
    %cst = arith.constant dense<0.000000e+00> : vector<64x128xf32>
    %7 = tpu.matmul %5, %6, %cst {dimension_numbers = #tpu.dot_dimension_numbers<[1], [0], [0], [1], [0, 0, 1, 1], [], []>} : vector<64x4xf32>, vector<4x128xf32>, vector<64x128xf32> -> vector<64x128xf32>
    %c0_5 = arith.constant 0 : index
    %c0_6 = arith.constant 0 : index
    %8 = vector.load %arg3[%c0_5, %c0_6] : memref<1x128xf32, #tpu.memory_space<vmem>>, vector<1x128xf32>
    %9 = vector.broadcast %8 : vector<1x128xf32> to vector<64x128xf32>
    %10 = arith.addf %7, %9 : vector<64x128xf32>
    %11 = tpu.iota {dimensions = array<i32: 1>} : vector<8x128xi32>
    %c64_i32 = arith.constant 64 : i32
    %12 = vector.broadcast %c64_i32 : i32 to vector<8x128xi32>
    %13 = arith.cmpi sge, %11, %12 : vector<8x128xi32>
    %c96_i32 = arith.constant 96 : i32
    %14 = vector.broadcast %c96_i32 : i32 to vector<8x128xi32>
    %15 = arith.cmpi slt, %11, %14 : vector<8x128xi32>
    %16 = arith.andi %13, %15 : vector<8x128xi1>
    %cst_7 = arith.constant 0.000000e+00 : f32
    %17 = vector.broadcast %cst_7 : f32 to vector<8x32xf32>
    %18 = vector.extract_strided_slice %10 {offsets = [0, 0], sizes = [8, 128], strides = [1, 1]} : vector<64x128xf32> to vector<8x128xf32>
    %cst_8 = arith.constant 5.000000e-01 : f32
    %19 = vector.broadcast %cst_8 : f32 to vector<8x128xf32>
    %20 = arith.mulf %19, %18 : vector<8x128xf32>
    %21 = math.tanh %20 : vector<8x128xf32>
    %22 = math.tanh %18 : vector<8x128xf32>
    %cst_9 = arith.constant 5.000000e-01 : f32
    %23 = vector.broadcast %cst_9 : f32 to vector<8x128xf32>
    %24 = arith.mulf %23, %21 : vector<8x128xf32>
    %cst_10 = arith.constant 5.000000e-01 : f32
    %25 = vector.broadcast %cst_10 : f32 to vector<8x128xf32>
    %26 = arith.addf %25, %24 : vector<8x128xf32>
    %27 = arith.select %16, %22, %26 : vector<8x128xi1>, vector<8x128xf32>
    %28 = vector.extract_strided_slice %27 {offsets = [0, 0], sizes = [8, 32], strides = [1, 1]} : vector<8x128xf32> to vector<8x32xf32>
    %29 = vector.extract_strided_slice %27 {offsets = [0, 32], sizes = [8, 32], strides = [1, 1]} : vector<8x128xf32> to vector<8x32xf32>
    %30 = vector.extract_strided_slice %27 {offsets = [0, 64], sizes = [8, 32], strides = [1, 1]} : vector<8x128xf32> to vector<8x32xf32>
    %31 = vector.extract_strided_slice %27 {offsets = [0, 96], sizes = [8, 32], strides = [1, 1]} : vector<8x128xf32> to vector<8x32xf32>
    %32 = arith.mulf %29, %17 : vector<8x32xf32>
    %33 = arith.mulf %28, %30 : vector<8x32xf32>
    %34 = arith.addf %32, %33 : vector<8x32xf32>
    %35 = math.tanh %34 : vector<8x32xf32>
    %36 = arith.mulf %31, %35 : vector<8x32xf32>
    %37 = arith.truncf %36 : vector<8x32xf32> to vector<8x32xbf16>
    %c0_11 = arith.constant 0 : index
    %c0_12 = arith.constant 0 : index
    %38 = vector.load %arg17[%c0_11, %c0_12] : memref<8x256xbf16, #tpu.memory_space<vmem>>, vector<8x32xbf16>
    tpu.vector_store %arg17[%c0_11, %c0_12], %37 {strides = array<i32>} : memref<8x256xbf16, #tpu.memory_space<vmem>>, vector<8x32xbf16>,
    %39 = vector.extract_strided_slice %10 {offsets = [8, 0], sizes = [8, 128], strides = [1, 1]} : vector<64x128xf32> to vector<8x128xf32>
    %cst_13 = arith.constant dense<0.000000e+00> : vector<8x128xf32>
    %40 = tpu.matmul %36, %4, %cst_13 {dimension_numbers = #tpu.dot_dimension_numbers<[1], [0], [0], [1], [0, 0, 1, 1], [], []>} : vector<8x32xf32>, vector<32x128xf32>, vector<8x128xf32> -> vector<8x128xf32>
    %41 = arith.addf %39, %40 : vector<8x128xf32>
    %cst_14 = arith.constant 5.000000e-01 : f32
    %42 = vector.broadcast %cst_14 : f32 to vector<8x128xf32>
    %43 = arith.mulf %42, %41 : vector<8x128xf32>
    %44 = math.tanh %43 : vector<8x128xf32>
    %45 = math.tanh %41 : vector<8x128xf32>
    %cst_15 = arith.constant 5.000000e-01 : f32
    %46 = vector.broadcast %cst_15 : f32 to vector<8x128xf32>
    %47 = arith.mulf %46, %44 : vector<8x128xf32>
    %cst_16 = arith.constant 5.000000e-01 : f32
    %48 = vector.broadcast %cst_16 : f32 to vector<8x128xf32>
    %49 = arith.addf %48, %47 : vector<8x128xf32>
    %50 = arith.select %16, %45, %49 : vector<8x128xi1>, vector<8x128xf32>
    %51 = vector.extract_strided_slice %50 {offsets = [0, 0], sizes = [8, 32], strides = [1, 1]} : vector<8x128xf32> to vector<8x32xf32>
    %52 = vector.extract_strided_slice %50 {offsets = [0, 32], sizes = [8, 32], strides = [1, 1]} : vector<8x128xf32> to vector<8x32xf32>
    %53 = vector.extract_strided_slice %50 {offsets = [0, 64], sizes = [8, 32], strides = [1, 1]} : vector<8x128xf32> to vector<8x32xf32>
    %54 = vector.extract_strided_slice %50 {offsets = [0, 96], sizes = [8, 32], strides = [1, 1]} : vector<8x128xf32> to vector<8x32xf32>
    %55 = arith.mulf %52, %34 : vector<8x32xf32>
    %56 = arith.mulf %51, %53 : vector<8x32xf32>
    %57 = arith.addf %55, %56 : vector<8x32xf32>
    %58 = math.tanh %57 : vector<8x32xf32>
    %59 = arith.mulf %54, %58 : vector<8x32xf32>
    %60 = arith.truncf %59 : vector<8x32xf32> to vector<8x32xbf16>
    %c0_17 = arith.constant 0 : index
    %c32 = arith.constant 32 : index
    %61 = vector.load %arg17[%c0_17, %c32] : memref<8x256xbf16, #tpu.memory_space<vmem>>, vector<8x32xbf16>
    tpu.vector_store %arg17[%c0_17, %c32], %60 {strides = array<i32>} : memref<8x256xbf16, #tpu.memory_space<vmem>>, vector<8x32xbf16>,
    %62 = vector.extract_strided_slice %10 {offsets = [16, 0], sizes = [8, 128], strides = [1, 1]} : vector<64x128xf32> to vector<8x128xf32>
    %cst_18 = arith.constant dense<0.000000e+00> : vector<8x128xf32>
    %63 = tpu.matmul %59, %4, %cst_18 {dimension_numbers = #tpu.dot_dimension_numbers<[1], [0], [0], [1], [0, 0, 1, 1], [], []>} : vector<8x32xf32>, vector<32x128xf32>, vector<8x128xf32> -> vector<8x128xf32>
    %64 = arith.addf %62, %63 : vector<8x128xf32>
    %cst_19 = arith.constant 5.000000e-01 : f32
    %65 = vector.broadcast %cst_19 : f32 to vector<8x128xf32>
    %66 = arith.mulf %65, %64 : vector<8x128xf32>
    %67 = math.tanh %66 : vector<8x128xf32>
    %68 = math.tanh %64 : vector<8x128xf32>
    %cst_20 = arith.constant 5.000000e-01 : f32
    %69 = vector.broadcast %cst_20 : f32 to vector<8x128xf32>
    %70 = arith.mulf %69, %67 : vector<8x128xf32>
    %cst_21 = arith.constant 5.000000e-01 : f32
    %71 = vector.broadcast %cst_21 : f32 to vector<8x128xf32>
    %72 = arith.addf %71, %70 : vector<8x128xf32>
    %73 = arith.select %16, %68, %72 : vector<8x128xi1>, vector<8x128xf32>
    %74 = vector.extract_strided_slice %73 {offsets = [0, 0], sizes = [8, 32], strides = [1, 1]} : vector<8x128xf32> to vector<8x32xf32>
    %75 = vector.extract_strided_slice %73 {offsets = [0, 32], sizes = [8, 32], strides = [1, 1]} : vector<8x128xf32> to vector<8x32xf32>
    %76 = vector.extract_strided_slice %73 {offsets = [0, 64], sizes = [8, 32], strides = [1, 1]} : vector<8x128xf32> to vector<8x32xf32>
    %77 = vector.extract_strided_slice %73 {offsets = [0, 96], sizes = [8, 32], strides = [1, 1]} : vector<8x128xf32> to vector<8x32xf32>
    %78 = arith.mulf %75, %57 : vector<8x32xf32>
    %79 = arith.mulf %74, %76 : vector<8x32xf32>
    %80 = arith.addf %78, %79 : vector<8x32xf32>
    %81 = math.tanh %80 : vector<8x32xf32>
    %82 = arith.mulf %77, %81 : vector<8x32xf32>
    %83 = arith.truncf %82 : vector<8x32xf32> to vector<8x32xbf16>
    %c0_22 = arith.constant 0 : index
    %c64 = arith.constant 64 : index
    %84 = vector.load %arg17[%c0_22, %c64] : memref<8x256xbf16, #tpu.memory_space<vmem>>, vector<8x32xbf16>
    tpu.vector_store %arg17[%c0_22, %c64], %83 {strides = array<i32>} : memref<8x256xbf16, #tpu.memory_space<vmem>>, vector<8x32xbf16>,
    %85 = vector.extract_strided_slice %10 {offsets = [24, 0], sizes = [8, 128], strides = [1, 1]} : vector<64x128xf32> to vector<8x128xf32>
    %cst_23 = arith.constant dense<0.000000e+00> : vector<8x128xf32>
    %86 = tpu.matmul %82, %4, %cst_23 {dimension_numbers = #tpu.dot_dimension_numbers<[1], [0], [0], [1], [0, 0, 1, 1], [], []>} : vector<8x32xf32>, vector<32x128xf32>, vector<8x128xf32> -> vector<8x128xf32>
    %87 = arith.addf %85, %86 : vector<8x128xf32>
    %cst_24 = arith.constant 5.000000e-01 : f32
    %88 = vector.broadcast %cst_24 : f32 to vector<8x128xf32>
    %89 = arith.mulf %88, %87 : vector<8x128xf32>
    %90 = math.tanh %89 : vector<8x128xf32>
    %91 = math.tanh %87 : vector<8x128xf32>
    %cst_25 = arith.constant 5.000000e-01 : f32
    %92 = vector.broadcast %cst_25 : f32 to vector<8x128xf32>
    %93 = arith.mulf %92, %90 : vector<8x128xf32>
    %cst_26 = arith.constant 5.000000e-01 : f32
    %94 = vector.broadcast %cst_26 : f32 to vector<8x128xf32>
    %95 = arith.addf %94, %93 : vector<8x128xf32>
    %96 = arith.select %16, %91, %95 : vector<8x128xi1>, vector<8x128xf32>
    %97 = vector.extract_strided_slice %96 {offsets = [0, 0], sizes = [8, 32], strides = [1, 1]} : vector<8x128xf32> to vector<8x32xf32>
    %98 = vector.extract_strided_slice %96 {offsets = [0, 32], sizes = [8, 32], strides = [1, 1]} : vector<8x128xf32> to vector<8x32xf32>
    %99 = vector.extract_strided_slice %96 {offsets = [0, 64], sizes = [8, 32], strides = [1, 1]} : vector<8x128xf32> to vector<8x32xf32>
    %100 = vector.extract_strided_slice %96 {offsets = [0, 96], sizes = [8, 32], strides = [1, 1]} : vector<8x128xf32> to vector<8x32xf32>
    %101 = arith.mulf %98, %80 : vector<8x32xf32>
    %102 = arith.mulf %97, %99 : vector<8x32xf32>
    %103 = arith.addf %101, %102 : vector<8x32xf32>
    %104 = math.tanh %103 : vector<8x32xf32>
    %105 = arith.mulf %100, %104 : vector<8x32xf32>
    %106 = arith.truncf %105 : vector<8x32xf32> to vector<8x32xbf16>
    %c0_27 = arith.constant 0 : index
    %c96 = arith.constant 96 : index
    %107 = vector.load %arg17[%c0_27, %c96] : memref<8x256xbf16, #tpu.memory_space<vmem>>, vector<8x32xbf16>
    tpu.vector_store %arg17[%c0_27, %c96], %106 {strides = array<i32>} : memref<8x256xbf16, #tpu.memory_space<vmem>>, vector<8x32xbf16>,
    %108 = vector.extract_strided_slice %10 {offsets = [32, 0], sizes = [8, 128], strides = [1, 1]} : vector<64x128xf32> to vector<8x128xf32>
    %cst_28 = arith.constant dense<0.000000e+00> : vector<8x128xf32>
    %109 = tpu.matmul %105, %4, %cst_28 {dimension_numbers = #tpu.dot_dimension_numbers<[1], [0], [0], [1], [0, 0, 1, 1], [], []>} : vector<8x32xf32>, vector<32x128xf32>, vector<8x128xf32> -> vector<8x128xf32>
    %110 = arith.addf %108, %109 : vector<8x128xf32>
    %cst_29 = arith.constant 5.000000e-01 : f32
    %111 = vector.broadcast %cst_29 : f32 to vector<8x128xf32>
    %112 = arith.mulf %111, %110 : vector<8x128xf32>
    %113 = math.tanh %112 : vector<8x128xf32>
    %114 = math.tanh %110 : vector<8x128xf32>
    %cst_30 = arith.constant 5.000000e-01 : f32
    %115 = vector.broadcast %cst_30 : f32 to vector<8x128xf32>
    %116 = arith.mulf %115, %113 : vector<8x128xf32>
    %cst_31 = arith.constant 5.000000e-01 : f32
    %117 = vector.broadcast %cst_31 : f32 to vector<8x128xf32>
    %118 = arith.addf %117, %116 : vector<8x128xf32>
    %119 = arith.select %16, %114, %118 : vector<8x128xi1>, vector<8x128xf32>
    %120 = vector.extract_strided_slice %119 {offsets = [0, 0], sizes = [8, 32], strides = [1, 1]} : vector<8x128xf32> to vector<8x32xf32>
    %121 = vector.extract_strided_slice %119 {offsets = [0, 32], sizes = [8, 32], strides = [1, 1]} : vector<8x128xf32> to vector<8x32xf32>
    %122 = vector.extract_strided_slice %119 {offsets = [0, 64], sizes = [8, 32], strides = [1, 1]} : vector<8x128xf32> to vector<8x32xf32>
    %123 = vector.extract_strided_slice %119 {offsets = [0, 96], sizes = [8, 32], strides = [1, 1]} : vector<8x128xf32> to vector<8x32xf32>
    %124 = arith.mulf %121, %103 : vector<8x32xf32>
    %125 = arith.mulf %120, %122 : vector<8x32xf32>
    %126 = arith.addf %124, %125 : vector<8x32xf32>
    %127 = math.tanh %126 : vector<8x32xf32>
    %128 = arith.mulf %123, %127 : vector<8x32xf32>
    %129 = arith.truncf %128 : vector<8x32xf32> to vector<8x32xbf16>
    %c0_32 = arith.constant 0 : index
    %c128 = arith.constant 128 : index
    %130 = vector.load %arg17[%c0_32, %c128] : memref<8x256xbf16, #tpu.memory_space<vmem>>, vector<8x32xbf16>
    tpu.vector_store %arg17[%c0_32, %c128], %129 {strides = array<i32>} : memref<8x256xbf16, #tpu.memory_space<vmem>>, vector<8x32xbf16>,
    %131 = vector.extract_strided_slice %10 {offsets = [40, 0], sizes = [8, 128], strides = [1, 1]} : vector<64x128xf32> to vector<8x128xf32>
    %cst_33 = arith.constant dense<0.000000e+00> : vector<8x128xf32>
    %132 = tpu.matmul %128, %4, %cst_33 {dimension_numbers = #tpu.dot_dimension_numbers<[1], [0], [0], [1], [0, 0, 1, 1], [], []>} : vector<8x32xf32>, vector<32x128xf32>, vector<8x128xf32> -> vector<8x128xf32>
    %133 = arith.addf %131, %132 : vector<8x128xf32>
    %cst_34 = arith.constant 5.000000e-01 : f32
    %134 = vector.broadcast %cst_34 : f32 to vector<8x128xf32>
    %135 = arith.mulf %134, %133 : vector<8x128xf32>
    %136 = math.tanh %135 : vector<8x128xf32>
    %137 = math.tanh %133 : vector<8x128xf32>
    %cst_35 = arith.constant 5.000000e-01 : f32
    %138 = vector.broadcast %cst_35 : f32 to vector<8x128xf32>
    %139 = arith.mulf %138, %136 : vector<8x128xf32>
    %cst_36 = arith.constant 5.000000e-01 : f32
    %140 = vector.broadcast %cst_36 : f32 to vector<8x128xf32>
    %141 = arith.addf %140, %139 : vector<8x128xf32>
    %142 = arith.select %16, %137, %141 : vector<8x128xi1>, vector<8x128xf32>
    %143 = vector.extract_strided_slice %142 {offsets = [0, 0], sizes = [8, 32], strides = [1, 1]} : vector<8x128xf32> to vector<8x32xf32>
    %144 = vector.extract_strided_slice %142 {offsets = [0, 32], sizes = [8, 32], strides = [1, 1]} : vector<8x128xf32> to vector<8x32xf32>
    %145 = vector.extract_strided_slice %142 {offsets = [0, 64], sizes = [8, 32], strides = [1, 1]} : vector<8x128xf32> to vector<8x32xf32>
    %146 = vector.extract_strided_slice %142 {offsets = [0, 96], sizes = [8, 32], strides = [1, 1]} : vector<8x128xf32> to vector<8x32xf32>
    %147 = arith.mulf %144, %126 : vector<8x32xf32>
    %148 = arith.mulf %143, %145 : vector<8x32xf32>
    %149 = arith.addf %147, %148 : vector<8x32xf32>
    %150 = math.tanh %149 : vector<8x32xf32>
    %151 = arith.mulf %146, %150 : vector<8x32xf32>
    %152 = arith.truncf %151 : vector<8x32xf32> to vector<8x32xbf16>
    %c0_37 = arith.constant 0 : index
    %c160 = arith.constant 160 : index
    %153 = vector.load %arg17[%c0_37, %c160] : memref<8x256xbf16, #tpu.memory_space<vmem>>, vector<8x32xbf16>
    tpu.vector_store %arg17[%c0_37, %c160], %152 {strides = array<i32>} : memref<8x256xbf16, #tpu.memory_space<vmem>>, vector<8x32xbf16>,
    %154 = vector.extract_strided_slice %10 {offsets = [48, 0], sizes = [8, 128], strides = [1, 1]} : vector<64x128xf32> to vector<8x128xf32>
    %cst_38 = arith.constant dense<0.000000e+00> : vector<8x128xf32>
    %155 = tpu.matmul %151, %4, %cst_38 {dimension_numbers = #tpu.dot_dimension_numbers<[1], [0], [0], [1], [0, 0, 1, 1], [], []>} : vector<8x32xf32>, vector<32x128xf32>, vector<8x128xf32> -> vector<8x128xf32>
    %156 = arith.addf %154, %155 : vector<8x128xf32>
    %cst_39 = arith.constant 5.000000e-01 : f32
    %157 = vector.broadcast %cst_39 : f32 to vector<8x128xf32>
    %158 = arith.mulf %157, %156 : vector<8x128xf32>
    %159 = math.tanh %158 : vector<8x128xf32>
    %160 = math.tanh %156 : vector<8x128xf32>
    %cst_40 = arith.constant 5.000000e-01 : f32
    %161 = vector.broadcast %cst_40 : f32 to vector<8x128xf32>
    %162 = arith.mulf %161, %159 : vector<8x128xf32>
    %cst_41 = arith.constant 5.000000e-01 : f32
    %163 = vector.broadcast %cst_41 : f32 to vector<8x128xf32>
    %164 = arith.addf %163, %162 : vector<8x128xf32>
    %165 = arith.select %16, %160, %164 : vector<8x128xi1>, vector<8x128xf32>
    %166 = vector.extract_strided_slice %165 {offsets = [0, 0], sizes = [8, 32], strides = [1, 1]} : vector<8x128xf32> to vector<8x32xf32>
    %167 = vector.extract_strided_slice %165 {offsets = [0, 32], sizes = [8, 32], strides = [1, 1]} : vector<8x128xf32> to vector<8x32xf32>
    %168 = vector.extract_strided_slice %165 {offsets = [0, 64], sizes = [8, 32], strides = [1, 1]} : vector<8x128xf32> to vector<8x32xf32>
    %169 = vector.extract_strided_slice %165 {offsets = [0, 96], sizes = [8, 32], strides = [1, 1]} : vector<8x128xf32> to vector<8x32xf32>
    %170 = arith.mulf %167, %149 : vector<8x32xf32>
    %171 = arith.mulf %166, %168 : vector<8x32xf32>
    %172 = arith.addf %170, %171 : vector<8x32xf32>
    %173 = math.tanh %172 : vector<8x32xf32>
    %174 = arith.mulf %169, %173 : vector<8x32xf32>
    %175 = arith.truncf %174 : vector<8x32xf32> to vector<8x32xbf16>
    %c0_42 = arith.constant 0 : index
    %c192 = arith.constant 192 : index
    %176 = vector.load %arg17[%c0_42, %c192] : memref<8x256xbf16, #tpu.memory_space<vmem>>, vector<8x32xbf16>
    tpu.vector_store %arg17[%c0_42, %c192], %175 {strides = array<i32>} : memref<8x256xbf16, #tpu.memory_space<vmem>>, vector<8x32xbf16>,
    %177 = vector.extract_strided_slice %10 {offsets = [56, 0], sizes = [8, 128], strides = [1, 1]} : vector<64x128xf32> to vector<8x128xf32>
    %cst_43 = arith.constant dense<0.000000e+00> : vector<8x128xf32>
    %178 = tpu.matmul %174, %4, %cst_43 {dimension_numbers = #tpu.dot_dimension_numbers<[1], [0], [0], [1], [0, 0, 1, 1], [], []>} : vector<8x32xf32>, vector<32x128xf32>, vector<8x128xf32> -> vector<8x128xf32>
    %179 = arith.addf %177, %178 : vector<8x128xf32>
    %cst_44 = arith.constant 5.000000e-01 : f32
    %180 = vector.broadcast %cst_44 : f32 to vector<8x128xf32>
    %181 = arith.mulf %180, %179 : vector<8x128xf32>
    %182 = math.tanh %181 : vector<8x128xf32>
    %183 = math.tanh %179 : vector<8x128xf32>
    %cst_45 = arith.constant 5.000000e-01 : f32
    %184 = vector.broadcast %cst_45 : f32 to vector<8x128xf32>
    %185 = arith.mulf %184, %182 : vector<8x128xf32>
    %cst_46 = arith.constant 5.000000e-01 : f32
    %186 = vector.broadcast %cst_46 : f32 to vector<8x128xf32>
    %187 = arith.addf %186, %185 : vector<8x128xf32>
    %188 = arith.select %16, %183, %187 : vector<8x128xi1>, vector<8x128xf32>
    %189 = vector.extract_strided_slice %188 {offsets = [0, 0], sizes = [8, 32], strides = [1, 1]} : vector<8x128xf32> to vector<8x32xf32>
    %190 = vector.extract_strided_slice %188 {offsets = [0, 32], sizes = [8, 32], strides = [1, 1]} : vector<8x128xf32> to vector<8x32xf32>
    %191 = vector.extract_strided_slice %188 {offsets = [0, 64], sizes = [8, 32], strides = [1, 1]} : vector<8x128xf32> to vector<8x32xf32>
    %192 = vector.extract_strided_slice %188 {offsets = [0, 96], sizes = [8, 32], strides = [1, 1]} : vector<8x128xf32> to vector<8x32xf32>
    %193 = arith.mulf %190, %172 : vector<8x32xf32>
    %194 = arith.mulf %189, %191 : vector<8x32xf32>
    %195 = arith.addf %193, %194 : vector<8x32xf32>
    %196 = math.tanh %195 : vector<8x32xf32>
    %197 = arith.mulf %192, %196 : vector<8x32xf32>
    %198 = arith.truncf %197 : vector<8x32xf32> to vector<8x32xbf16>
    %c0_47 = arith.constant 0 : index
    %c224 = arith.constant 224 : index
    %199 = vector.load %arg17[%c0_47, %c224] : memref<8x256xbf16, #tpu.memory_space<vmem>>, vector<8x32xbf16>
    tpu.vector_store %arg17[%c0_47, %c224], %198 {strides = array<i32>} : memref<8x256xbf16, #tpu.memory_space<vmem>>, vector<8x32xbf16>,
    %c0_i32_48 = arith.constant 0 : i32
    %200 = tpu.memref_slice %arg18[%c0_i32_48] : memref<2x!tpu.dma_semaphore, #tpu.memory_space<semaphore_mem>> -> memref<1x!tpu.dma_semaphore, #tpu.memory_space<semaphore_mem>>
    %201 = tpu.memref_squeeze %200 : memref<1x!tpu.dma_semaphore, #tpu.memory_space<semaphore_mem>> -> memref<!tpu.dma_semaphore, #tpu.memory_space<semaphore_mem>>
    tpu.wait_dma2 semaphore(%201 : memref<!tpu.dma_semaphore, #tpu.memory_space<semaphore_mem>>) src(%arg4 : memref<256x1024xbf16, #tpu.memory_space<any>>) dst(%arg15 : memref<256x1024xbf16, #tpu.memory_space<vmem>>)
    %c0_49 = arith.constant 0 : index
    %c0_50 = arith.constant 0 : index
    %202 = vector.load %arg17[%c0_49, %c0_50] : memref<8x256xbf16, #tpu.memory_space<vmem>>, vector<8x256xbf16>
    %c0_51 = arith.constant 0 : index
    %c0_52 = arith.constant 0 : index
    %203 = vector.load %arg15[%c0_51, %c0_52] : memref<256x1024xbf16, #tpu.memory_space<vmem>>, vector<256x1024xbf16>
    %cst_53 = arith.constant dense<0.000000e+00> : vector<8x1024xf32>
    %204 = tpu.matmul %202, %203, %cst_53 {dimension_numbers = #tpu.dot_dimension_numbers<[1], [0], [0], [1], [0, 0, 1, 1], [], []>} : vector<8x256xbf16>, vector<256x1024xbf16>, vector<8x1024xf32> -> vector<8x1024xf32>
    %c0_54 = arith.constant 0 : index
    %c0_55 = arith.constant 0 : index
    %205 = vector.load %arg5[%c0_54, %c0_55] : memref<1x1024xf32, #tpu.memory_space<vmem>>, vector<1x1024xf32>
    %206 = vector.broadcast %205 : vector<1x1024xf32> to vector<8x1024xf32>
    %207 = arith.addf %204, %206 : vector<8x1024xf32>
    %c0_56 = arith.constant 0 : index
    %c0_57 = arith.constant 0 : index
    %208 = vector.load %arg6[%c0_56, %c0_57] : memref<1x1024xf32, #tpu.memory_space<vmem>>, vector<1x1024xf32>
    %209 = vector.broadcast %208 : vector<1x1024xf32> to vector<8x1024xf32>
    %210 = arith.mulf %207, %209 : vector<8x1024xf32>
    %c0_58 = arith.constant 0 : index
    %c0_59 = arith.constant 0 : index
    %211 = vector.load %arg7[%c0_58, %c0_59] : memref<1x1024xf32, #tpu.memory_space<vmem>>, vector<1x1024xf32>
    %212 = vector.broadcast %211 : vector<1x1024xf32> to vector<8x1024xf32>
    %213 = arith.addf %210, %212 : vector<8x1024xf32>
    %cst_60 = arith.constant 0.000000e+00 : f32
    %214 = vector.broadcast %cst_60 : f32 to vector<8x1024xf32>
    %215 = arith.maximumf %213, %214 : vector<8x1024xf32>
    %c1_i32_61 = arith.constant 1 : i32
    %216 = tpu.memref_slice %arg18[%c1_i32_61] : memref<2x!tpu.dma_semaphore, #tpu.memory_space<semaphore_mem>> -> memref<1x!tpu.dma_semaphore, #tpu.memory_space<semaphore_mem>>
    %217 = tpu.memref_squeeze %216 : memref<1x!tpu.dma_semaphore, #tpu.memory_space<semaphore_mem>> -> memref<!tpu.dma_semaphore, #tpu.memory_space<semaphore_mem>>
    tpu.wait_dma2 semaphore(%217 : memref<!tpu.dma_semaphore, #tpu.memory_space<semaphore_mem>>) src(%arg8 : memref<1024x512xbf16, #tpu.memory_space<any>>) dst(%arg16 : memref<1024x512xbf16, #tpu.memory_space<vmem>>)
    %218 = arith.truncf %215 : vector<8x1024xf32> to vector<8x1024xbf16>
    %c0_62 = arith.constant 0 : index
    %c0_63 = arith.constant 0 : index
    %219 = vector.load %arg16[%c0_62, %c0_63] : memref<1024x512xbf16, #tpu.memory_space<vmem>>, vector<1024x512xbf16>
    %cst_64 = arith.constant dense<0.000000e+00> : vector<8x512xf32>
    %220 = tpu.matmul %218, %219, %cst_64 {dimension_numbers = #tpu.dot_dimension_numbers<[1], [0], [0], [1], [0, 0, 1, 1], [], []>} : vector<8x1024xbf16>, vector<1024x512xbf16>, vector<8x512xf32> -> vector<8x512xf32>
    %c0_65 = arith.constant 0 : index
    %c0_66 = arith.constant 0 : index
    %221 = vector.load %arg9[%c0_65, %c0_66] : memref<1x512xf32, #tpu.memory_space<vmem>>, vector<1x512xf32>
    %222 = vector.broadcast %221 : vector<1x512xf32> to vector<8x512xf32>
    %223 = arith.addf %220, %222 : vector<8x512xf32>
    %c0_67 = arith.constant 0 : index
    %c0_68 = arith.constant 0 : index
    %224 = vector.load %arg10[%c0_67, %c0_68] : memref<1x512xf32, #tpu.memory_space<vmem>>, vector<1x512xf32>
    %225 = vector.broadcast %224 : vector<1x512xf32> to vector<8x512xf32>
    %226 = arith.mulf %223, %225 : vector<8x512xf32>
    %c0_69 = arith.constant 0 : index
    %c0_70 = arith.constant 0 : index
    %227 = vector.load %arg11[%c0_69, %c0_70] : memref<1x512xf32, #tpu.memory_space<vmem>>, vector<1x512xf32>
    %228 = vector.broadcast %227 : vector<1x512xf32> to vector<8x512xf32>
    %229 = arith.addf %226, %228 : vector<8x512xf32>
    %cst_71 = arith.constant 0.000000e+00 : f32
    %230 = vector.broadcast %cst_71 : f32 to vector<8x512xf32>
    %231 = arith.maximumf %229, %230 : vector<8x512xf32>
    %c0_72 = arith.constant 0 : index
    %c0_73 = arith.constant 0 : index
    %232 = vector.load %arg12[%c0_72, %c0_73] : memref<512x1xf32, #tpu.memory_space<vmem>>, vector<512x1xf32>
    %cst_74 = arith.constant dense<0.000000e+00> : vector<8x1xf32>
    %233 = tpu.matmul %231, %232, %cst_74 {dimension_numbers = #tpu.dot_dimension_numbers<[1], [0], [0], [1], [0, 0, 1, 1], [], []>} : vector<8x512xf32>, vector<512x1xf32>, vector<8x1xf32> -> vector<8x1xf32>
    %c0_75 = arith.constant 0 : index
    %c0_76 = arith.constant 0 : index
    %234 = vector.load %arg13[%c0_75, %c0_76] : memref<1x1xf32, #tpu.memory_space<vmem>>, vector<1x1xf32>
    %235 = vector.broadcast %234 : vector<1x1xf32> to vector<8x1xf32>
    %236 = arith.addf %233, %235 : vector<8x1xf32>
    %cst_77 = arith.constant 5.000000e-01 : f32
    %237 = vector.broadcast %cst_77 : f32 to vector<8x1xf32>
    %238 = arith.mulf %237, %236 : vector<8x1xf32>
    %239 = math.tanh %238 : vector<8x1xf32>
    %cst_78 = arith.constant 1.000000e+00 : f32
    %240 = vector.broadcast %cst_78 : f32 to vector<8x1xf32>
    %241 = arith.addf %240, %239 : vector<8x1xf32>
    %cst_79 = arith.constant 5.000000e-01 : f32
    %242 = vector.broadcast %cst_79 : f32 to vector<8x1xf32>
    %243 = arith.mulf %242, %241 : vector<8x1xf32>
    %c0_80 = arith.constant 0 : index
    %c0_81 = arith.constant 0 : index
    %244 = vector.load %arg14[%c0_80, %c0_81] : memref<8x1xf32, #tpu.memory_space<vmem>>, vector<8x1xf32>
    tpu.vector_store %arg14[%c0_80, %c0_81], %243 {strides = array<i32>} : memref<8x1xf32, #tpu.memory_space<vmem>>, vector<8x1xf32>,
    return
  }
}

</mosaic_0001>

<llo_original>
// kernel: simple_rnn_forward.1
$region0: #{simple_rnn_forward.1}
  #allocation0 [shape = 'u32[]', space=smem, size = 0x4, offset = 0x4, fixed_abs, tag = 'smem constant byte address 0x4 - core index']
  #allocation1 [shape = 'u32[144,128]{1,0:T(1,128)}', space=vmem, size = 0x12000, scoped, tag = 'internal scratch']
  #allocation2 [shape = 'bf16[256,1024]{1,0:T(16,128)(2,1)}', space=vmem, size = 0x80000, scoped, tag = 'scratch operand']
  #allocation3 [shape = 'bf16[1024,512]{1,0:T(16,128)(2,1)}', space=vmem, size = 0x100000, scoped, tag = 'scratch operand']
  #allocation4 [shape = 'bf16[8,256]{1,0:T(8,128)(2,1)}', space=vmem, size = 0x1000, scoped, tag = 'scratch operand']
  #allocation5 [shape = 's32[2]{0}', space=sflag, size = 0x8, scoped, tag = 'scratch operand']
  #allocation6 [shape = 'f32[1,1]{1,0:T(1,128)S(1)}', space=vmem, size = 0x200, scoped, tag = 'scoped memory for simple_rnn_forward.1']
  #allocation7 [shape = 's32[]', space=sflag, size = 0x4, offset = 0, fixed_abs, tag = 'sflag constant byte address 0x0 - dummy sync flag']
  #allocation9 [shape = 's32[]', space=sflag, size = 0x4, offset = 0, fixed_abs, tag = 'sflag constant byte address 0x0 - dummy sync flag']
  %s0 = inlined_call_operand.vmem [shape: f32[64,4], index: 0, kind: input, shape index: {}]
  %s1 = inlined_call_operand.vmem [shape: f32[4,128], index: 1, kind: input, shape index: {}]
  %s2 = inlined_call_operand.vmem [shape: f32[32,128], index: 2, kind: input, shape index: {}]
  %s3 = inlined_call_operand.vmem [shape: f32[1,128], index: 3, kind: input, shape index: {}]
  %s4 = inlined_call_operand.hbm [shape: bf16[256,1024], index: 4, kind: input, shape index: {}]
  %s5 = inlined_call_operand.vmem [shape: f32[1,1024], index: 5, kind: input, shape index: {}]
  %s6 = inlined_call_operand.vmem [shape: f32[1,1024], index: 6, kind: input, shape index: {}]
  %s7 = inlined_call_operand.vmem [shape: f32[1,1024], index: 7, kind: input, shape index: {}]
  %s8 = inlined_call_operand.hbm [shape: bf16[1024,512], index: 8, kind: input, shape index: {}]
  %s9 = inlined_call_operand.vmem [shape: f32[1,512], index: 9, kind: input, shape index: {}]
  %s10 = inlined_call_operand.vmem [shape: f32[1,512], index: 10, kind: input, shape index: {}]
  %s11 = inlined_call_operand.vmem [shape: f32[1,512], index: 11, kind: input, shape index: {}]
  %s12 = inlined_call_operand.vmem [shape: f32[512,1], index: 12, kind: input, shape index: {}]
  %s13 = inlined_call_operand.<no memory space> [shape: f32[1,1], index: 13, kind: input, shape index: {}]
  %s14 = inlined_call_operand.vmem [shape: f32[8,1], index: 14, kind: output, shape index: {}]
  %s15 = sld [smem:[#allocation0]]
  $region58: #{simple_rnn_forward.1} parent=0
    _
  %s17 = ssub.s32 1, %s15
  %s18 = scalar_select 0, %s17, %s15
  %v19 = vstv %s13
  %20 = vst [vmem:[#allocation6] sm:$0x1] %v19
  $region1: #{simple_rnn_forward.1} parent=0
    #allocation8 [shape = 'u32[9]{0}', space=smem, size = 0x24, scoped, tag = 'DMA stride descriptor']
    #allocation10 [shape = 'u32[9]{0}', space=smem, size = 0x24, scoped, tag = 'DMA stride descriptor']
    // Predicated region
    $region2: #{simple_rnn_forward.1} parent=1 // pred_check
      _
    $region3: #{simple_rnn_forward.1} parent=1 // pred_check_branch
      %22 = sbr.rel (0) target = $region5
    $region4: #{simple_rnn_forward.1} parent=1 // pred_region
      _
    $region5: #{simple_rnn_forward.1} parent=1 // pred_fallthru
      _
    // Predicated region
    $region6: #{simple_rnn_forward.1} parent=1 // pred_check
      _
    $region7: #{simple_rnn_forward.1} parent=1 // pred_check_branch
      %24 = sbr.rel (0) target = $region9
    $region8: #{simple_rnn_forward.1} parent=1 // pred_region
      _
    $region9: #{simple_rnn_forward.1} parent=1 // pred_fallthru
      _
    // Predicated region
    $region10: #{simple_rnn_forward.1} parent=1 // pred_check
      _
    $region11: #{simple_rnn_forward.1} parent=1 // pred_check_branch
      %26 = sbr.rel (0) target = $region13
    $region12: #{simple_rnn_forward.1} parent=1 // pred_region
      _
    $region13: #{simple_rnn_forward.1} parent=1 // pred_fallthru
      _
    // Predicated region
    $region14: #{simple_rnn_forward.1} parent=1 // pred_check
      _
    $region15: #{simple_rnn_forward.1} parent=1 // pred_check_branch
      %28 = sbr.rel (0) target = $region17
    $region16: #{simple_rnn_forward.1} parent=1 // pred_region
      _
    $region17: #{simple_rnn_forward.1} parent=1 // pred_fallthru
      _
    // Predicated region
    $region18: #{simple_rnn_forward.1} parent=1 // pred_check
      _
    $region19: #{simple_rnn_forward.1} parent=1 // pred_check_branch
      %30 = sbr.rel (0) target = $region21
    $region20: #{simple_rnn_forward.1} parent=1 // pred_region
      _
    $region21: #{simple_rnn_forward.1} parent=1 // pred_fallthru
      _
    // Predicated region
    $region22: #{simple_rnn_forward.1} parent=1 // pred_check
      _
    $region23: #{simple_rnn_forward.1} parent=1 // pred_check_branch
      %32 = sbr.rel (0) target = $region25
    $region24: #{simple_rnn_forward.1} parent=1 // pred_region
      _
    $region25: #{simple_rnn_forward.1} parent=1 // pred_fallthru
      _
    // Predicated region
    $region26: #{simple_rnn_forward.1} parent=1 // pred_check
      _
    $region27: #{simple_rnn_forward.1} parent=1 // pred_check_branch
      %34 = sbr.rel (0) target = $region29
    $region28: #{simple_rnn_forward.1} parent=1 // pred_region
      _
    $region29: #{simple_rnn_forward.1} parent=1 // pred_fallthru
      _
    // Predicated region
    $region30: #{simple_rnn_forward.1} parent=1 // pred_check
      _
    $region31: #{simple_rnn_forward.1} parent=1 // pred_check_branch
      %36 = sbr.rel (0) target = $region33
    $region32: #{simple_rnn_forward.1} parent=1 // pred_region
      _
    $region33: #{simple_rnn_forward.1} parent=1 // pred_fallthru
      _
    // Predicated region
    $region34: #{simple_rnn_forward.1} parent=1 // pred_check
      _
    $region35: #{simple_rnn_forward.1} parent=1 // pred_check_branch
      %38 = sbr.rel (0) target = $region37
    $region36: #{simple_rnn_forward.1} parent=1 // pred_region
      _
    $region37: #{simple_rnn_forward.1} parent=1 // pred_fallthru
      _
    // Predicated region
    $region38: #{simple_rnn_forward.1} parent=1 // pred_check
      _
    $region39: #{simple_rnn_forward.1} parent=1 // pred_check_branch
      %40 = sbr.rel (0) target = $region41
    $region40: #{simple_rnn_forward.1} parent=1 // pred_region
      _
    $region41: #{simple_rnn_forward.1} parent=1 // pred_fallthru
      _
    // Predicated region
    $region42: #{simple_rnn_forward.1} parent=1 // pred_check
      _
    $region43: #{simple_rnn_forward.1} parent=1 // pred_check_branch
      %42 = sbr.rel (0) target = $region45
    $region44: #{simple_rnn_forward.1} parent=1 // pred_region
      _
    $region45: #{simple_rnn_forward.1} parent=1 // pred_fallthru
      _
    // Predicated region
    $region46: #{simple_rnn_forward.1} parent=1 // pred_check
      _
    $region47: #{simple_rnn_forward.1} parent=1 // pred_check_branch
      %44 = sbr.rel (0) target = $region49
    $region48: #{simple_rnn_forward.1} parent=1 // pred_region
      _
    $region49: #{simple_rnn_forward.1} parent=1 // pred_fallthru
      _
    %s46 = sshll.u32 1, 14
    %s47 = sxor.u32 4294967295, %s46
    %s49 = sld [smem:[#allocation0]]
    %s50 = sadd.s32 2, %s49
    %s52 = sshll.u32 7, 26
    %s53 = sxor.u32 4294967295, %s52
    %s54 = sand.u32 0, %s53
    %s55 = sshll.u32 %s50, 26
    %s56 = sor.u32 %s54, %s55
    %s57 = sshll.u32 [#allocation2], 4
    %s58 = int_to_ptr.vmem [resolvable:$true] %s57
    %61 = sst [smem:[#allocation8]] 1024
    %s62 = scalar_lea.smem [#allocation8], 1
    %63 = sst [smem:[%s62]] 1024
    %s64 = scalar_lea.smem [#allocation8], 2
    %65 = sst [smem:[%s64]] 8
    %s66 = scalar_lea.smem [#allocation8], 3
    %67 = sst [smem:[%s66]] 64
    %s68 = scalar_lea.smem [#allocation8], 4
    %69 = sst [smem:[%s68]] 128
    %s70 = scalar_lea.smem [#allocation8], 5
    %71 = sst [smem:[%s70]] 2
    %s72 = scalar_lea.smem [#allocation8], 6
    %73 = sst [smem:[%s72]] 512
    %s74 = scalar_lea.smem [#allocation8], 7
    %75 = sst [smem:[%s74]] 64
    %s76 = scalar_lea.smem [#allocation8], 8
    %77 = sst [smem:[%s76]] 4
    %79 = dma.general %s4, 16384, %s58, [#allocation5], [#allocation7], [#allocation8], %s56, 0
    %s80 = scalar_lea.sflag [#allocation5], 1
    %s82 = sshll.u32 1, 14
    %s83 = sxor.u32 4294967295, %s82
    %s85 = sadd.s32 2, %s49
    %s87 = sshll.u32 7, 26
    %s88 = sxor.u32 4294967295, %s87
    %s89 = sand.u32 0, %s88
    %s90 = sshll.u32 %s85, 26
    %s91 = sor.u32 %s89, %s90
    %s92 = sshll.u32 [#allocation3], 4
    %s93 = int_to_ptr.vmem [resolvable:$true] %s92
    %96 = sst [smem:[#allocation10]] 512
    %s97 = scalar_lea.smem [#allocation10], 1
    %98 = sst [smem:[%s97]] 512
    %s99 = scalar_lea.smem [#allocation10], 2
    %100 = sst [smem:[%s99]] 4
    %s101 = scalar_lea.smem [#allocation10], 3
    %102 = sst [smem:[%s101]] 64
    %s103 = scalar_lea.smem [#allocation10], 4
    %104 = sst [smem:[%s103]] 128
    %s105 = scalar_lea.smem [#allocation10], 5
    %106 = sst [smem:[%s105]] 2
    %s107 = scalar_lea.smem [#allocation10], 6
    %108 = sst [smem:[%s107]] 256
    %s109 = scalar_lea.smem [#allocation10], 7
    %110 = sst [smem:[%s109]] 64
    %s111 = scalar_lea.smem [#allocation10], 8
    %112 = sst [smem:[%s111]] 4
    %114 = dma.general %s8, 32768, %s93, %s80, [#allocation9], [#allocation10], %s91, 0
    %v115 = vld [vmem:[%s2] sm:$0xff]
    %v116 = vld [vmem:[%s2 + $0x8] sm:$0xff]
    %v117 = vld [vmem:[%s2 + $0x10] sm:$0xff]
    %v118 = vld [vmem:[%s2 + $0x18] sm:$0xff]
    %v119 = vld [vmem:[%s0] sm:$0xff]
    %v120 = vld [vmem:[%s0 + $0x8] sm:$0xff]
    %v121 = vld [vmem:[%s0 + $0x10] sm:$0xff]
    %v122 = vld [vmem:[%s0 + $0x18] sm:$0xff]
    %v123 = vld [vmem:[%s0 + $0x20] sm:$0xff]
    %v124 = vld [vmem:[%s0 + $0x28] sm:$0xff]
    %v125 = vld [vmem:[%s0 + $0x30] sm:$0xff]
    %v126 = vld [vmem:[%s0 + $0x38] sm:$0xff]
    %v127 = vld [vmem:[%s1] sm:$0xf]
    %v128 = vld [vmem:[%s3] sm:$0x1]
    %v130 = vlaneseq
    %v131 = vshrl.u32 %v130, 7
    %v132 = vsub.s32 0, %v131
    %v133 = vrot.slane %v128, %v132
    %vm135 = vcmask 31744
    %v137 = vsel %vm135, %v119, 0
    %v140 = vsel %vm135, %v120, 0
    %v143 = vsel %vm135, %v121, 0
    %v146 = vsel %vm135, %v122, 0
    %v149 = vsel %vm135, %v123, 0
    %v152 = vsel %vm135, %v124, 0
    %v155 = vsel %vm135, %v125, 0
    %v158 = vsel %vm135, %v126, 0
    %vm160 = vcmask 1043456
    %v162 = vsel %vm160, %v127, 0
    %164 = vmatprep.subr.mxu0 0.0
    %165 = vmatpush1.msra.mxu0 %v162
    %166 = vmatprep.subr.mxu0 0.0
    %167 = vmatpush1.msra.mxu0 0.0
    %168 = vmatprep.subr.mxu0 0.0
    %169 = vmatpush1.msra.mxu0 0.0
    %170 = vmatprep.subr.mxu0 0.0
    %171 = vmatpush1.msra.mxu0 0.0
    %172 = vmatprep.subr.mxu0 0.0
    %173 = vmatpush1.msra.mxu0 0.0
    %174 = vmatprep.subr.mxu0 0.0
    %175 = vmatpush1.msra.mxu0 0.0
    %176 = vmatprep.subr.mxu0 0.0
    %177 = vmatpush1.msra.mxu0 0.0
    %178 = vmatprep.subr.mxu0 0.0
    %179 = vmatpush1.msra.mxu0 0.0
    %180 = vmatprep.subr.mxu0 0.0
    %181 = vmatpush1.msra.mxu0 0.0
    %182 = vmatprep.subr.mxu0 0.0
    %183 = vmatpush1.msra.mxu0 0.0
    %184 = vmatprep.subr.mxu0 0.0
    %185 = vmatpush1.msra.mxu0 0.0
    %186 = vmatprep.subr.mxu0 0.0
    %187 = vmatpush1.msra.mxu0 0.0
    %188 = vmatprep.subr.mxu0 0.0
    %189 = vmatpush1.msra.mxu0 0.0
    %190 = vmatprep.subr.mxu0 0.0
    %191 = vmatpush1.msra.mxu0 0.0
    %192 = vmatprep.subr.mxu0 0.0
    %193 = vmatpush1.msra.mxu0 0.0
    %194 = vmatprep.subr.mxu0 0.0
    %195 = vmatpush1.msra.mxu0 0.0
    %196 = vmatprep.subr.mxu0 0.0
    %197 = vmatpush1.msra.mxu0 0.0
    %198 = vmatprep.subr.mxu0 0.0
    %199 = vmatpush1.msra.mxu0 0.0
    %200 = vmatprep.subr.mxu0 0.0
    %201 = vmatpush1.msra.mxu0 0.0
    %202 = vmatprep.subr.mxu0 0.0
    %203 = vmatpush1.msra.mxu0 0.0
    %204 = vmatprep.subr.mxu0 0.0
    %205 = vmatpush1.msra.mxu0 0.0
    %206 = vmatprep.subr.mxu0 0.0
    %207 = vmatpush1.msra.mxu0 0.0
    %208 = vmatprep.subr.mxu0 0.0
    %209 = vmatpush1.msra.mxu0 0.0
    %210 = vmatprep.subr.mxu0 0.0
    %211 = vmatpush1.msra.mxu0 0.0
    %212 = vmatprep.subr.mxu0 0.0
    %213 = vmatpush1.msra.mxu0 0.0
    %214 = vmatprep.subr.mxu0 0.0
    %215 = vmatpush1.msra.mxu0 0.0
    %216 = vmatprep.subr.mxu0 0.0
    %217 = vmatpush1.msra.mxu0 0.0
    %218 = vmatprep.subr.mxu0 0.0
    %219 = vmatpush1.msra.mxu0 0.0
    %220 = vmatprep.subr.mxu0 0.0
    %221 = vmatpush1.msra.mxu0 0.0
    %222 = vmatprep.subr.mxu0 0.0
    %223 = vmatpush1.msra.mxu0 0.0
    %224 = vmatprep.subr.mxu0 0.0
    %225 = vmatpush1.msra.mxu0 0.0
    %226 = vmatprep.subr.mxu0 0.0
    %227 = vmatpush1.msra.mxu0 0.0
    %228 = vmatprep.mubr.f32.mxu0 0.0
    %229 = vmatmul.mubr.f32.gmra.mrb[0].mxu0 %v137
    %v230 = vpop.f32.mrb[0].mxu0
    %v231 = vadd.f32 %v133, %v230
    %v232 = vpop.f32.mrb[0].mxu0
    %233 = vmatprep.mubr.f32.mxu0 0.0
    %234 = vmatmul.mubr.f32.gmra.mrb[0].mxu0 %v140
    %v235 = vpop.f32.mrb[0].mxu0
    %v236 = vadd.f32 %v133, %v235
    %v237 = vpop.f32.mrb[0].mxu0
    %238 = vmatprep.mubr.f32.mxu0 0.0
    %239 = vmatmul.mubr.f32.gmra.mrb[0].mxu0 %v143
    %v240 = vpop.f32.mrb[0].mxu0
    %v241 = vadd.f32 %v133, %v240
    %v242 = vpop.f32.mrb[0].mxu0
    %243 = vmatprep.mubr.f32.mxu0 0.0
    %244 = vmatmul.mubr.f32.gmra.mrb[0].mxu0 %v146
    %v245 = vpop.f32.mrb[0].mxu0
    %v246 = vadd.f32 %v133, %v245
    %v247 = vpop.f32.mrb[0].mxu0
    %248 = vmatprep.mubr.f32.mxu0 0.0
    %249 = vmatmul.mubr.f32.gmra.mrb[0].mxu0 %v149
    %v250 = vpop.f32.mrb[0].mxu0
    %v251 = vadd.f32 %v133, %v250
    %v252 = vpop.f32.mrb[0].mxu0
    %253 = vmatprep.mubr.f32.mxu0 0.0
    %254 = vmatmul.mubr.f32.gmra.mrb[0].mxu0 %v152
    %v255 = vpop.f32.mrb[0].mxu0
    %v256 = vadd.f32 %v133, %v255
    %v257 = vpop.f32.mrb[0].mxu0
    %258 = vmatprep.mubr.f32.mxu0 0.0
    %259 = vmatmul.mubr.f32.gmra.mrb[0].mxu0 %v155
    %v260 = vpop.f32.mrb[0].mxu0
    %v261 = vadd.f32 %v133, %v260
    %v262 = vpop.f32.mrb[0].mxu0
    %263 = vmatprep.mubr.f32.mxu0 0.0
    %264 = vmatmul.mubr.f32.gmra.mrb[0].mxu0 %v158
    %v265 = vpop.f32.mrb[0].mxu0
    %v266 = vadd.f32 %v133, %v265
    %v267 = vpop.f32.mrb[0].mxu0
    %268 = vdwg.mxu0
    %v269 = vlaneseq
    %v270 = vand.u32 %v269, 127
    %vm271 = vcmp.ge.s32.totalorder %v270, 64
    %vm272 = vcmp.lt.s32.totalorder %v270, 96
    %vm273 = vmand %vm271, %vm272
    %v274 = vmul.f32 %v231, 0.5
    %v275 = vtanh.pop %v274
    %v276 = vtanh.pop %v231
    %v277 = vmul.f32 %v275, 0.5
    %v278 = vadd.f32 %v277, 0.5
    %v279 = vsel %vm273, %v276, %v278
    %v280 = vmul.f32 %v279, 0.0
    %282 = vrot.lane.b32.xlu0 %v279, 64
    %v283 = vpop.permute.xlu0 %282
    %v285 = vmul.f32 %v279, %v283
    %287 = vrot.lane.b32.xlu0 %v285, 32
    %v288 = vpop.permute.xlu0 %287
    %v290 = vadd.f32 %v280, %v288
    %v291 = vtanh.pop %v290
    %293 = vrot.lane.b32.xlu0 %v291, 64
    %v294 = vpop.permute.xlu0 %293
    %v296 = vmul.f32 %v279, %v294
    %v297 = vpack.c.bf16 %v296, %v296
    %v299 = vunpack.c.l.b16 %v297
    %v300 = vpack.c.b16 %v299, %v299
    %301 = vrot.lane.b32.xlu0 %v300, 32
    %v302 = vpop.permute.xlu0 %301
    %vm304 = vcmask 257024
    %305 = vst.msk [vmem:[#allocation4] sm:$0xf] %vm304, %v302
    %307 = vrot.lane.b32.xlu0 %v296, 32
    %v308 = vpop.permute.xlu0 %307
    %vm309 = vcmask 261120
    %v310 = vsel %vm309, %v308, 0
    %312 = vmatprep.subr.mxu0 0.0
    %313 = vmatpush1.msra.mxu0 %v115
    %314 = vmatprep.subr.mxu0 0.0
    %315 = vmatpush1.msra.mxu0 %v116
    %316 = vmatprep.subr.mxu0 0.0
    %317 = vmatpush1.msra.mxu0 %v117
    %318 = vmatprep.subr.mxu0 0.0
    %319 = vmatpush1.msra.mxu0 %v118
    %320 = vmatprep.subr.mxu0 0.0
    %321 = vmatpush1.msra.mxu0 0.0
    %322 = vmatprep.subr.mxu0 0.0
    %323 = vmatpush1.msra.mxu0 0.0
    %324 = vmatprep.subr.mxu0 0.0
    %325 = vmatpush1.msra.mxu0 0.0
    %326 = vmatprep.subr.mxu0 0.0
    %327 = vmatpush1.msra.mxu0 0.0
    %328 = vmatprep.subr.mxu0 0.0
    %329 = vmatpush1.msra.mxu0 0.0
    %330 = vmatprep.subr.mxu0 0.0
    %331 = vmatpush1.msra.mxu0 0.0
    %332 = vmatprep.subr.mxu0 0.0
    %333 = vmatpush1.msra.mxu0 0.0
    %334 = vmatprep.subr.mxu0 0.0
    %335 = vmatpush1.msra.mxu0 0.0
    %336 = vmatprep.subr.mxu0 0.0
    %337 = vmatpush1.msra.mxu0 0.0
    %338 = vmatprep.subr.mxu0 0.0
    %339 = vmatpush1.msra.mxu0 0.0
    %340 = vmatprep.subr.mxu0 0.0
    %341 = vmatpush1.msra.mxu0 0.0
    %342 = vmatprep.subr.mxu0 0.0
    %343 = vmatpush1.msra.mxu0 0.0
    %344 = vmatprep.subr.mxu0 0.0
    %345 = vmatpush1.msra.mxu0 0.0
    %346 = vmatprep.subr.mxu0 0.0
    %347 = vmatpush1.msra.mxu0 0.0
    %348 = vmatprep.subr.mxu0 0.0
    %349 = vmatpush1.msra.mxu0 0.0
    %350 = vmatprep.subr.mxu0 0.0
    %351 = vmatpush1.msra.mxu0 0.0
    %352 = vmatprep.subr.mxu0 0.0
    %353 = vmatpush1.msra.mxu0 0.0
    %354 = vmatprep.subr.mxu0 0.0
    %355 = vmatpush1.msra.mxu0 0.0
    %356 = vmatprep.subr.mxu0 0.0
    %357 = vmatpush1.msra.mxu0 0.0
    %358 = vmatprep.subr.mxu0 0.0
    %359 = vmatpush1.msra.mxu0 0.0
    %360 = vmatprep.subr.mxu0 0.0
    %361 = vmatpush1.msra.mxu0 0.0
    %362 = vmatprep.subr.mxu0 0.0
    %363 = vmatpush1.msra.mxu0 0.0
    %364 = vmatprep.subr.mxu0 0.0
    %365 = vmatpush1.msra.mxu0 0.0
    %366 = vmatprep.subr.mxu0 0.0
    %367 = vmatpush1.msra.mxu0 0.0
    %368 = vmatprep.subr.mxu0 0.0
    %369 = vmatpush1.msra.mxu0 0.0
    %370 = vmatprep.subr.mxu0 0.0
    %371 = vmatpush1.msra.mxu0 0.0
    %372 = vmatprep.subr.mxu0 0.0
    %373 = vmatpush1.msra.mxu0 0.0
    %374 = vmatprep.subr.mxu0 0.0
    %375 = vmatpush1.msra.mxu0 0.0
    %376 = vmatprep.mubr.f32.mxu0 0.0
    %377 = vmatmul.mubr.f32.gmra.mrb[0].mxu0 %v310
    %v378 = vpop.f32.mrb[0].mxu0
    %v379 = vadd.f32 0.0, %v378
    %v380 = vpop.f32.mrb[0].mxu0
    %381 = vdwg.mxu0
    %v382 = vadd.f32 %v236, %v379
    %v383 = vmul.f32 %v382, 0.5
    %v384 = vtanh.pop %v383
    %v385 = vtanh.pop %v382
    %v386 = vmul.f32 %v384, 0.5
    %v387 = vadd.f32 %v386, 0.5
    %v388 = vsel %vm273, %v385, %v387
    %v389 = vmul.f32 %v388, %v290
    %391 = vrot.lane.b32.xlu0 %v388, 64
    %v392 = vpop.permute.xlu0 %391
    %v394 = vmul.f32 %v388, %v392
    %396 = vrot.lane.b32.xlu0 %v394, 32
    %v397 = vpop.permute.xlu0 %396
    %v399 = vadd.f32 %v389, %v397
    %v400 = vtanh.pop %v399
    %402 = vrot.lane.b32.xlu0 %v400, 64
    %v403 = vpop.permute.xlu0 %402
    %v405 = vmul.f32 %v388, %v403
    %v406 = vpack.c.bf16 %v405, %v405
    %v408 = vunpack.c.l.b16 %v406
    %v409 = vpack.c.b16 %v408, %v408
    %410 = vrot.lane.b32.xlu0 %v409, 64
    %v411 = vpop.permute.xlu0 %410
    %vm413 = vcmask 519424
    %414 = vst.msk [vmem:[#allocation4] sm:$0xf] %vm413, %v411
    %416 = vrot.lane.b32.xlu0 %v405, 32
    %v417 = vpop.permute.xlu0 %416
    %v418 = vsel %vm309, %v417, 0
    %420 = vmatprep.subr.mxu0 0.0
    %421 = vmatpush1.msra.mxu0 %v115
    %422 = vmatprep.subr.mxu0 0.0
    %423 = vmatpush1.msra.mxu0 %v116
    %424 = vmatprep.subr.mxu0 0.0
    %425 = vmatpush1.msra.mxu0 %v117
    %426 = vmatprep.subr.mxu0 0.0
    %427 = vmatpush1.msra.mxu0 %v118
    %428 = vmatprep.subr.mxu0 0.0
    %429 = vmatpush1.msra.mxu0 0.0
    %430 = vmatprep.subr.mxu0 0.0
    %431 = vmatpush1.msra.mxu0 0.0
    %432 = vmatprep.subr.mxu0 0.0
    %433 = vmatpush1.msra.mxu0 0.0
    %434 = vmatprep.subr.mxu0 0.0
    %435 = vmatpush1.msra.mxu0 0.0
    %436 = vmatprep.subr.mxu0 0.0
    %437 = vmatpush1.msra.mxu0 0.0
    %438 = vmatprep.subr.mxu0 0.0
    %439 = vmatpush1.msra.mxu0 0.0
    %440 = vmatprep.subr.mxu0 0.0
    %441 = vmatpush1.msra.mxu0 0.0
    %442 = vmatprep.subr.mxu0 0.0
    %443 = vmatpush1.msra.mxu0 0.0
    %444 = vmatprep.subr.mxu0 0.0
    %445 = vmatpush1.msra.mxu0 0.0
    %446 = vmatprep.subr.mxu0 0.0
    %447 = vmatpush1.msra.mxu0 0.0
    %448 = vmatprep.subr.mxu0 0.0
    %449 = vmatpush1.msra.mxu0 0.0
    %450 = vmatprep.subr.mxu0 0.0
    %451 = vmatpush1.msra.mxu0 0.0
    %452 = vmatprep.subr.mxu0 0.0
    %453 = vmatpush1.msra.mxu0 0.0
    %454 = vmatprep.subr.mxu0 0.0
    %455 = vmatpush1.msra.mxu0 0.0
    %456 = vmatprep.subr.mxu0 0.0
    %457 = vmatpush1.msra.mxu0 0.0
    %458 = vmatprep.subr.mxu0 0.0
    %459 = vmatpush1.msra.mxu0 0.0
    %460 = vmatprep.subr.mxu0 0.0
    %461 = vmatpush1.msra.mxu0 0.0
    %462 = vmatprep.subr.mxu0 0.0
    %463 = vmatpush1.msra.mxu0 0.0
    %464 = vmatprep.subr.mxu0 0.0
    %465 = vmatpush1.msra.mxu0 0.0
    %466 = vmatprep.subr.mxu0 0.0
    %467 = vmatpush1.msra.mxu0 0.0
    %468 = vmatprep.subr.mxu0 0.0
    %469 = vmatpush1.msra.mxu0 0.0
    %470 = vmatprep.subr.mxu0 0.0
    %471 = vmatpush1.msra.mxu0 0.0
    %472 = vmatprep.subr.mxu0 0.0
    %473 = vmatpush1.msra.mxu0 0.0
    %474 = vmatprep.subr.mxu0 0.0
    %475 = vmatpush1.msra.mxu0 0.0
    %476 = vmatprep.subr.mxu0 0.0
    %477 = vmatpush1.msra.mxu0 0.0
    %478 = vmatprep.subr.mxu0 0.0
    %479 = vmatpush1.msra.mxu0 0.0
    %480 = vmatprep.subr.mxu0 0.0
    %481 = vmatpush1.msra.mxu0 0.0
    %482 = vmatprep.subr.mxu0 0.0
    %483 = vmatpush1.msra.mxu0 0.0
    %484 = vmatprep.mubr.f32.mxu0 0.0
    %485 = vmatmul.mubr.f32.gmra.mrb[0].mxu0 %v418
    %v486 = vpop.f32.mrb[0].mxu0
    %v487 = vadd.f32 0.0, %v486
    %v488 = vpop.f32.mrb[0].mxu0
    %489 = vdwg.mxu0
    %v490 = vadd.f32 %v241, %v487
    %v491 = vmul.f32 %v490, 0.5
    %v492 = vtanh.pop %v491
    %v493 = vtanh.pop %v490
    %v494 = vmul.f32 %v492, 0.5
    %v495 = vadd.f32 %v494, 0.5
    %v496 = vsel %vm273, %v493, %v495
    %v497 = vmul.f32 %v496, %v399
    %499 = vrot.lane.b32.xlu0 %v496, 64
    %v500 = vpop.permute.xlu0 %499
    %v502 = vmul.f32 %v496, %v500
    %504 = vrot.lane.b32.xlu0 %v502, 32
    %v505 = vpop.permute.xlu0 %504
    %v507 = vadd.f32 %v497, %v505
    %v508 = vtanh.pop %v507
    %510 = vrot.lane.b32.xlu0 %v508, 64
    %v511 = vpop.permute.xlu0 %510
    %v513 = vmul.f32 %v496, %v511
    %v514 = vpack.c.bf16 %v513, %v513
    %v516 = vunpack.c.l.b16 %v514
    %v517 = vpack.c.b16 %v516, %v516
    %518 = vrot.lane.b32.xlu0 %v517, 96
    %v519 = vpop.permute.xlu0 %518
    %vm521 = vcmask 781824
    %522 = vst.msk [vmem:[#allocation4] sm:$0xf] %vm521, %v519
    %524 = vrot.lane.b32.xlu0 %v513, 32
    %v525 = vpop.permute.xlu0 %524
    %v526 = vsel %vm309, %v525, 0
    %528 = vmatprep.subr.mxu0 0.0
    %529 = vmatpush1.msra.mxu0 %v115
    %530 = vmatprep.subr.mxu0 0.0
    %531 = vmatpush1.msra.mxu0 %v116
    %532 = vmatprep.subr.mxu0 0.0
    %533 = vmatpush1.msra.mxu0 %v117
    %534 = vmatprep.subr.mxu0 0.0
    %535 = vmatpush1.msra.mxu0 %v118
    %536 = vmatprep.subr.mxu0 0.0
    %537 = vmatpush1.msra.mxu0 0.0
    %538 = vmatprep.subr.mxu0 0.0
    %539 = vmatpush1.msra.mxu0 0.0
    %540 = vmatprep.subr.mxu0 0.0
    %541 = vmatpush1.msra.mxu0 0.0
    %542 = vmatprep.subr.mxu0 0.0
    %543 = vmatpush1.msra.mxu0 0.0
    %544 = vmatprep.subr.mxu0 0.0
    %545 = vmatpush1.msra.mxu0 0.0
    %546 = vmatprep.subr.mxu0 0.0
    %547 = vmatpush1.msra.mxu0 0.0
    %548 = vmatprep.subr.mxu0 0.0
    %549 = vmatpush1.msra.mxu0 0.0
    %550 = vmatprep.subr.mxu0 0.0
    %551 = vmatpush1.msra.mxu0 0.0
    %552 = vmatprep.subr.mxu0 0.0
    %553 = vmatpush1.msra.mxu0 0.0
    %554 = vmatprep.subr.mxu0 0.0
    %555 = vmatpush1.msra.mxu0 0.0
    %556 = vmatprep.subr.mxu0 0.0
    %557 = vmatpush1.msra.mxu0 0.0
    %558 = vmatprep.subr.mxu0 0.0
    %559 = vmatpush1.msra.mxu0 0.0
    %560 = vmatprep.subr.mxu0 0.0
    %561 = vmatpush1.msra.mxu0 0.0
    %562 = vmatprep.subr.mxu0 0.0
    %563 = vmatpush1.msra.mxu0 0.0
    %564 = vmatprep.subr.mxu0 0.0
    %565 = vmatpush1.msra.mxu0 0.0
    %566 = vmatprep.subr.mxu0 0.0
    %567 = vmatpush1.msra.mxu0 0.0
    %568 = vmatprep.subr.mxu0 0.0
    %569 = vmatpush1.msra.mxu0 0.0
    %570 = vmatprep.subr.mxu0 0.0
    %571 = vmatpush1.msra.mxu0 0.0
    %572 = vmatprep.subr.mxu0 0.0
    %573 = vmatpush1.msra.mxu0 0.0
    %574 = vmatprep.subr.mxu0 0.0
    %575 = vmatpush1.msra.mxu0 0.0
    %576 = vmatprep.subr.mxu0 0.0
    %577 = vmatpush1.msra.mxu0 0.0
    %578 = vmatprep.subr.mxu0 0.0
    %579 = vmatpush1.msra.mxu0 0.0
    %580 = vmatprep.subr.mxu0 0.0
    %581 = vmatpush1.msra.mxu0 0.0
    %582 = vmatprep.subr.mxu0 0.0
    %583 = vmatpush1.msra.mxu0 0.0
    %584 = vmatprep.subr.mxu0 0.0
    %585 = vmatpush1.msra.mxu0 0.0
    %586 = vmatprep.subr.mxu0 0.0
    %587 = vmatpush1.msra.mxu0 0.0
    %588 = vmatprep.subr.mxu0 0.0
    %589 = vmatpush1.msra.mxu0 0.0
    %590 = vmatprep.subr.mxu0 0.0
    %591 = vmatpush1.msra.mxu0 0.0
    %592 = vmatprep.mubr.f32.mxu0 0.0
    %593 = vmatmul.mubr.f32.gmra.mrb[0].mxu0 %v526
    %v594 = vpop.f32.mrb[0].mxu0
    %v595 = vadd.f32 0.0, %v594
    %v596 = vpop.f32.mrb[0].mxu0
    %597 = vdwg.mxu0
    %v598 = vadd.f32 %v246, %v595
    %v599 = vmul.f32 %v598, 0.5
    %v600 = vtanh.pop %v599
    %v601 = vtanh.pop %v598
    %v602 = vmul.f32 %v600, 0.5
    %v603 = vadd.f32 %v602, 0.5
    %v604 = vsel %vm273, %v601, %v603
    %v605 = vmul.f32 %v604, %v507
    %607 = vrot.lane.b32.xlu0 %v604, 64
    %v608 = vpop.permute.xlu0 %607
    %v610 = vmul.f32 %v604, %v608
    %612 = vrot.lane.b32.xlu0 %v610, 32
    %v613 = vpop.permute.xlu0 %612
    %v615 = vadd.f32 %v605, %v613
    %v616 = vtanh.pop %v615
    %618 = vrot.lane.b32.xlu0 %v616, 64
    %v619 = vpop.permute.xlu0 %618
    %v621 = vmul.f32 %v604, %v619
    %v622 = vpack.c.bf16 %v621, %v621
    %vm623 = vcmask 1044224
    %624 = vst.msk [vmem:[#allocation4] sm:$0xf] %vm623, %v622
    %626 = vrot.lane.b32.xlu0 %v621, 32
    %v627 = vpop.permute.xlu0 %626
    %v628 = vsel %vm309, %v627, 0
    %630 = vmatprep.subr.mxu0 0.0
    %631 = vmatpush1.msra.mxu0 %v115
    %632 = vmatprep.subr.mxu0 0.0
    %633 = vmatpush1.msra.mxu0 %v116
    %634 = vmatprep.subr.mxu0 0.0
    %635 = vmatpush1.msra.mxu0 %v117
    %636 = vmatprep.subr.mxu0 0.0
    %637 = vmatpush1.msra.mxu0 %v118
    %638 = vmatprep.subr.mxu0 0.0
    %639 = vmatpush1.msra.mxu0 0.0
    %640 = vmatprep.subr.mxu0 0.0
    %641 = vmatpush1.msra.mxu0 0.0
    %642 = vmatprep.subr.mxu0 0.0
    %643 = vmatpush1.msra.mxu0 0.0
    %644 = vmatprep.subr.mxu0 0.0
    %645 = vmatpush1.msra.mxu0 0.0
    %646 = vmatprep.subr.mxu0 0.0
    %647 = vmatpush1.msra.mxu0 0.0
    %648 = vmatprep.subr.mxu0 0.0
    %649 = vmatpush1.msra.mxu0 0.0
    %650 = vmatprep.subr.mxu0 0.0
    %651 = vmatpush1.msra.mxu0 0.0
    %652 = vmatprep.subr.mxu0 0.0
    %653 = vmatpush1.msra.mxu0 0.0
    %654 = vmatprep.subr.mxu0 0.0
    %655 = vmatpush1.msra.mxu0 0.0
    %656 = vmatprep.subr.mxu0 0.0
    %657 = vmatpush1.msra.mxu0 0.0
    %658 = vmatprep.subr.mxu0 0.0
    %659 = vmatpush1.msra.mxu0 0.0
    %660 = vmatprep.subr.mxu0 0.0
    %661 = vmatpush1.msra.mxu0 0.0
    %662 = vmatprep.subr.mxu0 0.0
    %663 = vmatpush1.msra.mxu0 0.0
    %664 = vmatprep.subr.mxu0 0.0
    %665 = vmatpush1.msra.mxu0 0.0
    %666 = vmatprep.subr.mxu0 0.0
    %667 = vmatpush1.msra.mxu0 0.0
    %668 = vmatprep.subr.mxu0 0.0
    %669 = vmatpush1.msra.mxu0 0.0
    %670 = vmatprep.subr.mxu0 0.0
    %671 = vmatpush1.msra.mxu0 0.0
    %672 = vmatprep.subr.mxu0 0.0
    %673 = vmatpush1.msra.mxu0 0.0
    %674 = vmatprep.subr.mxu0 0.0
    %675 = vmatpush1.msra.mxu0 0.0
    %676 = vmatprep.subr.mxu0 0.0
    %677 = vmatpush1.msra.mxu0 0.0
    %678 = vmatprep.subr.mxu0 0.0
    %679 = vmatpush1.msra.mxu0 0.0
    %680 = vmatprep.subr.mxu0 0.0
    %681 = vmatpush1.msra.mxu0 0.0
    %682 = vmatprep.subr.mxu0 0.0
    %683 = vmatpush1.msra.mxu0 0.0
    %684 = vmatprep.subr.mxu0 0.0
    %685 = vmatpush1.msra.mxu0 0.0
    %686 = vmatprep.subr.mxu0 0.0
    %687 = vmatpush1.msra.mxu0 0.0
    %688 = vmatprep.subr.mxu0 0.0
    %689 = vmatpush1.msra.mxu0 0.0
    %690 = vmatprep.subr.mxu0 0.0
    %691 = vmatpush1.msra.mxu0 0.0
    %692 = vmatprep.subr.mxu0 0.0
    %693 = vmatpush1.msra.mxu0 0.0
    %694 = vmatprep.mubr.f32.mxu0 0.0
    %695 = vmatmul.mubr.f32.gmra.mrb[0].mxu0 %v628
    %v696 = vpop.f32.mrb[0].mxu0
    %v697 = vadd.f32 0.0, %v696
    %v698 = vpop.f32.mrb[0].mxu0
    %699 = vdwg.mxu0
    %v700 = vadd.f32 %v251, %v697
    %v701 = vmul.f32 %v700, 0.5
    %v702 = vtanh.pop %v701
    %v703 = vtanh.pop %v700
    %v704 = vmul.f32 %v702, 0.5
    %v705 = vadd.f32 %v704, 0.5
    %v706 = vsel %vm273, %v703, %v705
    %v707 = vmul.f32 %v706, %v615
    %709 = vrot.lane.b32.xlu0 %v706, 64
    %v710 = vpop.permute.xlu0 %709
    %v712 = vmul.f32 %v706, %v710
    %714 = vrot.lane.b32.xlu0 %v712, 32
    %v715 = vpop.permute.xlu0 %714
    %v717 = vadd.f32 %v707, %v715
    %v718 = vtanh.pop %v717
    %720 = vrot.lane.b32.xlu0 %v718, 64
    %v721 = vpop.permute.xlu0 %720
    %v723 = vmul.f32 %v706, %v721
    %v724 = vpack.c.bf16 %v723, %v723
    %v726 = vunpack.c.l.b16 %v724
    %v727 = vpack.c.b16 %v726, %v726
    %728 = vrot.lane.b32.xlu0 %v727, 32
    %v729 = vpop.permute.xlu0 %728
    %731 = vst.msk [vmem:[#allocation4 + $0x4] sm:$0xf] %vm304, %v729
    %733 = vrot.lane.b32.xlu0 %v723, 32
    %v734 = vpop.permute.xlu0 %733
    %v735 = vsel %vm309, %v734, 0
    %737 = vmatprep.subr.mxu0 0.0
    %738 = vmatpush1.msra.mxu0 %v115
    %739 = vmatprep.subr.mxu0 0.0
    %740 = vmatpush1.msra.mxu0 %v116
    %741 = vmatprep.subr.mxu0 0.0
    %742 = vmatpush1.msra.mxu0 %v117
    %743 = vmatprep.subr.mxu0 0.0
    %744 = vmatpush1.msra.mxu0 %v118
    %745 = vmatprep.subr.mxu0 0.0
    %746 = vmatpush1.msra.mxu0 0.0
    %747 = vmatprep.subr.mxu0 0.0
    %748 = vmatpush1.msra.mxu0 0.0
    %749 = vmatprep.subr.mxu0 0.0
    %750 = vmatpush1.msra.mxu0 0.0
    %751 = vmatprep.subr.mxu0 0.0
    %752 = vmatpush1.msra.mxu0 0.0
    %753 = vmatprep.subr.mxu0 0.0
    %754 = vmatpush1.msra.mxu0 0.0
    %755 = vmatprep.subr.mxu0 0.0
    %756 = vmatpush1.msra.mxu0 0.0
    %757 = vmatprep.subr.mxu0 0.0
    %758 = vmatpush1.msra.mxu0 0.0
    %759 = vmatprep.subr.mxu0 0.0
    %760 = vmatpush1.msra.mxu0 0.0
    %761 = vmatprep.subr.mxu0 0.0
    %762 = vmatpush1.msra.mxu0 0.0
    %763 = vmatprep.subr.mxu0 0.0
    %764 = vmatpush1.msra.mxu0 0.0
    %765 = vmatprep.subr.mxu0 0.0
    %766 = vmatpush1.msra.mxu0 0.0
    %767 = vmatprep.subr.mxu0 0.0
    %768 = vmatpush1.msra.mxu0 0.0
    %769 = vmatprep.subr.mxu0 0.0
    %770 = vmatpush1.msra.mxu0 0.0
    %771 = vmatprep.subr.mxu0 0.0
    %772 = vmatpush1.msra.mxu0 0.0
    %773 = vmatprep.subr.mxu0 0.0
    %774 = vmatpush1.msra.mxu0 0.0
    %775 = vmatprep.subr.mxu0 0.0
    %776 = vmatpush1.msra.mxu0 0.0
    %777 = vmatprep.subr.mxu0 0.0
    %778 = vmatpush1.msra.mxu0 0.0
    %779 = vmatprep.subr.mxu0 0.0
    %780 = vmatpush1.msra.mxu0 0.0
    %781 = vmatprep.subr.mxu0 0.0
    %782 = vmatpush1.msra.mxu0 0.0
    %783 = vmatprep.subr.mxu0 0.0
    %784 = vmatpush1.msra.mxu0 0.0
    %785 = vmatprep.subr.mxu0 0.0
    %786 = vmatpush1.msra.mxu0 0.0
    %787 = vmatprep.subr.mxu0 0.0
    %788 = vmatpush1.msra.mxu0 0.0
    %789 = vmatprep.subr.mxu0 0.0
    %790 = vmatpush1.msra.mxu0 0.0
    %791 = vmatprep.subr.mxu0 0.0
    %792 = vmatpush1.msra.mxu0 0.0
    %793 = vmatprep.subr.mxu0 0.0
    %794 = vmatpush1.msra.mxu0 0.0
    %795 = vmatprep.subr.mxu0 0.0
    %796 = vmatpush1.msra.mxu0 0.0
    %797 = vmatprep.subr.mxu0 0.0
    %798 = vmatpush1.msra.mxu0 0.0
    %799 = vmatprep.subr.mxu0 0.0
    %800 = vmatpush1.msra.mxu0 0.0
    %801 = vmatprep.mubr.f32.mxu0 0.0
    %802 = vmatmul.mubr.f32.gmra.mrb[0].mxu0 %v735
    %v803 = vpop.f32.mrb[0].mxu0
    %v804 = vadd.f32 0.0, %v803
    %v805 = vpop.f32.mrb[0].mxu0
    %806 = vdwg.mxu0
    %v807 = vadd.f32 %v256, %v804
    %v808 = vmul.f32 %v807, 0.5
    %v809 = vtanh.pop %v808
    %v810 = vtanh.pop %v807
    %v811 = vmul.f32 %v809, 0.5
    %v812 = vadd.f32 %v811, 0.5
    %v813 = vsel %vm273, %v810, %v812
    %v814 = vmul.f32 %v813, %v717
    %816 = vrot.lane.b32.xlu0 %v813, 64
    %v817 = vpop.permute.xlu0 %816
    %v819 = vmul.f32 %v813, %v817
    %821 = vrot.lane.b32.xlu0 %v819, 32
    %v822 = vpop.permute.xlu0 %821
    %v824 = vadd.f32 %v814, %v822
    %v825 = vtanh.pop %v824
    %827 = vrot.lane.b32.xlu0 %v825, 64
    %v828 = vpop.permute.xlu0 %827
    %v830 = vmul.f32 %v813, %v828
    %v831 = vpack.c.bf16 %v830, %v830
    %v833 = vunpack.c.l.b16 %v831
    %v834 = vpack.c.b16 %v833, %v833
    %835 = vrot.lane.b32.xlu0 %v834, 64
    %v836 = vpop.permute.xlu0 %835
    %838 = vst.msk [vmem:[#allocation4 + $0x4] sm:$0xf] %vm413, %v836
    %840 = vrot.lane.b32.xlu0 %v830, 32
    %v841 = vpop.permute.xlu0 %840
    %v842 = vsel %vm309, %v841, 0
    %844 = vmatprep.subr.mxu0 0.0
    %845 = vmatpush1.msra.mxu0 %v115
    %846 = vmatprep.subr.mxu0 0.0
    %847 = vmatpush1.msra.mxu0 %v116
    %848 = vmatprep.subr.mxu0 0.0
    %849 = vmatpush1.msra.mxu0 %v117
    %850 = vmatprep.subr.mxu0 0.0
    %851 = vmatpush1.msra.mxu0 %v118
    %852 = vmatprep.subr.mxu0 0.0
    %853 = vmatpush1.msra.mxu0 0.0
    %854 = vmatprep.subr.mxu0 0.0
    %855 = vmatpush1.msra.mxu0 0.0
    %856 = vmatprep.subr.mxu0 0.0
    %857 = vmatpush1.msra.mxu0 0.0
    %858 = vmatprep.subr.mxu0 0.0
    %859 = vmatpush1.msra.mxu0 0.0
    %860 = vmatprep.subr.mxu0 0.0
    %861 = vmatpush1.msra.mxu0 0.0
    %862 = vmatprep.subr.mxu0 0.0
    %863 = vmatpush1.msra.mxu0 0.0
    %864 = vmatprep.subr.mxu0 0.0
    %865 = vmatpush1.msra.mxu0 0.0
    %866 = vmatprep.subr.mxu0 0.0
    %867 = vmatpush1.msra.mxu0 0.0
    %868 = vmatprep.subr.mxu0 0.0
    %869 = vmatpush1.msra.mxu0 0.0
    %870 = vmatprep.subr.mxu0 0.0
    %871 = vmatpush1.msra.mxu0 0.0
    %872 = vmatprep.subr.mxu0 0.0
    %873 = vmatpush1.msra.mxu0 0.0
    %874 = vmatprep.subr.mxu0 0.0
    %875 = vmatpush1.msra.mxu0 0.0
    %876 = vmatprep.subr.mxu0 0.0
    %877 = vmatpush1.msra.mxu0 0.0
    %878 = vmatprep.subr.mxu0 0.0
    %879 = vmatpush1.msra.mxu0 0.0
    %880 = vmatprep.subr.mxu0 0.0
    %881 = vmatpush1.msra.mxu0 0.0
    %882 = vmatprep.subr.mxu0 0.0
    %883 = vmatpush1.msra.mxu0 0.0
    %884 = vmatprep.subr.mxu0 0.0
    %885 = vmatpush1.msra.mxu0 0.0
    %886 = vmatprep.subr.mxu0 0.0
    %887 = vmatpush1.msra.mxu0 0.0
    %888 = vmatprep.subr.mxu0 0.0
    %889 = vmatpush1.msra.mxu0 0.0
    %890 = vmatprep.subr.mxu0 0.0
    %891 = vmatpush1.msra.mxu0 0.0
    %892 = vmatprep.subr.mxu0 0.0
    %893 = vmatpush1.msra.mxu0 0.0
    %894 = vmatprep.subr.mxu0 0.0
    %895 = vmatpush1.msra.mxu0 0.0
    %896 = vmatprep.subr.mxu0 0.0
    %897 = vmatpush1.msra.mxu0 0.0
    %898 = vmatprep.subr.mxu0 0.0
    %899 = vmatpush1.msra.mxu0 0.0
    %900 = vmatprep.subr.mxu0 0.0
    %901 = vmatpush1.msra.mxu0 0.0
    %902 = vmatprep.subr.mxu0 0.0
    %903 = vmatpush1.msra.mxu0 0.0
    %904 = vmatprep.subr.mxu0 0.0
    %905 = vmatpush1.msra.mxu0 0.0
    %906 = vmatprep.subr.mxu0 0.0
    %907 = vmatpush1.msra.mxu0 0.0
    %908 = vmatprep.mubr.f32.mxu0 0.0
    %909 = vmatmul.mubr.f32.gmra.mrb[0].mxu0 %v842
    %v910 = vpop.f32.mrb[0].mxu0
    %v911 = vadd.f32 0.0, %v910
    %v912 = vpop.f32.mrb[0].mxu0
    %913 = vdwg.mxu0
    %v914 = vadd.f32 %v261, %v911
    %v915 = vmul.f32 %v914, 0.5
    %v916 = vtanh.pop %v915
    %v917 = vtanh.pop %v914
    %v918 = vmul.f32 %v916, 0.5
    %v919 = vadd.f32 %v918, 0.5
    %v920 = vsel %vm273, %v917, %v919
    %v921 = vmul.f32 %v920, %v824
    %923 = vrot.lane.b32.xlu0 %v920, 64
    %v924 = vpop.permute.xlu0 %923
    %v926 = vmul.f32 %v920, %v924
    %928 = vrot.lane.b32.xlu0 %v926, 32
    %v929 = vpop.permute.xlu0 %928
    %v931 = vadd.f32 %v921, %v929
    %v932 = vtanh.pop %v931
    %934 = vrot.lane.b32.xlu0 %v932, 64
    %v935 = vpop.permute.xlu0 %934
    %v937 = vmul.f32 %v920, %v935
    %v938 = vpack.c.bf16 %v937, %v937
    %v940 = vunpack.c.l.b16 %v938
    %v941 = vpack.c.b16 %v940, %v940
    %942 = vrot.lane.b32.xlu0 %v941, 96
    %v943 = vpop.permute.xlu0 %942
    %945 = vst.msk [vmem:[#allocation4 + $0x4] sm:$0xf] %vm521, %v943
    %947 = vrot.lane.b32.xlu0 %v937, 32
    %v948 = vpop.permute.xlu0 %947
    %v949 = vsel %vm309, %v948, 0
    %951 = vmatprep.subr.mxu0 0.0
    %952 = vmatpush1.msra.mxu0 %v115
    %953 = vmatprep.subr.mxu0 0.0
    %954 = vmatpush1.msra.mxu0 %v116
    %955 = vmatprep.subr.mxu0 0.0
    %956 = vmatpush1.msra.mxu0 %v117
    %957 = vmatprep.subr.mxu0 0.0
    %958 = vmatpush1.msra.mxu0 %v118
    %959 = vmatprep.subr.mxu0 0.0
    %960 = vmatpush1.msra.mxu0 0.0
    %961 = vmatprep.subr.mxu0 0.0
    %962 = vmatpush1.msra.mxu0 0.0
    %963 = vmatprep.subr.mxu0 0.0
    %964 = vmatpush1.msra.mxu0 0.0
    %965 = vmatprep.subr.mxu0 0.0
    %966 = vmatpush1.msra.mxu0 0.0
    %967 = vmatprep.subr.mxu0 0.0
    %968 = vmatpush1.msra.mxu0 0.0
    %969 = vmatprep.subr.mxu0 0.0
    %970 = vmatpush1.msra.mxu0 0.0
    %971 = vmatprep.subr.mxu0 0.0
    %972 = vmatpush1.msra.mxu0 0.0
    %973 = vmatprep.subr.mxu0 0.0
    %974 = vmatpush1.msra.mxu0 0.0
    %975 = vmatprep.subr.mxu0 0.0
    %976 = vmatpush1.msra.mxu0 0.0
    %977 = vmatprep.subr.mxu0 0.0
    %978 = vmatpush1.msra.mxu0 0.0
    %979 = vmatprep.subr.mxu0 0.0
    %980 = vmatpush1.msra.mxu0 0.0
    %981 = vmatprep.subr.mxu0 0.0
    %982 = vmatpush1.msra.mxu0 0.0
    %983 = vmatprep.subr.mxu0 0.0
    %984 = vmatpush1.msra.mxu0 0.0
    %985 = vmatprep.subr.mxu0 0.0
    %986 = vmatpush1.msra.mxu0 0.0
    %987 = vmatprep.subr.mxu0 0.0
    %988 = vmatpush1.msra.mxu0 0.0
    %989 = vmatprep.subr.mxu0 0.0
    %990 = vmatpush1.msra.mxu0 0.0
    %991 = vmatprep.subr.mxu0 0.0
    %992 = vmatpush1.msra.mxu0 0.0
    %993 = vmatprep.subr.mxu0 0.0
    %994 = vmatpush1.msra.mxu0 0.0
    %995 = vmatprep.subr.mxu0 0.0
    %996 = vmatpush1.msra.mxu0 0.0
    %997 = vmatprep.subr.mxu0 0.0
    %998 = vmatpush1.msra.mxu0 0.0
    %999 = vmatprep.subr.mxu0 0.0
    %1000 = vmatpush1.msra.mxu0 0.0
    %1001 = vmatprep.subr.mxu0 0.0
    %1002 = vmatpush1.msra.mxu0 0.0
    %1003 = vmatprep.subr.mxu0 0.0
    %1004 = vmatpush1.msra.mxu0 0.0
    %1005 = vmatprep.subr.mxu0 0.0
    %1006 = vmatpush1.msra.mxu0 0.0
    %1007 = vmatprep.subr.mxu0 0.0
    %1008 = vmatpush1.msra.mxu0 0.0
    %1009 = vmatprep.subr.mxu0 0.0
    %1010 = vmatpush1.msra.mxu0 0.0
    %1011 = vmatprep.subr.mxu0 0.0
    %1012 = vmatpush1.msra.mxu0 0.0
    %1013 = vmatprep.subr.mxu0 0.0
    %1014 = vmatpush1.msra.mxu0 0.0
    %1015 = vmatprep.mubr.f32.mxu0 0.0
    %1016 = vmatmul.mubr.f32.gmra.mrb[0].mxu0 %v949
    %v1017 = vpop.f32.mrb[0].mxu0
    %v1018 = vadd.f32 0.0, %v1017
    %v1019 = vpop.f32.mrb[0].mxu0
    %1020 = vdwg.mxu0
    %v1021 = vadd.f32 %v266, %v1018
    %v1022 = vmul.f32 %v1021, 0.5
    %v1023 = vtanh.pop %v1022
    %v1024 = vtanh.pop %v1021
    %v1025 = vmul.f32 %v1023, 0.5
    %v1026 = vadd.f32 %v1025, 0.5
    %v1027 = vsel %vm273, %v1024, %v1026
    %v1028 = vmul.f32 %v1027, %v931
    %1030 = vrot.lane.b32.xlu0 %v1027, 64
    %v1031 = vpop.permute.xlu0 %1030
    %v1033 = vmul.f32 %v1027, %v1031
    %1035 = vrot.lane.b32.xlu0 %v1033, 32
    %v1036 = vpop.permute.xlu0 %1035
    %v1038 = vadd.f32 %v1028, %v1036
    %v1039 = vtanh.pop %v1038
    %1041 = vrot.lane.b32.xlu0 %v1039, 64
    %v1042 = vpop.permute.xlu0 %1041
    %v1044 = vmul.f32 %v1027, %v1042
    %v1045 = vpack.c.bf16 %v1044, %v1044
    %1046 = vst.msk [vmem:[#allocation4 + $0x4] sm:$0xf] %vm623, %v1045
    %s1047 = smul.u32 4, 32
    %s1048 = smul.u32 %s1047, 8
    %s1049 = sshll.u32 %s1048, 4
    %1050 = dma.done [#allocation5], %s1049
    %v1051 = vld [vmem:[#allocation4] sm:$0xff]
    %v1052 = vld [vmem:[#allocation2] sm:$0xff]
    %v1053 = vld [vmem:[#allocation2 + $0x8] sm:$0xff]
    %v1054 = vld [vmem:[#allocation2 + $0x10] sm:$0xff]
    %v1055 = vld [vmem:[#allocation2 + $0x18] sm:$0xff]
    %v1056 = vld [vmem:[#allocation2 + $0x20] sm:$0xff]
    %v1057 = vld [vmem:[#allocation2 + $0x28] sm:$0xff]
    %v1058 = vld [vmem:[#allocation2 + $0x30] sm:$0xff]
    %v1059 = vld [vmem:[#allocation2 + $0x38] sm:$0xff]
    %v1060 = vld [vmem:[#allocation2 + $0x40] sm:$0xff]
    %v1061 = vld [vmem:[#allocation2 + $0x48] sm:$0xff]
    %v1062 = vld [vmem:[#allocation2 + $0x50] sm:$0xff]
    %v1063 = vld [vmem:[#allocation2 + $0x58] sm:$0xff]
    %v1064 = vld [vmem:[#allocation2 + $0x60] sm:$0xff]
    %v1065 = vld [vmem:[#allocation2 + $0x68] sm:$0xff]
    %v1066 = vld [vmem:[#allocation2 + $0x70] sm:$0xff]
    %v1067 = vld [vmem:[#allocation2 + $0x78] sm:$0xff]
    %v1068 = vld [vmem:[#allocation2 + $0x80] sm:$0xff]
    %v1069 = vld [vmem:[#allocation2 + $0x88] sm:$0xff]
    %v1070 = vld [vmem:[#allocation2 + $0x90] sm:$0xff]
    %v1071 = vld [vmem:[#allocation2 + $0x98] sm:$0xff]
    %v1072 = vld [vmem:[#allocation2 + $0xa0] sm:$0xff]
    %v1073 = vld [vmem:[#allocation2 + $0xa8] sm:$0xff]
    %v1074 = vld [vmem:[#allocation2 + $0xb0] sm:$0xff]
    %v1075 = vld [vmem:[#allocation2 + $0xb8] sm:$0xff]
    %v1076 = vld [vmem:[#allocation2 + $0xc0] sm:$0xff]
    %v1077 = vld [vmem:[#allocation2 + $0xc8] sm:$0xff]
    %v1078 = vld [vmem:[#allocation2 + $0xd0] sm:$0xff]
    %v1079 = vld [vmem:[#allocation2 + $0xd8] sm:$0xff]
    %v1080 = vld [vmem:[#allocation2 + $0xe0] sm:$0xff]
    %v1081 = vld [vmem:[#allocation2 + $0xe8] sm:$0xff]
    %v1082 = vld [vmem:[#allocation2 + $0xf0] sm:$0xff]
    %v1083 = vld [vmem:[#allocation2 + $0xf8] sm:$0xff]
    %v1084 = vld [vmem:[#allocation2 + $0x100] sm:$0xff]
    %v1085 = vld [vmem:[#allocation2 + $0x108] sm:$0xff]
    %v1086 = vld [vmem:[#allocation2 + $0x110] sm:$0xff]
    %v1087 = vld [vmem:[#allocation2 + $0x118] sm:$0xff]
    %v1088 = vld [vmem:[#allocation2 + $0x120] sm:$0xff]
    %v1089 = vld [vmem:[#allocation2 + $0x128] sm:$0xff]
    %v1090 = vld [vmem:[#allocation2 + $0x130] sm:$0xff]
    %v1091 = vld [vmem:[#allocation2 + $0x138] sm:$0xff]
    %v1092 = vld [vmem:[#allocation2 + $0x140] sm:$0xff]
    %v1093 = vld [vmem:[#allocation2 + $0x148] sm:$0xff]
    %v1094 = vld [vmem:[#allocation2 + $0x150] sm:$0xff]
    %v1095 = vld [vmem:[#allocation2 + $0x158] sm:$0xff]
    %v1096 = vld [vmem:[#allocation2 + $0x160] sm:$0xff]
    %v1097 = vld [vmem:[#allocation2 + $0x168] sm:$0xff]
    %v1098 = vld [vmem:[#allocation2 + $0x170] sm:$0xff]
    %v1099 = vld [vmem:[#allocation2 + $0x178] sm:$0xff]
    %v1100 = vld [vmem:[#allocation2 + $0x180] sm:$0xff]
    %v1101 = vld [vmem:[#allocation2 + $0x188] sm:$0xff]
    %v1102 = vld [vmem:[#allocation2 + $0x190] sm:$0xff]
    %v1103 = vld [vmem:[#allocation2 + $0x198] sm:$0xff]
    %v1104 = vld [vmem:[#allocation2 + $0x1a0] sm:$0xff]
    %v1105 = vld [vmem:[#allocation2 + $0x1a8] sm:$0xff]
    %v1106 = vld [vmem:[#allocation2 + $0x1b0] sm:$0xff]
    %v1107 = vld [vmem:[#allocation2 + $0x1b8] sm:$0xff]
    %v1108 = vld [vmem:[#allocation2 + $0x1c0] sm:$0xff]
    %v1109 = vld [vmem:[#allocation2 + $0x1c8] sm:$0xff]
    %v1110 = vld [vmem:[#allocation2 + $0x1d0] sm:$0xff]
    %v1111 = vld [vmem:[#allocation2 + $0x1d8] sm:$0xff]
    %v1112 = vld [vmem:[#allocation2 + $0x1e0] sm:$0xff]
    %v1113 = vld [vmem:[#allocation2 + $0x1e8] sm:$0xff]
    %v1114 = vld [vmem:[#allocation2 + $0x1f0] sm:$0xff]
    %v1115 = vld [vmem:[#allocation2 + $0x1f8] sm:$0xff]
    %v1116 = vld [vmem:[#allocation2 + $0x200] sm:$0xff]
    %v1117 = vld [vmem:[#allocation2 + $0x208] sm:$0xff]
    %v1118 = vld [vmem:[#allocation2 + $0x210] sm:$0xff]
    %v1119 = vld [vmem:[#allocation2 + $0x218] sm:$0xff]
    %v1120 = vld [vmem:[#allocation2 + $0x220] sm:$0xff]
    %v1121 = vld [vmem:[#allocation2 + $0x228] sm:$0xff]
    %v1122 = vld [vmem:[#allocation2 + $0x230] sm:$0xff]
    %v1123 = vld [vmem:[#allocation2 + $0x238] sm:$0xff]
    %v1124 = vld [vmem:[#allocation2 + $0x240] sm:$0xff]
    %v1125 = vld [vmem:[#allocation2 + $0x248] sm:$0xff]
    %v1126 = vld [vmem:[#allocation2 + $0x250] sm:$0xff]
    %v1127 = vld [vmem:[#allocation2 + $0x258] sm:$0xff]
    %v1128 = vld [vmem:[#allocation2 + $0x260] sm:$0xff]
    %v1129 = vld [vmem:[#allocation2 + $0x268] sm:$0xff]
    %v1130 = vld [vmem:[#allocation2 + $0x270] sm:$0xff]
    %v1131 = vld [vmem:[#allocation2 + $0x278] sm:$0xff]
    %v1132 = vld [vmem:[#allocation2 + $0x280] sm:$0xff]
    %v1133 = vld [vmem:[#allocation2 + $0x288] sm:$0xff]
    %v1134 = vld [vmem:[#allocation2 + $0x290] sm:$0xff]
    %v1135 = vld [vmem:[#allocation2 + $0x298] sm:$0xff]
    %v1136 = vld [vmem:[#allocation2 + $0x2a0] sm:$0xff]
    %v1137 = vld [vmem:[#allocation2 + $0x2a8] sm:$0xff]
    %v1138 = vld [vmem:[#allocation2 + $0x2b0] sm:$0xff]
    %v1139 = vld [vmem:[#allocation2 + $0x2b8] sm:$0xff]
    %v1140 = vld [vmem:[#allocation2 + $0x2c0] sm:$0xff]
    %v1141 = vld [vmem:[#allocation2 + $0x2c8] sm:$0xff]
    %v1142 = vld [vmem:[#allocation2 + $0x2d0] sm:$0xff]
    %v1143 = vld [vmem:[#allocation2 + $0x2d8] sm:$0xff]
    %v1144 = vld [vmem:[#allocation2 + $0x2e0] sm:$0xff]
    %v1145 = vld [vmem:[#allocation2 + $0x2e8] sm:$0xff]
    %v1146 = vld [vmem:[#allocation2 + $0x2f0] sm:$0xff]
    %v1147 = vld [vmem:[#allocation2 + $0x2f8] sm:$0xff]
    %v1148 = vld [vmem:[#allocation2 + $0x300] sm:$0xff]
    %v1149 = vld [vmem:[#allocation2 + $0x308] sm:$0xff]
    %v1150 = vld [vmem:[#allocation2 + $0x310] sm:$0xff]
    %v1151 = vld [vmem:[#allocation2 + $0x318] sm:$0xff]
    %v1152 = vld [vmem:[#allocation2 + $0x320] sm:$0xff]
    %v1153 = vld [vmem:[#allocation2 + $0x328] sm:$0xff]
    %v1154 = vld [vmem:[#allocation2 + $0x330] sm:$0xff]
    %v1155 = vld [vmem:[#allocation2 + $0x338] sm:$0xff]
    %v1156 = vld [vmem:[#allocation2 + $0x340] sm:$0xff]
    %v1157 = vld [vmem:[#allocation2 + $0x348] sm:$0xff]
    %v1158 = vld [vmem:[#allocation2 + $0x350] sm:$0xff]
    %v1159 = vld [vmem:[#allocation2 + $0x358] sm:$0xff]
    %v1160 = vld [vmem:[#allocation2 + $0x360] sm:$0xff]
    %v1161 = vld [vmem:[#allocation2 + $0x368] sm:$0xff]
    %v1162 = vld [vmem:[#allocation2 + $0x370] sm:$0xff]
    %v1163 = vld [vmem:[#allocation2 + $0x378] sm:$0xff]
    %v1164 = vld [vmem:[#allocation2 + $0x380] sm:$0xff]
    %v1165 = vld [vmem:[#allocation2 + $0x388] sm:$0xff]
    %v1166 = vld [vmem:[#allocation2 + $0x390] sm:$0xff]
    %v1167 = vld [vmem:[#allocation2 + $0x398] sm:$0xff]
    %v1168 = vld [vmem:[#allocation2 + $0x3a0] sm:$0xff]
    %v1169 = vld [vmem:[#allocation2 + $0x3a8] sm:$0xff]
    %v1170 = vld [vmem:[#allocation2 + $0x3b0] sm:$0xff]
    %v1171 = vld [vmem:[#allocation2 + $0x3b8] sm:$0xff]
    %v1172 = vld [vmem:[#allocation2 + $0x3c0] sm:$0xff]
    %v1173 = vld [vmem:[#allocation2 + $0x3c8] sm:$0xff]
    %v1174 = vld [vmem:[#allocation2 + $0x3d0] sm:$0xff]
    %v1175 = vld [vmem:[#allocation2 + $0x3d8] sm:$0xff]
    %v1176 = vld [vmem:[#allocation2 + $0x3e0] sm:$0xff]
    %v1177 = vld [vmem:[#allocation2 + $0x3e8] sm:$0xff]
    %v1178 = vld [vmem:[#allocation2 + $0x3f0] sm:$0xff]
    %v1179 = vld [vmem:[#allocation2 + $0x3f8] sm:$0xff]
    %v1180 = vld [vmem:[%s5] sm:$0xff]
    %v1182 = vlaneseq
    %v1183 = vshrl.u32 %v1182, 7
    %v1184 = vsub.s32 0, %v1183
    %v1185 = vrot.slane %v1180, %v1184
    %v1186 = vlaneseq
    %v1187 = vshrl.u32 %v1186, 7
    %v1188 = vsub.s32 1, %v1187
    %v1189 = vrot.slane %v1180, %v1188
    %v1190 = vlaneseq
    %v1191 = vshrl.u32 %v1190, 7
    %v1192 = vsub.s32 2, %v1191
    %v1193 = vrot.slane %v1180, %v1192
    %v1194 = vlaneseq
    %v1195 = vshrl.u32 %v1194, 7
    %v1196 = vsub.s32 3, %v1195
    %v1197 = vrot.slane %v1180, %v1196
    %v1198 = vlaneseq
    %v1199 = vshrl.u32 %v1198, 7
    %v1200 = vsub.s32 4, %v1199
    %v1201 = vrot.slane %v1180, %v1200
    %v1202 = vlaneseq
    %v1203 = vshrl.u32 %v1202, 7
    %v1204 = vsub.s32 5, %v1203
    %v1205 = vrot.slane %v1180, %v1204
    %v1206 = vlaneseq
    %v1207 = vshrl.u32 %v1206, 7
    %v1208 = vsub.s32 6, %v1207
    %v1209 = vrot.slane %v1180, %v1208
    %v1210 = vlaneseq
    %v1211 = vshrl.u32 %v1210, 7
    %v1212 = vsub.s32 7, %v1211
    %v1213 = vrot.slane %v1180, %v1212
    %v1223 = vunpack.c.l.b16 %v1051
    %v1224 = vunpack.c.h.b16 %v1051
    %v1225 = vpack.c.b16 %v1223, %v1223
    %v1226 = vpack.c.b16 %v1224, %v1224
    %1229 = vmatprep.subr.bf16.mxu0 %v1053
    %1230 = vmatpush1.bf16.msra.mxu0 %v1052
    %1231 = vmatprep.subr.bf16.mxu0 %v1061
    %1232 = vmatpush1.bf16.msra.mxu0 %v1060
    %1233 = vmatprep.subr.bf16.mxu0 %v1069
    %1234 = vmatpush1.bf16.msra.mxu0 %v1068
    %1235 = vmatprep.subr.bf16.mxu0 %v1077
    %1236 = vmatpush1.bf16.msra.mxu0 %v1076
    %1237 = vmatprep.subr.bf16.mxu0 %v1085
    %1238 = vmatpush1.bf16.msra.mxu0 %v1084
    %1239 = vmatprep.subr.bf16.mxu0 %v1093
    %1240 = vmatpush1.bf16.msra.mxu0 %v1092
    %1241 = vmatprep.subr.bf16.mxu0 %v1101
    %1242 = vmatpush1.bf16.msra.mxu0 %v1100
    %1243 = vmatprep.subr.bf16.mxu0 %v1109
    %1244 = vmatpush1.bf16.msra.mxu0 %v1108
    %1245 = vmatprep.subr.bf16.mxu0 %v1117
    %1246 = vmatpush1.bf16.msra.mxu0 %v1116
    %1247 = vmatprep.subr.bf16.mxu0 %v1125
    %1248 = vmatpush1.bf16.msra.mxu0 %v1124
    %1249 = vmatprep.subr.bf16.mxu0 %v1133
    %1250 = vmatpush1.bf16.msra.mxu0 %v1132
    %1251 = vmatprep.subr.bf16.mxu0 %v1141
    %1252 = vmatpush1.bf16.msra.mxu0 %v1140
    %1253 = vmatprep.subr.bf16.mxu0 %v1149
    %1254 = vmatpush1.bf16.msra.mxu0 %v1148
    %1255 = vmatprep.subr.bf16.mxu0 %v1157
    %1256 = vmatpush1.bf16.msra.mxu0 %v1156
    %1257 = vmatprep.subr.bf16.mxu0 %v1165
    %1258 = vmatpush1.bf16.msra.mxu0 %v1164
    %1259 = vmatprep.subr.bf16.mxu0 %v1173
    %1260 = vmatpush1.bf16.msra.mxu0 %v1172
    %1261 = vmatprep.mubr.bf16.mxu0 %v1226
    %1262 = vmatmul.mubr.bf16.gmra.mrb[0].mxu0 %v1225
    %v1263 = vpop.f32.mrb[0].mxu0
    %v1264 = vadd.f32 %v1185, %v1263
    %v1265 = vpop.f32.mrb[0].mxu0
    %v1266 = vadd.f32 %v1189, %v1265
    %v1267 = vpop.f32.mrb[0].mxu0
    %v1268 = vpop.f32.mrb[0].mxu0
    %1269 = vdwg.mxu0
    %1270 = vmatprep.subr.bf16.mxu0 %v1055
    %1271 = vmatpush1.bf16.msra.mxu0 %v1054
    %1272 = vmatprep.subr.bf16.mxu0 %v1063
    %1273 = vmatpush1.bf16.msra.mxu0 %v1062
    %1274 = vmatprep.subr.bf16.mxu0 %v1071
    %1275 = vmatpush1.bf16.msra.mxu0 %v1070
    %1276 = vmatprep.subr.bf16.mxu0 %v1079
    %1277 = vmatpush1.bf16.msra.mxu0 %v1078
    %1278 = vmatprep.subr.bf16.mxu0 %v1087
    %1279 = vmatpush1.bf16.msra.mxu0 %v1086
    %1280 = vmatprep.subr.bf16.mxu0 %v1095
    %1281 = vmatpush1.bf16.msra.mxu0 %v1094
    %1282 = vmatprep.subr.bf16.mxu0 %v1103
    %1283 = vmatpush1.bf16.msra.mxu0 %v1102
    %1284 = vmatprep.subr.bf16.mxu0 %v1111
    %1285 = vmatpush1.bf16.msra.mxu0 %v1110
    %1286 = vmatprep.subr.bf16.mxu0 %v1119
    %1287 = vmatpush1.bf16.msra.mxu0 %v1118
    %1288 = vmatprep.subr.bf16.mxu0 %v1127
    %1289 = vmatpush1.bf16.msra.mxu0 %v1126
    %1290 = vmatprep.subr.bf16.mxu0 %v1135
    %1291 = vmatpush1.bf16.msra.mxu0 %v1134
    %1292 = vmatprep.subr.bf16.mxu0 %v1143
    %1293 = vmatpush1.bf16.msra.mxu0 %v1142
    %1294 = vmatprep.subr.bf16.mxu0 %v1151
    %1295 = vmatpush1.bf16.msra.mxu0 %v1150
    %1296 = vmatprep.subr.bf16.mxu0 %v1159
    %1297 = vmatpush1.bf16.msra.mxu0 %v1158
    %1298 = vmatprep.subr.bf16.mxu0 %v1167
    %1299 = vmatpush1.bf16.msra.mxu0 %v1166
    %1300 = vmatprep.subr.bf16.mxu0 %v1175
    %1301 = vmatpush1.bf16.msra.mxu0 %v1174
    %1302 = vmatprep.mubr.bf16.mxu0 %v1226
    %1303 = vmatmul.mubr.bf16.gmra.mrb[0].mxu0 %v1225
    %v1304 = vpop.f32.mrb[0].mxu0
    %v1305 = vadd.f32 %v1193, %v1304
    %v1306 = vpop.f32.mrb[0].mxu0
    %v1307 = vadd.f32 %v1197, %v1306
    %v1308 = vpop.f32.mrb[0].mxu0
    %v1309 = vpop.f32.mrb[0].mxu0
    %1310 = vdwg.mxu0
    %1311 = vmatprep.subr.bf16.mxu0 %v1057
    %1312 = vmatpush1.bf16.msra.mxu0 %v1056
    %1313 = vmatprep.subr.bf16.mxu0 %v1065
    %1314 = vmatpush1.bf16.msra.mxu0 %v1064
    %1315 = vmatprep.subr.bf16.mxu0 %v1073
    %1316 = vmatpush1.bf16.msra.mxu0 %v1072
    %1317 = vmatprep.subr.bf16.mxu0 %v1081
    %1318 = vmatpush1.bf16.msra.mxu0 %v1080
    %1319 = vmatprep.subr.bf16.mxu0 %v1089
    %1320 = vmatpush1.bf16.msra.mxu0 %v1088
    %1321 = vmatprep.subr.bf16.mxu0 %v1097
    %1322 = vmatpush1.bf16.msra.mxu0 %v1096
    %1323 = vmatprep.subr.bf16.mxu0 %v1105
    %1324 = vmatpush1.bf16.msra.mxu0 %v1104
    %1325 = vmatprep.subr.bf16.mxu0 %v1113
    %1326 = vmatpush1.bf16.msra.mxu0 %v1112
    %1327 = vmatprep.subr.bf16.mxu0 %v1121
    %1328 = vmatpush1.bf16.msra.mxu0 %v1120
    %1329 = vmatprep.subr.bf16.mxu0 %v1129
    %1330 = vmatpush1.bf16.msra.mxu0 %v1128
    %1331 = vmatprep.subr.bf16.mxu0 %v1137
    %1332 = vmatpush1.bf16.msra.mxu0 %v1136
    %1333 = vmatprep.subr.bf16.mxu0 %v1145
    %1334 = vmatpush1.bf16.msra.mxu0 %v1144
    %1335 = vmatprep.subr.bf16.mxu0 %v1153
    %1336 = vmatpush1.bf16.msra.mxu0 %v1152
    %1337 = vmatprep.subr.bf16.mxu0 %v1161
    %1338 = vmatpush1.bf16.msra.mxu0 %v1160
    %1339 = vmatprep.subr.bf16.mxu0 %v1169
    %1340 = vmatpush1.bf16.msra.mxu0 %v1168
    %1341 = vmatprep.subr.bf16.mxu0 %v1177
    %1342 = vmatpush1.bf16.msra.mxu0 %v1176
    %1343 = vmatprep.mubr.bf16.mxu0 %v1226
    %1344 = vmatmul.mubr.bf16.gmra.mrb[0].mxu0 %v1225
    %v1345 = vpop.f32.mrb[0].mxu0
    %v1346 = vadd.f32 %v1201, %v1345
    %v1347 = vpop.f32.mrb[0].mxu0
    %v1348 = vadd.f32 %v1205, %v1347
    %v1349 = vpop.f32.mrb[0].mxu0
    %v1350 = vpop.f32.mrb[0].mxu0
    %1351 = vdwg.mxu0
    %1352 = vmatprep.subr.bf16.mxu0 %v1059
    %1353 = vmatpush1.bf16.msra.mxu0 %v1058
    %1354 = vmatprep.subr.bf16.mxu0 %v1067
    %1355 = vmatpush1.bf16.msra.mxu0 %v1066
    %1356 = vmatprep.subr.bf16.mxu0 %v1075
    %1357 = vmatpush1.bf16.msra.mxu0 %v1074
    %1358 = vmatprep.subr.bf16.mxu0 %v1083
    %1359 = vmatpush1.bf16.msra.mxu0 %v1082
    %1360 = vmatprep.subr.bf16.mxu0 %v1091
    %1361 = vmatpush1.bf16.msra.mxu0 %v1090
    %1362 = vmatprep.subr.bf16.mxu0 %v1099
    %1363 = vmatpush1.bf16.msra.mxu0 %v1098
    %1364 = vmatprep.subr.bf16.mxu0 %v1107
    %1365 = vmatpush1.bf16.msra.mxu0 %v1106
    %1366 = vmatprep.subr.bf16.mxu0 %v1115
    %1367 = vmatpush1.bf16.msra.mxu0 %v1114
    %1368 = vmatprep.subr.bf16.mxu0 %v1123
    %1369 = vmatpush1.bf16.msra.mxu0 %v1122
    %1370 = vmatprep.subr.bf16.mxu0 %v1131
    %1371 = vmatpush1.bf16.msra.mxu0 %v1130
    %1372 = vmatprep.subr.bf16.mxu0 %v1139
    %1373 = vmatpush1.bf16.msra.mxu0 %v1138
    %1374 = vmatprep.subr.bf16.mxu0 %v1147
    %1375 = vmatpush1.bf16.msra.mxu0 %v1146
    %1376 = vmatprep.subr.bf16.mxu0 %v1155
    %1377 = vmatpush1.bf16.msra.mxu0 %v1154
    %1378 = vmatprep.subr.bf16.mxu0 %v1163
    %1379 = vmatpush1.bf16.msra.mxu0 %v1162
    %1380 = vmatprep.subr.bf16.mxu0 %v1171
    %1381 = vmatpush1.bf16.msra.mxu0 %v1170
    %1382 = vmatprep.subr.bf16.mxu0 %v1179
    %1383 = vmatpush1.bf16.msra.mxu0 %v1178
    %1384 = vmatprep.mubr.bf16.mxu0 %v1226
    %1385 = vmatmul.mubr.bf16.gmra.mrb[0].mxu0 %v1225
    %v1386 = vpop.f32.mrb[0].mxu0
    %v1387 = vadd.f32 %v1209, %v1386
    %v1388 = vpop.f32.mrb[0].mxu0
    %v1389 = vadd.f32 %v1213, %v1388
    %v1390 = vpop.f32.mrb[0].mxu0
    %v1391 = vpop.f32.mrb[0].mxu0
    %1392 = vdwg.mxu0
    %v1393 = vld [vmem:[%s6] sm:$0xff]
    %v1395 = vlaneseq
    %v1396 = vshrl.u32 %v1395, 7
    %v1397 = vsub.s32 0, %v1396
    %v1398 = vrot.slane %v1393, %v1397
    %v1399 = vlaneseq
    %v1400 = vshrl.u32 %v1399, 7
    %v1401 = vsub.s32 1, %v1400
    %v1402 = vrot.slane %v1393, %v1401
    %v1403 = vlaneseq
    %v1404 = vshrl.u32 %v1403, 7
    %v1405 = vsub.s32 2, %v1404
    %v1406 = vrot.slane %v1393, %v1405
    %v1407 = vlaneseq
    %v1408 = vshrl.u32 %v1407, 7
    %v1409 = vsub.s32 3, %v1408
    %v1410 = vrot.slane %v1393, %v1409
    %v1411 = vlaneseq
    %v1412 = vshrl.u32 %v1411, 7
    %v1413 = vsub.s32 4, %v1412
    %v1414 = vrot.slane %v1393, %v1413
    %v1415 = vlaneseq
    %v1416 = vshrl.u32 %v1415, 7
    %v1417 = vsub.s32 5, %v1416
    %v1418 = vrot.slane %v1393, %v1417
    %v1419 = vlaneseq
    %v1420 = vshrl.u32 %v1419, 7
    %v1421 = vsub.s32 6, %v1420
    %v1422 = vrot.slane %v1393, %v1421
    %v1423 = vlaneseq
    %v1424 = vshrl.u32 %v1423, 7
    %v1425 = vsub.s32 7, %v1424
    %v1426 = vrot.slane %v1393, %v1425
    %v1435 = vmul.f32 %v1264, %v1398
    %v1436 = vmul.f32 %v1266, %v1402
    %v1437 = vmul.f32 %v1305, %v1406
    %v1438 = vmul.f32 %v1307, %v1410
    %v1439 = vmul.f32 %v1346, %v1414
    %v1440 = vmul.f32 %v1348, %v1418
    %v1441 = vmul.f32 %v1387, %v1422
    %v1442 = vmul.f32 %v1389, %v1426
    %v1443 = vld [vmem:[%s7] sm:$0xff]
    %v1445 = vlaneseq
    %v1446 = vshrl.u32 %v1445, 7
    %v1447 = vsub.s32 0, %v1446
    %v1448 = vrot.slane %v1443, %v1447
    %v1449 = vlaneseq
    %v1450 = vshrl.u32 %v1449, 7
    %v1451 = vsub.s32 1, %v1450
    %v1452 = vrot.slane %v1443, %v1451
    %v1453 = vlaneseq
    %v1454 = vshrl.u32 %v1453, 7
    %v1455 = vsub.s32 2, %v1454
    %v1456 = vrot.slane %v1443, %v1455
    %v1457 = vlaneseq
    %v1458 = vshrl.u32 %v1457, 7
    %v1459 = vsub.s32 3, %v1458
    %v1460 = vrot.slane %v1443, %v1459
    %v1461 = vlaneseq
    %v1462 = vshrl.u32 %v1461, 7
    %v1463 = vsub.s32 4, %v1462
    %v1464 = vrot.slane %v1443, %v1463
    %v1465 = vlaneseq
    %v1466 = vshrl.u32 %v1465, 7
    %v1467 = vsub.s32 5, %v1466
    %v1468 = vrot.slane %v1443, %v1467
    %v1469 = vlaneseq
    %v1470 = vshrl.u32 %v1469, 7
    %v1471 = vsub.s32 6, %v1470
    %v1472 = vrot.slane %v1443, %v1471
    %v1473 = vlaneseq
    %v1474 = vshrl.u32 %v1473, 7
    %v1475 = vsub.s32 7, %v1474
    %v1476 = vrot.slane %v1443, %v1475
    %v1485 = vadd.f32 %v1435, %v1448
    %v1486 = vadd.f32 %v1436, %v1452
    %v1487 = vadd.f32 %v1437, %v1456
    %v1488 = vadd.f32 %v1438, %v1460
    %v1489 = vadd.f32 %v1439, %v1464
    %v1490 = vadd.f32 %v1440, %v1468
    %v1491 = vadd.f32 %v1441, %v1472
    %v1492 = vadd.f32 %v1442, %v1476
    %v1493 = vmax.f32 %v1485, 0.0
    %v1494 = vmax.f32 %v1486, 0.0
    %v1495 = vmax.f32 %v1487, 0.0
    %v1496 = vmax.f32 %v1488, 0.0
    %v1497 = vmax.f32 %v1489, 0.0
    %v1498 = vmax.f32 %v1490, 0.0
    %v1499 = vmax.f32 %v1491, 0.0
    %v1500 = vmax.f32 %v1492, 0.0
    %s1501 = smul.u32 4, 128
    %s1502 = smul.u32 %s1501, 4
    %s1503 = sshll.u32 %s1502, 4
    %1504 = dma.done %s80, %s1503
    %v1505 = vpack.c.bf16 %v1493, %v1493
    %v1506 = vpack.c.bf16 %v1494, %v1494
    %v1507 = vpack.c.bf16 %v1495, %v1495
    %v1508 = vpack.c.bf16 %v1496, %v1496
    %v1509 = vpack.c.bf16 %v1497, %v1497
    %v1510 = vpack.c.bf16 %v1498, %v1498
    %v1511 = vpack.c.bf16 %v1499, %v1499
    %v1512 = vpack.c.bf16 %v1500, %v1500
    %v1513 = vld [vmem:[#allocation3] sm:$0xff]
    %v1514 = vld [vmem:[#allocation3 + $0x8] sm:$0xff]
    %v1515 = vld [vmem:[#allocation3 + $0x10] sm:$0xff]
    %v1516 = vld [vmem:[#allocation3 + $0x18] sm:$0xff]
    %v1517 = vld [vmem:[#allocation3 + $0x20] sm:$0xff]
    %v1518 = vld [vmem:[#allocation3 + $0x28] sm:$0xff]
    %v1519 = vld [vmem:[#allocation3 + $0x30] sm:$0xff]
    %v1520 = vld [vmem:[#allocation3 + $0x38] sm:$0xff]
    %v1521 = vld [vmem:[#allocation3 + $0x40] sm:$0xff]
    %v1522 = vld [vmem:[#allocation3 + $0x48] sm:$0xff]
    %v1523 = vld [vmem:[#allocation3 + $0x50] sm:$0xff]
    %v1524 = vld [vmem:[#allocation3 + $0x58] sm:$0xff]
    %v1525 = vld [vmem:[#allocation3 + $0x60] sm:$0xff]
    %v1526 = vld [vmem:[#allocation3 + $0x68] sm:$0xff]
    %v1527 = vld [vmem:[#allocation3 + $0x70] sm:$0xff]
    %v1528 = vld [vmem:[#allocation3 + $0x78] sm:$0xff]
    %v1529 = vld [vmem:[#allocation3 + $0x80] sm:$0xff]
    %v1530 = vld [vmem:[#allocation3 + $0x88] sm:$0xff]
    %v1531 = vld [vmem:[#allocation3 + $0x90] sm:$0xff]
    %v1532 = vld [vmem:[#allocation3 + $0x98] sm:$0xff]
    %v1533 = vld [vmem:[#allocation3 + $0xa0] sm:$0xff]
    %v1534 = vld [vmem:[#allocation3 + $0xa8] sm:$0xff]
    %v1535 = vld [vmem:[#allocation3 + $0xb0] sm:$0xff]
    %v1536 = vld [vmem:[#allocation3 + $0xb8] sm:$0xff]
    %v1537 = vld [vmem:[#allocation3 + $0xc0] sm:$0xff]
    %v1538 = vld [vmem:[#allocation3 + $0xc8] sm:$0xff]
    %v1539 = vld [vmem:[#allocation3 + $0xd0] sm:$0xff]
    %v1540 = vld [vmem:[#allocation3 + $0xd8] sm:$0xff]
    %v1541 = vld [vmem:[#allocation3 + $0xe0] sm:$0xff]
    %v1542 = vld [vmem:[#allocation3 + $0xe8] sm:$0xff]
    %v1543 = vld [vmem:[#allocation3 + $0xf0] sm:$0xff]
    %v1544 = vld [vmem:[#allocation3 + $0xf8] sm:$0xff]
    %v1545 = vld [vmem:[#allocation3 + $0x100] sm:$0xff]
    %v1546 = vld [vmem:[#allocation3 + $0x108] sm:$0xff]
    %v1547 = vld [vmem:[#allocation3 + $0x110] sm:$0xff]
    %v1548 = vld [vmem:[#allocation3 + $0x118] sm:$0xff]
    %v1549 = vld [vmem:[#allocation3 + $0x120] sm:$0xff]
    %v1550 = vld [vmem:[#allocation3 + $0x128] sm:$0xff]
    %v1551 = vld [vmem:[#allocation3 + $0x130] sm:$0xff]
    %v1552 = vld [vmem:[#allocation3 + $0x138] sm:$0xff]
    %v1553 = vld [vmem:[#allocation3 + $0x140] sm:$0xff]
    %v1554 = vld [vmem:[#allocation3 + $0x148] sm:$0xff]
    %v1555 = vld [vmem:[#allocation3 + $0x150] sm:$0xff]
    %v1556 = vld [vmem:[#allocation3 + $0x158] sm:$0xff]
    %v1557 = vld [vmem:[#allocation3 + $0x160] sm:$0xff]
    %v1558 = vld [vmem:[#allocation3 + $0x168] sm:$0xff]
    %v1559 = vld [vmem:[#allocation3 + $0x170] sm:$0xff]
    %v1560 = vld [vmem:[#allocation3 + $0x178] sm:$0xff]
    %v1561 = vld [vmem:[#allocation3 + $0x180] sm:$0xff]
    %v1562 = vld [vmem:[#allocation3 + $0x188] sm:$0xff]
    %v1563 = vld [vmem:[#allocation3 + $0x190] sm:$0xff]
    %v1564 = vld [vmem:[#allocation3 + $0x198] sm:$0xff]
    %v1565 = vld [vmem:[#allocation3 + $0x1a0] sm:$0xff]
    %v1566 = vld [vmem:[#allocation3 + $0x1a8] sm:$0xff]
    %v1567 = vld [vmem:[#allocation3 + $0x1b0] sm:$0xff]
    %v1568 = vld [vmem:[#allocation3 + $0x1b8] sm:$0xff]
    %v1569 = vld [vmem:[#allocation3 + $0x1c0] sm:$0xff]
    %v1570 = vld [vmem:[#allocation3 + $0x1c8] sm:$0xff]
    %v1571 = vld [vmem:[#allocation3 + $0x1d0] sm:$0xff]
    %v1572 = vld [vmem:[#allocation3 + $0x1d8] sm:$0xff]
    %v1573 = vld [vmem:[#allocation3 + $0x1e0] sm:$0xff]
    %v1574 = vld [vmem:[#allocation3 + $0x1e8] sm:$0xff]
    %v1575 = vld [vmem:[#allocation3 + $0x1f0] sm:$0xff]
    %v1576 = vld [vmem:[#allocation3 + $0x1f8] sm:$0xff]
    %v1577 = vld [vmem:[#allocation3 + $0x200] sm:$0xff]
    %v1578 = vld [vmem:[#allocation3 + $0x208] sm:$0xff]
    %v1579 = vld [vmem:[#allocation3 + $0x210] sm:$0xff]
    %v1580 = vld [vmem:[#allocation3 + $0x218] sm:$0xff]
    %v1581 = vld [vmem:[#allocation3 + $0x220] sm:$0xff]
    %v1582 = vld [vmem:[#allocation3 + $0x228] sm:$0xff]
    %v1583 = vld [vmem:[#allocation3 + $0x230] sm:$0xff]
    %v1584 = vld [vmem:[#allocation3 + $0x238] sm:$0xff]
    %v1585 = vld [vmem:[#allocation3 + $0x240] sm:$0xff]
    %v1586 = vld [vmem:[#allocation3 + $0x248] sm:$0xff]
    %v1587 = vld [vmem:[#allocation3 + $0x250] sm:$0xff]
    %v1588 = vld [vmem:[#allocation3 + $0x258] sm:$0xff]
    %v1589 = vld [vmem:[#allocation3 + $0x260] sm:$0xff]
    %v1590 = vld [vmem:[#allocation3 + $0x268] sm:$0xff]
    %v1591 = vld [vmem:[#allocation3 + $0x270] sm:$0xff]
    %v1592 = vld [vmem:[#allocation3 + $0x278] sm:$0xff]
    %v1593 = vld [vmem:[#allocation3 + $0x280] sm:$0xff]
    %v1594 = vld [vmem:[#allocation3 + $0x288] sm:$0xff]
    %v1595 = vld [vmem:[#allocation3 + $0x290] sm:$0xff]
    %v1596 = vld [vmem:[#allocation3 + $0x298] sm:$0xff]
    %v1597 = vld [vmem:[#allocation3 + $0x2a0] sm:$0xff]
    %v1598 = vld [vmem:[#allocation3 + $0x2a8] sm:$0xff]
    %v1599 = vld [vmem:[#allocation3 + $0x2b0] sm:$0xff]
    %v1600 = vld [vmem:[#allocation3 + $0x2b8] sm:$0xff]
    %v1601 = vld [vmem:[#allocation3 + $0x2c0] sm:$0xff]
    %v1602 = vld [vmem:[#allocation3 + $0x2c8] sm:$0xff]
    %v1603 = vld [vmem:[#allocation3 + $0x2d0] sm:$0xff]
    %v1604 = vld [vmem:[#allocation3 + $0x2d8] sm:$0xff]
    %v1605 = vld [vmem:[#allocation3 + $0x2e0] sm:$0xff]
    %v1606 = vld [vmem:[#allocation3 + $0x2e8] sm:$0xff]
    %v1607 = vld [vmem:[#allocation3 + $0x2f0] sm:$0xff]
    %v1608 = vld [vmem:[#allocation3 + $0x2f8] sm:$0xff]
    %v1609 = vld [vmem:[#allocation3 + $0x300] sm:$0xff]
    %v1610 = vld [vmem:[#allocation3 + $0x308] sm:$0xff]
    %v1611 = vld [vmem:[#allocation3 + $0x310] sm:$0xff]
    %v1612 = vld [vmem:[#allocation3 + $0x318] sm:$0xff]
    %v1613 = vld [vmem:[#allocation3 + $0x320] sm:$0xff]
    %v1614 = vld [vmem:[#allocation3 + $0x328] sm:$0xff]
    %v1615 = vld [vmem:[#allocation3 + $0x330] sm:$0xff]
    %v1616 = vld [vmem:[#allocation3 + $0x338] sm:$0xff]
    %v1617 = vld [vmem:[#allocation3 + $0x340] sm:$0xff]
    %v1618 = vld [vmem:[#allocation3 + $0x348] sm:$0xff]
    %v1619 = vld [vmem:[#allocation3 + $0x350] sm:$0xff]
    %v1620 = vld [vmem:[#allocation3 + $0x358] sm:$0xff]
    %v1621 = vld [vmem:[#allocation3 + $0x360] sm:$0xff]
    %v1622 = vld [vmem:[#allocation3 + $0x368] sm:$0xff]
    %v1623 = vld [vmem:[#allocation3 + $0x370] sm:$0xff]
    %v1624 = vld [vmem:[#allocation3 + $0x378] sm:$0xff]
    %v1625 = vld [vmem:[#allocation3 + $0x380] sm:$0xff]
    %v1626 = vld [vmem:[#allocation3 + $0x388] sm:$0xff]
    %v1627 = vld [vmem:[#allocation3 + $0x390] sm:$0xff]
    %v1628 = vld [vmem:[#allocation3 + $0x398] sm:$0xff]
    %v1629 = vld [vmem:[#allocation3 + $0x3a0] sm:$0xff]
    %v1630 = vld [vmem:[#allocation3 + $0x3a8] sm:$0xff]
    %v1631 = vld [vmem:[#allocation3 + $0x3b0] sm:$0xff]
    %v1632 = vld [vmem:[#allocation3 + $0x3b8] sm:$0xff]
    %v1633 = vld [vmem:[#allocation3 + $0x3c0] sm:$0xff]
    %v1634 = vld [vmem:[#allocation3 + $0x3c8] sm:$0xff]
    %v1635 = vld [vmem:[#allocation3 + $0x3d0] sm:$0xff]
    %v1636 = vld [vmem:[#allocation3 + $0x3d8] sm:$0xff]
    %v1637 = vld [vmem:[#allocation3 + $0x3e0] sm:$0xff]
    %v1638 = vld [vmem:[#allocation3 + $0x3e8] sm:$0xff]
    %v1639 = vld [vmem:[#allocation3 + $0x3f0] sm:$0xff]
    %v1640 = vld [vmem:[#allocation3 + $0x3f8] sm:$0xff]
    %v1641 = vld [vmem:[#allocation3 + $0x400] sm:$0xff]
    %v1642 = vld [vmem:[#allocation3 + $0x408] sm:$0xff]
    %v1643 = vld [vmem:[#allocation3 + $0x410] sm:$0xff]
    %v1644 = vld [vmem:[#allocation3 + $0x418] sm:$0xff]
    %v1645 = vld [vmem:[#allocation3 + $0x420] sm:$0xff]
    %v1646 = vld [vmem:[#allocation3 + $0x428] sm:$0xff]
    %v1647 = vld [vmem:[#allocation3 + $0x430] sm:$0xff]
    %v1648 = vld [vmem:[#allocation3 + $0x438] sm:$0xff]
    %v1649 = vld [vmem:[#allocation3 + $0x440] sm:$0xff]
    %v1650 = vld [vmem:[#allocation3 + $0x448] sm:$0xff]
    %v1651 = vld [vmem:[#allocation3 + $0x450] sm:$0xff]
    %v1652 = vld [vmem:[#allocation3 + $0x458] sm:$0xff]
    %v1653 = vld [vmem:[#allocation3 + $0x460] sm:$0xff]
    %v1654 = vld [vmem:[#allocation3 + $0x468] sm:$0xff]
    %v1655 = vld [vmem:[#allocation3 + $0x470] sm:$0xff]
    %v1656 = vld [vmem:[#allocation3 + $0x478] sm:$0xff]
    %v1657 = vld [vmem:[#allocation3 + $0x480] sm:$0xff]
    %v1658 = vld [vmem:[#allocation3 + $0x488] sm:$0xff]
    %v1659 = vld [vmem:[#allocation3 + $0x490] sm:$0xff]
    %v1660 = vld [vmem:[#allocation3 + $0x498] sm:$0xff]
    %v1661 = vld [vmem:[#allocation3 + $0x4a0] sm:$0xff]
    %v1662 = vld [vmem:[#allocation3 + $0x4a8] sm:$0xff]
    %v1663 = vld [vmem:[#allocation3 + $0x4b0] sm:$0xff]
    %v1664 = vld [vmem:[#allocation3 + $0x4b8] sm:$0xff]
    %v1665 = vld [vmem:[#allocation3 + $0x4c0] sm:$0xff]
    %v1666 = vld [vmem:[#allocation3 + $0x4c8] sm:$0xff]
    %v1667 = vld [vmem:[#allocation3 + $0x4d0] sm:$0xff]
    %v1668 = vld [vmem:[#allocation3 + $0x4d8] sm:$0xff]
    %v1669 = vld [vmem:[#allocation3 + $0x4e0] sm:$0xff]
    %v1670 = vld [vmem:[#allocation3 + $0x4e8] sm:$0xff]
    %v1671 = vld [vmem:[#allocation3 + $0x4f0] sm:$0xff]
    %v1672 = vld [vmem:[#allocation3 + $0x4f8] sm:$0xff]
    %v1673 = vld [vmem:[#allocation3 + $0x500] sm:$0xff]
    %v1674 = vld [vmem:[#allocation3 + $0x508] sm:$0xff]
    %v1675 = vld [vmem:[#allocation3 + $0x510] sm:$0xff]
    %v1676 = vld [vmem:[#allocation3 + $0x518] sm:$0xff]
    %v1677 = vld [vmem:[#allocation3 + $0x520] sm:$0xff]
    %v1678 = vld [vmem:[#allocation3 + $0x528] sm:$0xff]
    %v1679 = vld [vmem:[#allocation3 + $0x530] sm:$0xff]
    %v1680 = vld [vmem:[#allocation3 + $0x538] sm:$0xff]
    %v1681 = vld [vmem:[#allocation3 + $0x540] sm:$0xff]
    %v1682 = vld [vmem:[#allocation3 + $0x548] sm:$0xff]
    %v1683 = vld [vmem:[#allocation3 + $0x550] sm:$0xff]
    %v1684 = vld [vmem:[#allocation3 + $0x558] sm:$0xff]
    %v1685 = vld [vmem:[#allocation3 + $0x560] sm:$0xff]
    %v1686 = vld [vmem:[#allocation3 + $0x568] sm:$0xff]
    %v1687 = vld [vmem:[#allocation3 + $0x570] sm:$0xff]
    %v1688 = vld [vmem:[#allocation3 + $0x578] sm:$0xff]
    %v1689 = vld [vmem:[#allocation3 + $0x580] sm:$0xff]
    %v1690 = vld [vmem:[#allocation3 + $0x588] sm:$0xff]
    %v1691 = vld [vmem:[#allocation3 + $0x590] sm:$0xff]
    %v1692 = vld [vmem:[#allocation3 + $0x598] sm:$0xff]
    %v1693 = vld [vmem:[#allocation3 + $0x5a0] sm:$0xff]
    %v1694 = vld [vmem:[#allocation3 + $0x5a8] sm:$0xff]
    %v1695 = vld [vmem:[#allocation3 + $0x5b0] sm:$0xff]
    %v1696 = vld [vmem:[#allocation3 + $0x5b8] sm:$0xff]
    %v1697 = vld [vmem:[#allocation3 + $0x5c0] sm:$0xff]
    %v1698 = vld [vmem:[#allocation3 + $0x5c8] sm:$0xff]
    %v1699 = vld [vmem:[#allocation3 + $0x5d0] sm:$0xff]
    %v1700 = vld [vmem:[#allocation3 + $0x5d8] sm:$0xff]
    %v1701 = vld [vmem:[#allocation3 + $0x5e0] sm:$0xff]
    %v1702 = vld [vmem:[#allocation3 + $0x5e8] sm:$0xff]
    %v1703 = vld [vmem:[#allocation3 + $0x5f0] sm:$0xff]
    %v1704 = vld [vmem:[#allocation3 + $0x5f8] sm:$0xff]
    %v1705 = vld [vmem:[#allocation3 + $0x600] sm:$0xff]
    %v1706 = vld [vmem:[#allocation3 + $0x608] sm:$0xff]
    %v1707 = vld [vmem:[#allocation3 + $0x610] sm:$0xff]
    %v1708 = vld [vmem:[#allocation3 + $0x618] sm:$0xff]
    %v1709 = vld [vmem:[#allocation3 + $0x620] sm:$0xff]
    %v1710 = vld [vmem:[#allocation3 + $0x628] sm:$0xff]
    %v1711 = vld [vmem:[#allocation3 + $0x630] sm:$0xff]
    %v1712 = vld [vmem:[#allocation3 + $0x638] sm:$0xff]
    %v1713 = vld [vmem:[#allocation3 + $0x640] sm:$0xff]
    %v1714 = vld [vmem:[#allocation3 + $0x648] sm:$0xff]
    %v1715 = vld [vmem:[#allocation3 + $0x650] sm:$0xff]
    %v1716 = vld [vmem:[#allocation3 + $0x658] sm:$0xff]
    %v1717 = vld [vmem:[#allocation3 + $0x660] sm:$0xff]
    %v1718 = vld [vmem:[#allocation3 + $0x668] sm:$0xff]
    %v1719 = vld [vmem:[#allocation3 + $0x670] sm:$0xff]
    %v1720 = vld [vmem:[#allocation3 + $0x678] sm:$0xff]
    %v1721 = vld [vmem:[#allocation3 + $0x680] sm:$0xff]
    %v1722 = vld [vmem:[#allocation3 + $0x688] sm:$0xff]
    %v1723 = vld [vmem:[#allocation3 + $0x690] sm:$0xff]
    %v1724 = vld [vmem:[#allocation3 + $0x698] sm:$0xff]
    %v1725 = vld [vmem:[#allocation3 + $0x6a0] sm:$0xff]
    %v1726 = vld [vmem:[#allocation3 + $0x6a8] sm:$0xff]
    %v1727 = vld [vmem:[#allocation3 + $0x6b0] sm:$0xff]
    %v1728 = vld [vmem:[#allocation3 + $0x6b8] sm:$0xff]
    %v1729 = vld [vmem:[#allocation3 + $0x6c0] sm:$0xff]
    %v1730 = vld [vmem:[#allocation3 + $0x6c8] sm:$0xff]
    %v1731 = vld [vmem:[#allocation3 + $0x6d0] sm:$0xff]
    %v1732 = vld [vmem:[#allocation3 + $0x6d8] sm:$0xff]
    %v1733 = vld [vmem:[#allocation3 + $0x6e0] sm:$0xff]
    %v1734 = vld [vmem:[#allocation3 + $0x6e8] sm:$0xff]
    %v1735 = vld [vmem:[#allocation3 + $0x6f0] sm:$0xff]
    %v1736 = vld [vmem:[#allocation3 + $0x6f8] sm:$0xff]
    %v1737 = vld [vmem:[#allocation3 + $0x700] sm:$0xff]
    %v1738 = vld [vmem:[#allocation3 + $0x708] sm:$0xff]
    %v1739 = vld [vmem:[#allocation3 + $0x710] sm:$0xff]
    %v1740 = vld [vmem:[#allocation3 + $0x718] sm:$0xff]
    %v1741 = vld [vmem:[#allocation3 + $0x720] sm:$0xff]
    %v1742 = vld [vmem:[#allocation3 + $0x728] sm:$0xff]
    %v1743 = vld [vmem:[#allocation3 + $0x730] sm:$0xff]
    %v1744 = vld [vmem:[#allocation3 + $0x738] sm:$0xff]
    %v1745 = vld [vmem:[#allocation3 + $0x740] sm:$0xff]
    %v1746 = vld [vmem:[#allocation3 + $0x748] sm:$0xff]
    %v1747 = vld [vmem:[#allocation3 + $0x750] sm:$0xff]
    %v1748 = vld [vmem:[#allocation3 + $0x758] sm:$0xff]
    %v1749 = vld [vmem:[#allocation3 + $0x760] sm:$0xff]
    %v1750 = vld [vmem:[#allocation3 + $0x768] sm:$0xff]
    %v1751 = vld [vmem:[#allocation3 + $0x770] sm:$0xff]
    %v1752 = vld [vmem:[#allocation3 + $0x778] sm:$0xff]
    %v1753 = vld [vmem:[#allocation3 + $0x780] sm:$0xff]
    %v1754 = vld [vmem:[#allocation3 + $0x788] sm:$0xff]
    %v1755 = vld [vmem:[#allocation3 + $0x790] sm:$0xff]
    %v1756 = vld [vmem:[#allocation3 + $0x798] sm:$0xff]
    %v1757 = vld [vmem:[#allocation3 + $0x7a0] sm:$0xff]
    %v1758 = vld [vmem:[#allocation3 + $0x7a8] sm:$0xff]
    %v1759 = vld [vmem:[#allocation3 + $0x7b0] sm:$0xff]
    %v1760 = vld [vmem:[#allocation3 + $0x7b8] sm:$0xff]
    %v1761 = vld [vmem:[#allocation3 + $0x7c0] sm:$0xff]
    %v1762 = vld [vmem:[#allocation3 + $0x7c8] sm:$0xff]
    %v1763 = vld [vmem:[#allocation3 + $0x7d0] sm:$0xff]
    %v1764 = vld [vmem:[#allocation3 + $0x7d8] sm:$0xff]
    %v1765 = vld [vmem:[#allocation3 + $0x7e0] sm:$0xff]
    %v1766 = vld [vmem:[#allocation3 + $0x7e8] sm:$0xff]
    %v1767 = vld [vmem:[#allocation3 + $0x7f0] sm:$0xff]
    %v1768 = vld [vmem:[#allocation3 + $0x7f8] sm:$0xff]
    %v1769 = vld [vmem:[%s9] sm:$0xf]
    %v1771 = vlaneseq
    %v1772 = vshrl.u32 %v1771, 7
    %v1773 = vsub.s32 0, %v1772
    %v1774 = vrot.slane %v1769, %v1773
    %v1775 = vlaneseq
    %v1776 = vshrl.u32 %v1775, 7
    %v1777 = vsub.s32 1, %v1776
    %v1778 = vrot.slane %v1769, %v1777
    %v1779 = vlaneseq
    %v1780 = vshrl.u32 %v1779, 7
    %v1781 = vsub.s32 2, %v1780
    %v1782 = vrot.slane %v1769, %v1781
    %v1783 = vlaneseq
    %v1784 = vshrl.u32 %v1783, 7
    %v1785 = vsub.s32 3, %v1784
    %v1786 = vrot.slane %v1769, %v1785
    %1791 = vmatprep.subr.bf16.mxu0 %v1514
    %1792 = vmatpush1.bf16.msra.mxu0 %v1513
    %1793 = vmatprep.subr.bf16.mxu0 %v1518
    %1794 = vmatpush1.bf16.msra.mxu0 %v1517
    %1795 = vmatprep.subr.bf16.mxu0 %v1522
    %1796 = vmatpush1.bf16.msra.mxu0 %v1521
    %1797 = vmatprep.subr.bf16.mxu0 %v1526
    %1798 = vmatpush1.bf16.msra.mxu0 %v1525
    %1799 = vmatprep.subr.bf16.mxu0 %v1530
    %1800 = vmatpush1.bf16.msra.mxu0 %v1529
    %1801 = vmatprep.subr.bf16.mxu0 %v1534
    %1802 = vmatpush1.bf16.msra.mxu0 %v1533
    %1803 = vmatprep.subr.bf16.mxu0 %v1538
    %1804 = vmatpush1.bf16.msra.mxu0 %v1537
    %1805 = vmatprep.subr.bf16.mxu0 %v1542
    %1806 = vmatpush1.bf16.msra.mxu0 %v1541
    %1807 = vmatprep.subr.bf16.mxu0 %v1546
    %1808 = vmatpush1.bf16.msra.mxu0 %v1545
    %1809 = vmatprep.subr.bf16.mxu0 %v1550
    %1810 = vmatpush1.bf16.msra.mxu0 %v1549
    %1811 = vmatprep.subr.bf16.mxu0 %v1554
    %1812 = vmatpush1.bf16.msra.mxu0 %v1553
    %1813 = vmatprep.subr.bf16.mxu0 %v1558
    %1814 = vmatpush1.bf16.msra.mxu0 %v1557
    %1815 = vmatprep.subr.bf16.mxu0 %v1562
    %1816 = vmatpush1.bf16.msra.mxu0 %v1561
    %1817 = vmatprep.subr.bf16.mxu0 %v1566
    %1818 = vmatpush1.bf16.msra.mxu0 %v1565
    %1819 = vmatprep.subr.bf16.mxu0 %v1570
    %1820 = vmatpush1.bf16.msra.mxu0 %v1569
    %1821 = vmatprep.subr.bf16.mxu0 %v1574
    %1822 = vmatpush1.bf16.msra.mxu0 %v1573
    %1823 = vmatprep.mubr.bf16.mxu0 %v1506
    %1824 = vmatmul.mubr.bf16.gmra.mrb[0].mxu0 %v1505
    %v1825 = vpop.f32.mrb[0].mxu0
    %v1826 = vadd.f32 %v1774, %v1825
    %v1827 = vpop.f32.mrb[0].mxu0
    %v1828 = vadd.f32 %v1778, %v1827
    %v1829 = vpop.f32.mrb[0].mxu0
    %v1830 = vpop.f32.mrb[0].mxu0
    %1831 = vdwg.mxu0
    %1832 = vmatprep.subr.bf16.mxu0 %v1578
    %1833 = vmatpush1.bf16.msra.mxu0 %v1577
    %1834 = vmatprep.subr.bf16.mxu0 %v1582
    %1835 = vmatpush1.bf16.msra.mxu0 %v1581
    %1836 = vmatprep.subr.bf16.mxu0 %v1586
    %1837 = vmatpush1.bf16.msra.mxu0 %v1585
    %1838 = vmatprep.subr.bf16.mxu0 %v1590
    %1839 = vmatpush1.bf16.msra.mxu0 %v1589
    %1840 = vmatprep.subr.bf16.mxu0 %v1594
    %1841 = vmatpush1.bf16.msra.mxu0 %v1593
    %1842 = vmatprep.subr.bf16.mxu0 %v1598
    %1843 = vmatpush1.bf16.msra.mxu0 %v1597
    %1844 = vmatprep.subr.bf16.mxu0 %v1602
    %1845 = vmatpush1.bf16.msra.mxu0 %v1601
    %1846 = vmatprep.subr.bf16.mxu0 %v1606
    %1847 = vmatpush1.bf16.msra.mxu0 %v1605
    %1848 = vmatprep.subr.bf16.mxu0 %v1610
    %1849 = vmatpush1.bf16.msra.mxu0 %v1609
    %1850 = vmatprep.subr.bf16.mxu0 %v1614
    %1851 = vmatpush1.bf16.msra.mxu0 %v1613
    %1852 = vmatprep.subr.bf16.mxu0 %v1618
    %1853 = vmatpush1.bf16.msra.mxu0 %v1617
    %1854 = vmatprep.subr.bf16.mxu0 %v1622
    %1855 = vmatpush1.bf16.msra.mxu0 %v1621
    %1856 = vmatprep.subr.bf16.mxu0 %v1626
    %1857 = vmatpush1.bf16.msra.mxu0 %v1625
    %1858 = vmatprep.subr.bf16.mxu0 %v1630
    %1859 = vmatpush1.bf16.msra.mxu0 %v1629
    %1860 = vmatprep.subr.bf16.mxu0 %v1634
    %1861 = vmatpush1.bf16.msra.mxu0 %v1633
    %1862 = vmatprep.subr.bf16.mxu0 %v1638
    %1863 = vmatpush1.bf16.msra.mxu0 %v1637
    %1864 = vmatprep.mubr.bf16.mxu0 %v1508
    %1865 = vmatmul.mubr.bf16.gmra.mrb[0].mxu0 %v1507
    %v1866 = vpop.f32.mrb[0].mxu0
    %v1867 = vadd.f32 %v1826, %v1866
    %v1868 = vpop.f32.mrb[0].mxu0
    %v1869 = vadd.f32 %v1828, %v1868
    %v1870 = vpop.f32.mrb[0].mxu0
    %v1871 = vpop.f32.mrb[0].mxu0
    %1872 = vdwg.mxu0
    %1873 = vmatprep.subr.bf16.mxu0 %v1642
    %1874 = vmatpush1.bf16.msra.mxu0 %v1641
    %1875 = vmatprep.subr.bf16.mxu0 %v1646
    %1876 = vmatpush1.bf16.msra.mxu0 %v1645
    %1877 = vmatprep.subr.bf16.mxu0 %v1650
    %1878 = vmatpush1.bf16.msra.mxu0 %v1649
    %1879 = vmatprep.subr.bf16.mxu0 %v1654
    %1880 = vmatpush1.bf16.msra.mxu0 %v1653
    %1881 = vmatprep.subr.bf16.mxu0 %v1658
    %1882 = vmatpush1.bf16.msra.mxu0 %v1657
    %1883 = vmatprep.subr.bf16.mxu0 %v1662
    %1884 = vmatpush1.bf16.msra.mxu0 %v1661
    %1885 = vmatprep.subr.bf16.mxu0 %v1666
    %1886 = vmatpush1.bf16.msra.mxu0 %v1665
    %1887 = vmatprep.subr.bf16.mxu0 %v1670
    %1888 = vmatpush1.bf16.msra.mxu0 %v1669
    %1889 = vmatprep.subr.bf16.mxu0 %v1674
    %1890 = vmatpush1.bf16.msra.mxu0 %v1673
    %1891 = vmatprep.subr.bf16.mxu0 %v1678
    %1892 = vmatpush1.bf16.msra.mxu0 %v1677
    %1893 = vmatprep.subr.bf16.mxu0 %v1682
    %1894 = vmatpush1.bf16.msra.mxu0 %v1681
    %1895 = vmatprep.subr.bf16.mxu0 %v1686
    %1896 = vmatpush1.bf16.msra.mxu0 %v1685
    %1897 = vmatprep.subr.bf16.mxu0 %v1690
    %1898 = vmatpush1.bf16.msra.mxu0 %v1689
    %1899 = vmatprep.subr.bf16.mxu0 %v1694
    %1900 = vmatpush1.bf16.msra.mxu0 %v1693
    %1901 = vmatprep.subr.bf16.mxu0 %v1698
    %1902 = vmatpush1.bf16.msra.mxu0 %v1697
    %1903 = vmatprep.subr.bf16.mxu0 %v1702
    %1904 = vmatpush1.bf16.msra.mxu0 %v1701
    %1905 = vmatprep.mubr.bf16.mxu0 %v1510
    %1906 = vmatmul.mubr.bf16.gmra.mrb[0].mxu0 %v1509
    %v1907 = vpop.f32.mrb[0].mxu0
    %v1908 = vadd.f32 %v1867, %v1907
    %v1909 = vpop.f32.mrb[0].mxu0
    %v1910 = vadd.f32 %v1869, %v1909
    %v1911 = vpop.f32.mrb[0].mxu0
    %v1912 = vpop.f32.mrb[0].mxu0
    %1913 = vdwg.mxu0
    %1914 = vmatprep.subr.bf16.mxu0 %v1706
    %1915 = vmatpush1.bf16.msra.mxu0 %v1705
    %1916 = vmatprep.subr.bf16.mxu0 %v1710
    %1917 = vmatpush1.bf16.msra.mxu0 %v1709
    %1918 = vmatprep.subr.bf16.mxu0 %v1714
    %1919 = vmatpush1.bf16.msra.mxu0 %v1713
    %1920 = vmatprep.subr.bf16.mxu0 %v1718
    %1921 = vmatpush1.bf16.msra.mxu0 %v1717
    %1922 = vmatprep.subr.bf16.mxu0 %v1722
    %1923 = vmatpush1.bf16.msra.mxu0 %v1721
    %1924 = vmatprep.subr.bf16.mxu0 %v1726
    %1925 = vmatpush1.bf16.msra.mxu0 %v1725
    %1926 = vmatprep.subr.bf16.mxu0 %v1730
    %1927 = vmatpush1.bf16.msra.mxu0 %v1729
    %1928 = vmatprep.subr.bf16.mxu0 %v1734
    %1929 = vmatpush1.bf16.msra.mxu0 %v1733
    %1930 = vmatprep.subr.bf16.mxu0 %v1738
    %1931 = vmatpush1.bf16.msra.mxu0 %v1737
    %1932 = vmatprep.subr.bf16.mxu0 %v1742
    %1933 = vmatpush1.bf16.msra.mxu0 %v1741
    %1934 = vmatprep.subr.bf16.mxu0 %v1746
    %1935 = vmatpush1.bf16.msra.mxu0 %v1745
    %1936 = vmatprep.subr.bf16.mxu0 %v1750
    %1937 = vmatpush1.bf16.msra.mxu0 %v1749
    %1938 = vmatprep.subr.bf16.mxu0 %v1754
    %1939 = vmatpush1.bf16.msra.mxu0 %v1753
    %1940 = vmatprep.subr.bf16.mxu0 %v1758
    %1941 = vmatpush1.bf16.msra.mxu0 %v1757
    %1942 = vmatprep.subr.bf16.mxu0 %v1762
    %1943 = vmatpush1.bf16.msra.mxu0 %v1761
    %1944 = vmatprep.subr.bf16.mxu0 %v1766
    %1945 = vmatpush1.bf16.msra.mxu0 %v1765
    %1946 = vmatprep.mubr.bf16.mxu0 %v1512
    %1947 = vmatmul.mubr.bf16.gmra.mrb[0].mxu0 %v1511
    %v1948 = vpop.f32.mrb[0].mxu0
    %v1949 = vadd.f32 %v1908, %v1948
    %v1950 = vpop.f32.mrb[0].mxu0
    %v1951 = vadd.f32 %v1910, %v1950
    %v1952 = vpop.f32.mrb[0].mxu0
    %v1953 = vpop.f32.mrb[0].mxu0
    %1954 = vdwg.mxu0
    %1955 = vmatprep.subr.bf16.mxu0 %v1516
    %1956 = vmatpush1.bf16.msra.mxu0 %v1515
    %1957 = vmatprep.subr.bf16.mxu0 %v1520
    %1958 = vmatpush1.bf16.msra.mxu0 %v1519
    %1959 = vmatprep.subr.bf16.mxu0 %v1524
    %1960 = vmatpush1.bf16.msra.mxu0 %v1523
    %1961 = vmatprep.subr.bf16.mxu0 %v1528
    %1962 = vmatpush1.bf16.msra.mxu0 %v1527
    %1963 = vmatprep.subr.bf16.mxu0 %v1532
    %1964 = vmatpush1.bf16.msra.mxu0 %v1531
    %1965 = vmatprep.subr.bf16.mxu0 %v1536
    %1966 = vmatpush1.bf16.msra.mxu0 %v1535
    %1967 = vmatprep.subr.bf16.mxu0 %v1540
    %1968 = vmatpush1.bf16.msra.mxu0 %v1539
    %1969 = vmatprep.subr.bf16.mxu0 %v1544
    %1970 = vmatpush1.bf16.msra.mxu0 %v1543
    %1971 = vmatprep.subr.bf16.mxu0 %v1548
    %1972 = vmatpush1.bf16.msra.mxu0 %v1547
    %1973 = vmatprep.subr.bf16.mxu0 %v1552
    %1974 = vmatpush1.bf16.msra.mxu0 %v1551
    %1975 = vmatprep.subr.bf16.mxu0 %v1556
    %1976 = vmatpush1.bf16.msra.mxu0 %v1555
    %1977 = vmatprep.subr.bf16.mxu0 %v1560
    %1978 = vmatpush1.bf16.msra.mxu0 %v1559
    %1979 = vmatprep.subr.bf16.mxu0 %v1564
    %1980 = vmatpush1.bf16.msra.mxu0 %v1563
    %1981 = vmatprep.subr.bf16.mxu0 %v1568
    %1982 = vmatpush1.bf16.msra.mxu0 %v1567
    %1983 = vmatprep.subr.bf16.mxu0 %v1572
    %1984 = vmatpush1.bf16.msra.mxu0 %v1571
    %1985 = vmatprep.subr.bf16.mxu0 %v1576
    %1986 = vmatpush1.bf16.msra.mxu0 %v1575
    %1987 = vmatprep.mubr.bf16.mxu0 %v1506
    %1988 = vmatmul.mubr.bf16.gmra.mrb[0].mxu0 %v1505
    %v1989 = vpop.f32.mrb[0].mxu0
    %v1990 = vadd.f32 %v1782, %v1989
    %v1991 = vpop.f32.mrb[0].mxu0
    %v1992 = vadd.f32 %v1786, %v1991
    %v1993 = vpop.f32.mrb[0].mxu0
    %v1994 = vpop.f32.mrb[0].mxu0
    %1995 = vdwg.mxu0
    %1996 = vmatprep.subr.bf16.mxu0 %v1580
    %1997 = vmatpush1.bf16.msra.mxu0 %v1579
    %1998 = vmatprep.subr.bf16.mxu0 %v1584
    %1999 = vmatpush1.bf16.msra.mxu0 %v1583
    %2000 = vmatprep.subr.bf16.mxu0 %v1588
    %2001 = vmatpush1.bf16.msra.mxu0 %v1587
    %2002 = vmatprep.subr.bf16.mxu0 %v1592
    %2003 = vmatpush1.bf16.msra.mxu0 %v1591
    %2004 = vmatprep.subr.bf16.mxu0 %v1596
    %2005 = vmatpush1.bf16.msra.mxu0 %v1595
    %2006 = vmatprep.subr.bf16.mxu0 %v1600
    %2007 = vmatpush1.bf16.msra.mxu0 %v1599
    %2008 = vmatprep.subr.bf16.mxu0 %v1604
    %2009 = vmatpush1.bf16.msra.mxu0 %v1603
    %2010 = vmatprep.subr.bf16.mxu0 %v1608
    %2011 = vmatpush1.bf16.msra.mxu0 %v1607
    %2012 = vmatprep.subr.bf16.mxu0 %v1612
    %2013 = vmatpush1.bf16.msra.mxu0 %v1611
    %2014 = vmatprep.subr.bf16.mxu0 %v1616
    %2015 = vmatpush1.bf16.msra.mxu0 %v1615
    %2016 = vmatprep.subr.bf16.mxu0 %v1620
    %2017 = vmatpush1.bf16.msra.mxu0 %v1619
    %2018 = vmatprep.subr.bf16.mxu0 %v1624
    %2019 = vmatpush1.bf16.msra.mxu0 %v1623
    %2020 = vmatprep.subr.bf16.mxu0 %v1628
    %2021 = vmatpush1.bf16.msra.mxu0 %v1627
    %2022 = vmatprep.subr.bf16.mxu0 %v1632
    %2023 = vmatpush1.bf16.msra.mxu0 %v1631
    %2024 = vmatprep.subr.bf16.mxu0 %v1636
    %2025 = vmatpush1.bf16.msra.mxu0 %v1635
    %2026 = vmatprep.subr.bf16.mxu0 %v1640
    %2027 = vmatpush1.bf16.msra.mxu0 %v1639
    %2028 = vmatprep.mubr.bf16.mxu0 %v1508
    %2029 = vmatmul.mubr.bf16.gmra.mrb[0].mxu0 %v1507
    %v2030 = vpop.f32.mrb[0].mxu0
    %v2031 = vadd.f32 %v1990, %v2030
    %v2032 = vpop.f32.mrb[0].mxu0
    %v2033 = vadd.f32 %v1992, %v2032
    %v2034 = vpop.f32.mrb[0].mxu0
    %v2035 = vpop.f32.mrb[0].mxu0
    %2036 = vdwg.mxu0
    %2037 = vmatprep.subr.bf16.mxu0 %v1644
    %2038 = vmatpush1.bf16.msra.mxu0 %v1643
    %2039 = vmatprep.subr.bf16.mxu0 %v1648
    %2040 = vmatpush1.bf16.msra.mxu0 %v1647
    %2041 = vmatprep.subr.bf16.mxu0 %v1652
    %2042 = vmatpush1.bf16.msra.mxu0 %v1651
    %2043 = vmatprep.subr.bf16.mxu0 %v1656
    %2044 = vmatpush1.bf16.msra.mxu0 %v1655
    %2045 = vmatprep.subr.bf16.mxu0 %v1660
    %2046 = vmatpush1.bf16.msra.mxu0 %v1659
    %2047 = vmatprep.subr.bf16.mxu0 %v1664
    %2048 = vmatpush1.bf16.msra.mxu0 %v1663
    %2049 = vmatprep.subr.bf16.mxu0 %v1668
    %2050 = vmatpush1.bf16.msra.mxu0 %v1667
    %2051 = vmatprep.subr.bf16.mxu0 %v1672
    %2052 = vmatpush1.bf16.msra.mxu0 %v1671
    %2053 = vmatprep.subr.bf16.mxu0 %v1676
    %2054 = vmatpush1.bf16.msra.mxu0 %v1675
    %2055 = vmatprep.subr.bf16.mxu0 %v1680
    %2056 = vmatpush1.bf16.msra.mxu0 %v1679
    %2057 = vmatprep.subr.bf16.mxu0 %v1684
    %2058 = vmatpush1.bf16.msra.mxu0 %v1683
    %2059 = vmatprep.subr.bf16.mxu0 %v1688
    %2060 = vmatpush1.bf16.msra.mxu0 %v1687
    %2061 = vmatprep.subr.bf16.mxu0 %v1692
    %2062 = vmatpush1.bf16.msra.mxu0 %v1691
    %2063 = vmatprep.subr.bf16.mxu0 %v1696
    %2064 = vmatpush1.bf16.msra.mxu0 %v1695
    %2065 = vmatprep.subr.bf16.mxu0 %v1700
    %2066 = vmatpush1.bf16.msra.mxu0 %v1699
    %2067 = vmatprep.subr.bf16.mxu0 %v1704
    %2068 = vmatpush1.bf16.msra.mxu0 %v1703
    %2069 = vmatprep.mubr.bf16.mxu0 %v1510
    %2070 = vmatmul.mubr.bf16.gmra.mrb[0].mxu0 %v1509
    %v2071 = vpop.f32.mrb[0].mxu0
    %v2072 = vadd.f32 %v2031, %v2071
    %v2073 = vpop.f32.mrb[0].mxu0
    %v2074 = vadd.f32 %v2033, %v2073
    %v2075 = vpop.f32.mrb[0].mxu0
    %v2076 = vpop.f32.mrb[0].mxu0
    %2077 = vdwg.mxu0
    %2078 = vmatprep.subr.bf16.mxu0 %v1708
    %2079 = vmatpush1.bf16.msra.mxu0 %v1707
    %2080 = vmatprep.subr.bf16.mxu0 %v1712
    %2081 = vmatpush1.bf16.msra.mxu0 %v1711
    %2082 = vmatprep.subr.bf16.mxu0 %v1716
    %2083 = vmatpush1.bf16.msra.mxu0 %v1715
    %2084 = vmatprep.subr.bf16.mxu0 %v1720
    %2085 = vmatpush1.bf16.msra.mxu0 %v1719
    %2086 = vmatprep.subr.bf16.mxu0 %v1724
    %2087 = vmatpush1.bf16.msra.mxu0 %v1723
    %2088 = vmatprep.subr.bf16.mxu0 %v1728
    %2089 = vmatpush1.bf16.msra.mxu0 %v1727
    %2090 = vmatprep.subr.bf16.mxu0 %v1732
    %2091 = vmatpush1.bf16.msra.mxu0 %v1731
    %2092 = vmatprep.subr.bf16.mxu0 %v1736
    %2093 = vmatpush1.bf16.msra.mxu0 %v1735
    %2094 = vmatprep.subr.bf16.mxu0 %v1740
    %2095 = vmatpush1.bf16.msra.mxu0 %v1739
    %2096 = vmatprep.subr.bf16.mxu0 %v1744
    %2097 = vmatpush1.bf16.msra.mxu0 %v1743
    %2098 = vmatprep.subr.bf16.mxu0 %v1748
    %2099 = vmatpush1.bf16.msra.mxu0 %v1747
    %2100 = vmatprep.subr.bf16.mxu0 %v1752
    %2101 = vmatpush1.bf16.msra.mxu0 %v1751
    %2102 = vmatprep.subr.bf16.mxu0 %v1756
    %2103 = vmatpush1.bf16.msra.mxu0 %v1755
    %2104 = vmatprep.subr.bf16.mxu0 %v1760
    %2105 = vmatpush1.bf16.msra.mxu0 %v1759
    %2106 = vmatprep.subr.bf16.mxu0 %v1764
    %2107 = vmatpush1.bf16.msra.mxu0 %v1763
    %2108 = vmatprep.subr.bf16.mxu0 %v1768
    %2109 = vmatpush1.bf16.msra.mxu0 %v1767
    %2110 = vmatprep.mubr.bf16.mxu0 %v1512
    %2111 = vmatmul.mubr.bf16.gmra.mrb[0].mxu0 %v1511
    %v2112 = vpop.f32.mrb[0].mxu0
    %v2113 = vadd.f32 %v2072, %v2112
    %v2114 = vpop.f32.mrb[0].mxu0
    %v2115 = vadd.f32 %v2074, %v2114
    %v2116 = vpop.f32.mrb[0].mxu0
    %v2117 = vpop.f32.mrb[0].mxu0
    %2118 = vdwg.mxu0
    %v2119 = vld [vmem:[%s10] sm:$0xf]
    %v2121 = vlaneseq
    %v2122 = vshrl.u32 %v2121, 7
    %v2123 = vsub.s32 0, %v2122
    %v2124 = vrot.slane %v2119, %v2123
    %v2125 = vlaneseq
    %v2126 = vshrl.u32 %v2125, 7
    %v2127 = vsub.s32 1, %v2126
    %v2128 = vrot.slane %v2119, %v2127
    %v2129 = vlaneseq
    %v2130 = vshrl.u32 %v2129, 7
    %v2131 = vsub.s32 2, %v2130
    %v2132 = vrot.slane %v2119, %v2131
    %v2133 = vlaneseq
    %v2134 = vshrl.u32 %v2133, 7
    %v2135 = vsub.s32 3, %v2134
    %v2136 = vrot.slane %v2119, %v2135
    %v2141 = vmul.f32 %v1949, %v2124
    %v2142 = vmul.f32 %v1951, %v2128
    %v2143 = vmul.f32 %v2113, %v2132
    %v2144 = vmul.f32 %v2115, %v2136
    %v2145 = vld [vmem:[%s11] sm:$0xf]
    %v2147 = vlaneseq
    %v2148 = vshrl.u32 %v2147, 7
    %v2149 = vsub.s32 0, %v2148
    %v2150 = vrot.slane %v2145, %v2149
    %v2151 = vlaneseq
    %v2152 = vshrl.u32 %v2151, 7
    %v2153 = vsub.s32 1, %v2152
    %v2154 = vrot.slane %v2145, %v2153
    %v2155 = vlaneseq
    %v2156 = vshrl.u32 %v2155, 7
    %v2157 = vsub.s32 2, %v2156
    %v2158 = vrot.slane %v2145, %v2157
    %v2159 = vlaneseq
    %v2160 = vshrl.u32 %v2159, 7
    %v2161 = vsub.s32 3, %v2160
    %v2162 = vrot.slane %v2145, %v2161
    %v2167 = vadd.f32 %v2141, %v2150
    %v2168 = vadd.f32 %v2142, %v2154
    %v2169 = vadd.f32 %v2143, %v2158
    %v2170 = vadd.f32 %v2144, %v2162
    %v2171 = vmax.f32 %v2167, 0.0
    %v2172 = vmax.f32 %v2168, 0.0
    %v2173 = vmax.f32 %v2169, 0.0
    %v2174 = vmax.f32 %v2170, 0.0
    %v2175 = vld [vmem:[%s12] sm:$0xff]
    %v2176 = vld [vmem:[%s12 + $0x8] sm:$0xff]
    %v2177 = vld [vmem:[%s12 + $0x10] sm:$0xff]
    %v2178 = vld [vmem:[%s12 + $0x18] sm:$0xff]
    %v2179 = vld [vmem:[%s12 + $0x20] sm:$0xff]
    %v2180 = vld [vmem:[%s12 + $0x28] sm:$0xff]
    %v2181 = vld [vmem:[%s12 + $0x30] sm:$0xff]
    %v2182 = vld [vmem:[%s12 + $0x38] sm:$0xff]
    %v2183 = vld [vmem:[%s12 + $0x40] sm:$0xff]
    %v2184 = vld [vmem:[%s12 + $0x48] sm:$0xff]
    %v2185 = vld [vmem:[%s12 + $0x50] sm:$0xff]
    %v2186 = vld [vmem:[%s12 + $0x58] sm:$0xff]
    %v2187 = vld [vmem:[%s12 + $0x60] sm:$0xff]
    %v2188 = vld [vmem:[%s12 + $0x68] sm:$0xff]
    %v2189 = vld [vmem:[%s12 + $0x70] sm:$0xff]
    %v2190 = vld [vmem:[%s12 + $0x78] sm:$0xff]
    %v2191 = vld [vmem:[%s12 + $0x80] sm:$0xff]
    %v2192 = vld [vmem:[%s12 + $0x88] sm:$0xff]
    %v2193 = vld [vmem:[%s12 + $0x90] sm:$0xff]
    %v2194 = vld [vmem:[%s12 + $0x98] sm:$0xff]
    %v2195 = vld [vmem:[%s12 + $0xa0] sm:$0xff]
    %v2196 = vld [vmem:[%s12 + $0xa8] sm:$0xff]
    %v2197 = vld [vmem:[%s12 + $0xb0] sm:$0xff]
    %v2198 = vld [vmem:[%s12 + $0xb8] sm:$0xff]
    %v2199 = vld [vmem:[%s12 + $0xc0] sm:$0xff]
    %v2200 = vld [vmem:[%s12 + $0xc8] sm:$0xff]
    %v2201 = vld [vmem:[%s12 + $0xd0] sm:$0xff]
    %v2202 = vld [vmem:[%s12 + $0xd8] sm:$0xff]
    %v2203 = vld [vmem:[%s12 + $0xe0] sm:$0xff]
    %v2204 = vld [vmem:[%s12 + $0xe8] sm:$0xff]
    %v2205 = vld [vmem:[%s12 + $0xf0] sm:$0xff]
    %v2206 = vld [vmem:[%s12 + $0xf8] sm:$0xff]
    %v2207 = vld [vmem:[%s12 + $0x100] sm:$0xff]
    %v2208 = vld [vmem:[%s12 + $0x108] sm:$0xff]
    %v2209 = vld [vmem:[%s12 + $0x110] sm:$0xff]
    %v2210 = vld [vmem:[%s12 + $0x118] sm:$0xff]
    %v2211 = vld [vmem:[%s12 + $0x120] sm:$0xff]
    %v2212 = vld [vmem:[%s12 + $0x128] sm:$0xff]
    %v2213 = vld [vmem:[%s12 + $0x130] sm:$0xff]
    %v2214 = vld [vmem:[%s12 + $0x138] sm:$0xff]
    %v2215 = vld [vmem:[%s12 + $0x140] sm:$0xff]
    %v2216 = vld [vmem:[%s12 + $0x148] sm:$0xff]
    %v2217 = vld [vmem:[%s12 + $0x150] sm:$0xff]
    %v2218 = vld [vmem:[%s12 + $0x158] sm:$0xff]
    %v2219 = vld [vmem:[%s12 + $0x160] sm:$0xff]
    %v2220 = vld [vmem:[%s12 + $0x168] sm:$0xff]
    %v2221 = vld [vmem:[%s12 + $0x170] sm:$0xff]
    %v2222 = vld [vmem:[%s12 + $0x178] sm:$0xff]
    %v2223 = vld [vmem:[%s12 + $0x180] sm:$0xff]
    %v2224 = vld [vmem:[%s12 + $0x188] sm:$0xff]
    %v2225 = vld [vmem:[%s12 + $0x190] sm:$0xff]
    %v2226 = vld [vmem:[%s12 + $0x198] sm:$0xff]
    %v2227 = vld [vmem:[%s12 + $0x1a0] sm:$0xff]
    %v2228 = vld [vmem:[%s12 + $0x1a8] sm:$0xff]
    %v2229 = vld [vmem:[%s12 + $0x1b0] sm:$0xff]
    %v2230 = vld [vmem:[%s12 + $0x1b8] sm:$0xff]
    %v2231 = vld [vmem:[%s12 + $0x1c0] sm:$0xff]
    %v2232 = vld [vmem:[%s12 + $0x1c8] sm:$0xff]
    %v2233 = vld [vmem:[%s12 + $0x1d0] sm:$0xff]
    %v2234 = vld [vmem:[%s12 + $0x1d8] sm:$0xff]
    %v2235 = vld [vmem:[%s12 + $0x1e0] sm:$0xff]
    %v2236 = vld [vmem:[%s12 + $0x1e8] sm:$0xff]
    %v2237 = vld [vmem:[%s12 + $0x1f0] sm:$0xff]
    %v2238 = vld [vmem:[%s12 + $0x1f8] sm:$0xff]
    %v2239 = vld [vmem:[#allocation6] sm:$0x1]
    %v2241 = vlaneseq
    %v2242 = vshrl.u32 %v2241, 7
    %v2243 = vsub.s32 0, %v2242
    %v2244 = vrot.slane %v2239, %v2243
    %2246 = vmatprep.subr.mxu0 0.0
    %2247 = vmatpush1.msra.mxu0 %v2175
    %2248 = vmatprep.subr.mxu0 0.0
    %2249 = vmatpush1.msra.mxu0 %v2176
    %2250 = vmatprep.subr.mxu0 0.0
    %2251 = vmatpush1.msra.mxu0 %v2177
    %2252 = vmatprep.subr.mxu0 0.0
    %2253 = vmatpush1.msra.mxu0 %v2178
    %2254 = vmatprep.subr.mxu0 0.0
    %2255 = vmatpush1.msra.mxu0 %v2179
    %2256 = vmatprep.subr.mxu0 0.0
    %2257 = vmatpush1.msra.mxu0 %v2180
    %2258 = vmatprep.subr.mxu0 0.0
    %2259 = vmatpush1.msra.mxu0 %v2181
    %2260 = vmatprep.subr.mxu0 0.0
    %2261 = vmatpush1.msra.mxu0 %v2182
    %2262 = vmatprep.subr.mxu0 0.0
    %2263 = vmatpush1.msra.mxu0 %v2183
    %2264 = vmatprep.subr.mxu0 0.0
    %2265 = vmatpush1.msra.mxu0 %v2184
    %2266 = vmatprep.subr.mxu0 0.0
    %2267 = vmatpush1.msra.mxu0 %v2185
    %2268 = vmatprep.subr.mxu0 0.0
    %2269 = vmatpush1.msra.mxu0 %v2186
    %2270 = vmatprep.subr.mxu0 0.0
    %2271 = vmatpush1.msra.mxu0 %v2187
    %2272 = vmatprep.subr.mxu0 0.0
    %2273 = vmatpush1.msra.mxu0 %v2188
    %2274 = vmatprep.subr.mxu0 0.0
    %2275 = vmatpush1.msra.mxu0 %v2189
    %2276 = vmatprep.subr.mxu0 0.0
    %2277 = vmatpush1.msra.mxu0 %v2190
    %2278 = vmatprep.subr.mxu0 0.0
    %2279 = vmatpush1.msra.mxu0 %v2191
    %2280 = vmatprep.subr.mxu0 0.0
    %2281 = vmatpush1.msra.mxu0 %v2192
    %2282 = vmatprep.subr.mxu0 0.0
    %2283 = vmatpush1.msra.mxu0 %v2193
    %2284 = vmatprep.subr.mxu0 0.0
    %2285 = vmatpush1.msra.mxu0 %v2194
    %2286 = vmatprep.subr.mxu0 0.0
    %2287 = vmatpush1.msra.mxu0 %v2195
    %2288 = vmatprep.subr.mxu0 0.0
    %2289 = vmatpush1.msra.mxu0 %v2196
    %2290 = vmatprep.subr.mxu0 0.0
    %2291 = vmatpush1.msra.mxu0 %v2197
    %2292 = vmatprep.subr.mxu0 0.0
    %2293 = vmatpush1.msra.mxu0 %v2198
    %2294 = vmatprep.subr.mxu0 0.0
    %2295 = vmatpush1.msra.mxu0 %v2199
    %2296 = vmatprep.subr.mxu0 0.0
    %2297 = vmatpush1.msra.mxu0 %v2200
    %2298 = vmatprep.subr.mxu0 0.0
    %2299 = vmatpush1.msra.mxu0 %v2201
    %2300 = vmatprep.subr.mxu0 0.0
    %2301 = vmatpush1.msra.mxu0 %v2202
    %2302 = vmatprep.subr.mxu0 0.0
    %2303 = vmatpush1.msra.mxu0 %v2203
    %2304 = vmatprep.subr.mxu0 0.0
    %2305 = vmatpush1.msra.mxu0 %v2204
    %2306 = vmatprep.subr.mxu0 0.0
    %2307 = vmatpush1.msra.mxu0 %v2205
    %2308 = vmatprep.subr.mxu0 0.0
    %2309 = vmatpush1.msra.mxu0 %v2206
    %2310 = vmatprep.mubr.f32.mxu0 %v2172
    %2311 = vmatmul.mubr.f32.gmra.mrb[0].mxu0 %v2171
    %v2312 = vpop.f32.mrb[0].mxu0
    %v2313 = vadd.f32 %v2244, %v2312
    %v2314 = vpop.f32.mrb[0].mxu0
    %2315 = vdwg.mxu0
    %2316 = vmatprep.subr.mxu0 0.0
    %2317 = vmatpush1.msra.mxu0 %v2207
    %2318 = vmatprep.subr.mxu0 0.0
    %2319 = vmatpush1.msra.mxu0 %v2208
    %2320 = vmatprep.subr.mxu0 0.0
    %2321 = vmatpush1.msra.mxu0 %v2209
    %2322 = vmatprep.subr.mxu0 0.0
    %2323 = vmatpush1.msra.mxu0 %v2210
    %2324 = vmatprep.subr.mxu0 0.0
    %2325 = vmatpush1.msra.mxu0 %v2211
    %2326 = vmatprep.subr.mxu0 0.0
    %2327 = vmatpush1.msra.mxu0 %v2212
    %2328 = vmatprep.subr.mxu0 0.0
    %2329 = vmatpush1.msra.mxu0 %v2213
    %2330 = vmatprep.subr.mxu0 0.0
    %2331 = vmatpush1.msra.mxu0 %v2214
    %2332 = vmatprep.subr.mxu0 0.0
    %2333 = vmatpush1.msra.mxu0 %v2215
    %2334 = vmatprep.subr.mxu0 0.0
    %2335 = vmatpush1.msra.mxu0 %v2216
    %2336 = vmatprep.subr.mxu0 0.0
    %2337 = vmatpush1.msra.mxu0 %v2217
    %2338 = vmatprep.subr.mxu0 0.0
    %2339 = vmatpush1.msra.mxu0 %v2218
    %2340 = vmatprep.subr.mxu0 0.0
    %2341 = vmatpush1.msra.mxu0 %v2219
    %2342 = vmatprep.subr.mxu0 0.0
    %2343 = vmatpush1.msra.mxu0 %v2220
    %2344 = vmatprep.subr.mxu0 0.0
    %2345 = vmatpush1.msra.mxu0 %v2221
    %2346 = vmatprep.subr.mxu0 0.0
    %2347 = vmatpush1.msra.mxu0 %v2222
    %2348 = vmatprep.subr.mxu0 0.0
    %2349 = vmatpush1.msra.mxu0 %v2223
    %2350 = vmatprep.subr.mxu0 0.0
    %2351 = vmatpush1.msra.mxu0 %v2224
    %2352 = vmatprep.subr.mxu0 0.0
    %2353 = vmatpush1.msra.mxu0 %v2225
    %2354 = vmatprep.subr.mxu0 0.0
    %2355 = vmatpush1.msra.mxu0 %v2226
    %2356 = vmatprep.subr.mxu0 0.0
    %2357 = vmatpush1.msra.mxu0 %v2227
    %2358 = vmatprep.subr.mxu0 0.0
    %2359 = vmatpush1.msra.mxu0 %v2228
    %2360 = vmatprep.subr.mxu0 0.0
    %2361 = vmatpush1.msra.mxu0 %v2229
    %2362 = vmatprep.subr.mxu0 0.0
    %2363 = vmatpush1.msra.mxu0 %v2230
    %2364 = vmatprep.subr.mxu0 0.0
    %2365 = vmatpush1.msra.mxu0 %v2231
    %2366 = vmatprep.subr.mxu0 0.0
    %2367 = vmatpush1.msra.mxu0 %v2232
    %2368 = vmatprep.subr.mxu0 0.0
    %2369 = vmatpush1.msra.mxu0 %v2233
    %2370 = vmatprep.subr.mxu0 0.0
    %2371 = vmatpush1.msra.mxu0 %v2234
    %2372 = vmatprep.subr.mxu0 0.0
    %2373 = vmatpush1.msra.mxu0 %v2235
    %2374 = vmatprep.subr.mxu0 0.0
    %2375 = vmatpush1.msra.mxu0 %v2236
    %2376 = vmatprep.subr.mxu0 0.0
    %2377 = vmatpush1.msra.mxu0 %v2237
    %2378 = vmatprep.subr.mxu0 0.0
    %2379 = vmatpush1.msra.mxu0 %v2238
    %2380 = vmatprep.mubr.f32.mxu0 %v2174
    %2381 = vmatmul.mubr.f32.gmra.mrb[0].mxu0 %v2173
    %v2382 = vpop.f32.mrb[0].mxu0
    %v2383 = vadd.f32 %v2313, %v2382
    %v2384 = vpop.f32.mrb[0].mxu0
    %2385 = vdwg.mxu0
    %v2386 = vmul.f32 %v2383, 0.5
    %v2387 = vtanh.pop %v2386
    %v2388 = vadd.f32 %v2387, 1.0
    %v2389 = vmul.f32 %v2388, 0.5
    %vm2390 = vcmask 7168
    %2391 = vst.msk [vmem:[%s14] sm:$0xff] %vm2390, %v2389
    // Predicated region
    $region50: #{simple_rnn_forward.1} parent=1 // pred_check
      _
    $region51: #{simple_rnn_forward.1} parent=1 // pred_check_branch
      %2393 = sbr.rel (0) target = $region53
    $region52: #{simple_rnn_forward.1} parent=1 // pred_region
      _
    $region53: #{simple_rnn_forward.1} parent=1 // pred_fallthru
      _
    // Predicated region
    $region54: #{simple_rnn_forward.1} parent=1 // pred_check
      _
    $region55: #{simple_rnn_forward.1} parent=1 // pred_check_branch
      %2395 = sbr.rel (0) target = $region57
    $region56: #{simple_rnn_forward.1} parent=1 // pred_region
      _
    $region57: #{simple_rnn_forward.1} parent=1 // pred_fallthru
      _
  %2396 = vsyncmov [#allocation5]
  %s2397 = vpop.sfrf %2396
  %p2398 = scmp.eq.s32.totalorder %s2397, 0
  %p2399 = pneg %p2398
  %2401 = shalt.err (%p2399)
  %s2402 = scalar_lea.sflag [#allocation5], 1
  %2403 = vsyncmov %s2402
  %s2404 = vpop.sfrf %2403
  %p2405 = scmp.eq.s32.totalorder %s2404, 0
  %p2406 = pneg %p2405
  %2408 = shalt.err (%p2406)

</llo_original>
